<compile_context>
chip_gen: v7x
topology: tpu7x:2x2x1
jax: 0.10.0
libtpu: 0.0.40
codegen_flags: <defaults>
</compile_context>

<pallas_src>
import functools

import jax
import jax.numpy as jnp
from jax.experimental import pallas as pl
from jax.experimental.pallas import tpu as pltpu


# --------------------------------------------------------------------------
# Stage 1: per-(b, t) input convolution, fully parallel (off the serial path)
# --------------------------------------------------------------------------
def _gx_kernel(x_ref, w_ref, b_ref, o_ref, xpad_ref, *, H, W, kh, kw, ph, pw):
    """g_x = conv2d_same(x, w) + b for one (b, t) image.

    x_ref   : (1, H, W, Cin)        input image (NHWC)
    w_ref   : (kh, kw, Cin, 3*Ch)   stacked gate weights [update|reset|out]
    b_ref   : (1, 3*Ch)             stacked gate biases
    o_ref   : (1, H*W, 3*Ch)        g_x output slab
    xpad_ref: (H+2ph, W+2pw, Cin)   zero-bordered scratch
    """
    Hp, Wp, Cin = xpad_ref.shape
    Cout = w_ref.shape[-1]
    cdt = w_ref.dtype

    # Re-zero only the thin border strips every step: the scratch is
    # uninitialised and under megacore sharding not every core sees
    # program_id == 0, so a one-time init is unsafe.  Interior is rewritten
    # below every step.
    if ph > 0:
        xpad_ref[0:ph, :, :] = jnp.zeros((ph, Wp, Cin), jnp.float32)
        xpad_ref[ph + H:Hp, :, :] = jnp.zeros((ph, Wp, Cin), jnp.float32)
    if pw > 0:
        xpad_ref[:, 0:pw, :] = jnp.zeros((Hp, pw, Cin), jnp.float32)
        xpad_ref[:, pw + W:Wp, :] = jnp.zeros((Hp, pw, Cin), jnp.float32)

    xpad_ref[ph:ph + H, pw:pw + W, :] = x_ref[0].astype(jnp.float32)

    # "same" cross-correlation as kh*kw shifted-window MXU matmuls; the three
    # gates are stacked on the N axis so each patch is multiplied exactly once.
    acc = jnp.zeros((H * W, Cout), jnp.float32)
    for dy in range(kh):
        for dx in range(kw):
            patch = xpad_ref[dy:dy + H, dx:dx + W, :].reshape(H * W, Cin)
            acc = acc + jnp.dot(patch.astype(cdt), w_ref[dy, dx],
                                preferred_element_type=jnp.float32)
    o_ref[0] = (acc + b_ref[...]).astype(o_ref.dtype)


# --------------------------------------------------------------------------
# Stage 2: recurrent GRU over time, hidden state resident in VMEM
# --------------------------------------------------------------------------
def _cgru_seq_kernel(gx_ref, h0_ref, w1h_ref, w2_ref, o_ref,
                     hpad_ref, hrpad_ref, *, H, W, kh, kw, ph, pw, Ch):
    """One ConvGRU step for grid point (b, t); h carried in VMEM scratch.

    gx_ref  : (1, 1, H*W, 3*Ch)     precomputed conv(x_t) + bias  [upd|rst|out]
    h0_ref  : (1, H, W, Ch)         initial hidden state for this batch element
    w1h_ref : (kh, kw, Ch, 2*Ch)    h-part weights for [update|reset]
    w2_ref  : (kh, kw, Ch, Ch)      h-part weight of the out gate (on h*reset)
    o_ref   : (1, 1, H*W, Ch)       output slab for (b, t)
    hpad_ref: (H+2ph, W+2pw, Ch)    zero-bordered hidden state (f32 carry)
    hrpad_ref:(H+2ph, W+2pw, Ch)    zero-bordered (h * reset) scratch
    """
    t = pl.program_id(1)

    @pl.when(t == 0)
    def _init():
        # Fresh batch element: zero the padded scratches (borders never written
        # afterwards) and load the initial hidden state into the interior.
        hpad_ref[...] = jnp.zeros_like(hpad_ref)
        hrpad_ref[...] = jnp.zeros_like(hrpad_ref)
        hpad_ref[ph:ph + H, pw:pw + W, :] = h0_ref[0].astype(jnp.float32)

    cdt = w1h_ref.dtype

    def conv(pad_ref, w_ref, n_out):
        acc = jnp.zeros((H * W, n_out), jnp.float32)
        for dy in range(kh):
            for dx in range(kw):
                patch = pad_ref[dy:dy + H, dx:dx + W, :].reshape(H * W, Ch)
                acc = acc + jnp.dot(patch.astype(cdt), w_ref[dy, dx],
                                    preferred_element_type=jnp.float32)
        return acc

    gx = gx_ref[0, 0]                                  # (H*W, 3*Ch), bias folded in
    g_h = conv(hpad_ref, w1h_ref, 2 * Ch)              # (H*W, 2*Ch)

    upd = jax.nn.sigmoid(gx[:, 0:Ch] + g_h[:, 0:Ch])
    rst = jax.nn.sigmoid(gx[:, Ch:2 * Ch] + g_h[:, Ch:2 * Ch])

    h_prev = hpad_ref[ph:ph + H, pw:pw + W, :].reshape(H * W, Ch)

    # out gate: tanh(conv(x, wox) + bo + conv(h*reset, woh))
    hrpad_ref[ph:ph + H, pw:pw + W, :] = (h_prev * rst).reshape(H, W, Ch)
    g_o = conv(hrpad_ref, w2_ref, Ch)
    x_out = jnp.tanh(gx[:, 2 * Ch:3 * Ch] + g_o)

    # h_new = h_prev * (1 - update) + x_out * update   (all f32)
    h_new = h_prev * (1.0 - upd) + x_out * upd

    hpad_ref[ph:ph + H, pw:pw + W, :] = h_new.reshape(H, W, Ch)
    o_ref[0, 0] = h_new.astype(o_ref.dtype)


def _vmem_limit_bytes(*nbytes):
    """Explicit scoped-VMEM budget: 2x the resident set + headroom, clamped to
    [32 MiB, 64 MiB] so the same setting is valid on v5e/v6e/v7x."""
    need = 2 * int(sum(nbytes)) + (4 << 20)
    return int(min(max(need, 32 << 20), 64 << 20))


def conv_gru_layer(x_seq, h0, p, compute_dtype=jnp.bfloat16):
    """One ConvGRU layer over the whole sequence.

    x_seq: (B, T, H, W, Cin) NHWC, h0: (B, H, W, Ch) -> (B, T, H, W, Ch) f32.
    """
    B, T, H, W, Cin = x_seq.shape
    Ch = p["hidden"]
    kh, kw = p["kernel_size"]
    assert kh % 2 == 1 and kw % 2 == 1, "'same' padding assumes odd kernel sizes"
    ph, pw = kh // 2, kw // 2
    Hp, Wp = H + 2 * ph, W + 2 * pw
    cdt = jnp.dtype(compute_dtype)

    # Gate weights stacked along the output-channel axis; MXU operands in the
    # compute dtype (bf16 by default), accumulation / elementwise math in f32.
    w1x = jnp.concatenate([p["wux"], p["wrx"], p["wox"]], axis=3).astype(cdt)
    w1h = jnp.concatenate([p["wuh"], p["wrh"]], axis=3).astype(cdt)
    w2 = p["woh"].astype(cdt)
    bias = jnp.concatenate([p["bu"], p["br"], p["bo"]], axis=1)      # (1, 3Ch) f32

    f32b = 4

    # ---------------- stage 1: g_x for every (b, t), fully parallel ----------
    x_flat = x_seq.reshape(B * T, H, W, Cin)
    vmem1 = _vmem_limit_bytes(
        2 * H * W * Cin * f32b,                         # x block (double buffered)
        2 * w1x.size * w1x.dtype.itemsize,              # weights
        2 * H * W * 3 * Ch * f32b,                      # g_x output block
        Hp * Wp * Cin * f32b,                           # padded-x scratch
    )
    gx = pl.pallas_call(
        functools.partial(_gx_kernel, H=H, W=W, kh=kh, kw=kw, ph=ph, pw=pw),
        out_shape=jax.ShapeDtypeStruct((B * T, H * W, 3 * Ch), jnp.float32),
        grid_spec=pltpu.PrefetchScalarGridSpec(
            num_scalar_prefetch=0,
            grid=(B * T,),
            in_specs=[
                pl.BlockSpec((1, H, W, Cin), lambda n: (n, 0, 0, 0)),
                pl.BlockSpec(w1x.shape, lambda n: (0, 0, 0, 0)),
                pl.BlockSpec(bias.shape, lambda n: (0, 0)),
            ],
            out_specs=pl.BlockSpec((1, H * W, 3 * Ch), lambda n: (n, 0, 0)),
            scratch_shapes=[pltpu.VMEM((Hp, Wp, Cin), jnp.float32)],
        ),
        compiler_params=pltpu.CompilerParams(
            dimension_semantics=("parallel",),
            vmem_limit_bytes=vmem1),
    )(x_flat, w1x, bias)
    gx = gx.reshape(B, T, H * W, 3 * Ch)

    # ---------------- stage 2: sequential GRU over T ------------------------
    vmem2 = _vmem_limit_bytes(
        2 * H * W * 3 * Ch * f32b,                      # g_x input block
        2 * H * W * Ch * f32b,                          # h0 block
        2 * H * W * Ch * f32b,                          # output block
        2 * (w1h.size * w1h.dtype.itemsize + w2.size * w2.dtype.itemsize),
        2 * Hp * Wp * Ch * f32b,                        # hpad + hrpad scratches
    )
    out = pl.pallas_call(
        functools.partial(_cgru_seq_kernel, H=H, W=W, kh=kh, kw=kw,
                          ph=ph, pw=pw, Ch=Ch),
        out_shape=jax.ShapeDtypeStruct((B, T, H * W, Ch), jnp.float32),
        grid_spec=pltpu.PrefetchScalarGridSpec(
            num_scalar_prefetch=0,
            grid=(B, T),
            in_specs=[
                pl.BlockSpec((1, 1, H * W, 3 * Ch), lambda b, t: (b, t, 0, 0)),
                pl.BlockSpec((1, H, W, Ch), lambda b, t: (b, 0, 0, 0)),
                pl.BlockSpec(w1h.shape, lambda b, t: (0, 0, 0, 0)),
                pl.BlockSpec(w2.shape, lambda b, t: (0, 0, 0, 0)),
            ],
            out_specs=pl.BlockSpec((1, 1, H * W, Ch), lambda b, t: (b, t, 0, 0)),
            scratch_shapes=[
                pltpu.VMEM((Hp, Wp, Ch), jnp.float32),   # carried hidden state
                pltpu.VMEM((Hp, Wp, Ch), jnp.float32),   # h * reset
            ],
        ),
        compiler_params=pltpu.CompilerParams(
            dimension_semantics=("parallel", "arbitrary"),
            vmem_limit_bytes=vmem2),
    )(gx, h0, w1h, w2)

    return out.reshape(B, T, H, W, Ch)


def conv_gru_forward(x, params, hidden_nchw=None, batch_first=False,
                     return_all_layers=False, compute_dtype=jnp.bfloat16):
    """ConvGRU.forward.  x: (t,b,c,h,w) if not batch_first else (b,t,c,h,w)."""
    if not batch_first:
        x = jnp.transpose(x, (1, 0, 2, 3, 4))            # -> (b, t, c, h, w)
    B, T, _, H, W = x.shape
    cur = jnp.transpose(x, (0, 1, 3, 4, 2)).astype(jnp.float32)   # (b,t,h,w,c)

    layer_outputs, last_states = [], []
    for p in params:
        Ch = p["hidden"]
        if hidden_nchw is not None:
            # PyTorch's _init_hidden_stateful passes the SAME hidden tensor to
            # every layer; its shape must match every layer's hidden dim.
            h0 = jnp.transpose(hidden_nchw, (0, 2, 3, 1)).astype(jnp.float32)
        else:
            h0 = jnp.zeros((B, H, W, Ch), jnp.float32)
        layer_out = conv_gru_layer(cur, h0, p, compute_dtype)   # (B,T,H,W,Ch)
        cur = layer_out
        layer_outputs.append(layer_out)
        last_states.append(layer_out[:, -1])

    if not return_all_layers:
        layer_outputs = layer_outputs[-1:]
        last_states = last_states[-1:]

    # back to the PyTorch axis convention
    layer_outputs = [jnp.transpose(o, (0, 1, 4, 2, 3)) for o in layer_outputs]
    last_states = [jnp.transpose(s, (0, 3, 1, 2)) for s in last_states]
    return layer_outputs, last_states


def init_params(key, in_channels, hidden_channels, kernel_size, num_layers):
    """Deterministic synthetic parameters matching ConvGRUCell's Conv2d shapes."""
    if not isinstance(hidden_channels, list):
        hidden_channels = [hidden_channels] * num_layers
    if not isinstance(kernel_size, list):
        kernel_size = [kernel_size] * num_layers
    params = []
    for i in range(num_layers):
        cin = in_channels if i == 0 else hidden_channels[i - 1]
        ch = hidden_channels[i]
        kh, kw = kernel_size[i]
        layer = {"hidden": ch, "kernel_size": (kh, kw)}
        for gate in ("u", "r", "o"):
            key, k_w, k_b = jax.random.split(key, 3)
            # torch weight is (Ch, Cin+Ch, kh, kw); stored here in HWIO layout.
            w = jax.random.normal(k_w, (kh, kw, cin + ch, ch), jnp.float32) * 0.1
            b = jax.random.normal(k_b, (1, ch), jnp.float32) * 0.05
            layer[f"w{gate}x"] = w[:, :, :cin, :]
            layer[f"w{gate}h"] = w[:, :, cin:, :]
            layer[f"b{gate}"] = b
        params.append(layer)
    return params


# ---------------- pure-JAX reference (for correctness checks) ----------------
def _conv_ref(x, w, b, cdt):
    prec = jax.lax.Precision.HIGHEST if cdt == jnp.float32 else None
    out = jax.lax.conv_general_dilated(
        x.astype(cdt), w.astype(cdt), window_strides=(1, 1), padding="SAME",
        dimension_numbers=("NHWC", "HWIO", "NHWC"),
        preferred_element_type=jnp.float32, precision=prec)
    return out + b.reshape(1, 1, 1, -1)


def _cell_ref(x, h, p, cdt):
    wu = jnp.concatenate([p["wux"], p["wuh"]], axis=2)
    wr = jnp.concatenate([p["wrx"], p["wrh"]], axis=2)
    wo = jnp.concatenate([p["wox"], p["woh"]], axis=2)
    xin = jnp.concatenate([x, h], axis=-1)
    upd = jax.nn.sigmoid(_conv_ref(xin, wu, p["bu"], cdt))
    rst = jax.nn.sigmoid(_conv_ref(xin, wr, p["br"], cdt))
    xo = jnp.tanh(_conv_ref(jnp.concatenate([x, h * rst], axis=-1),
                            wo, p["bo"], cdt))
    return h * (1.0 - upd) + xo * upd


def _forward_ref(x, params, compute_dtype=jnp.float32,
                 batch_first=False, return_all_layers=False):
    cdt = jnp.dtype(compute_dtype)
    if not batch_first:
        x = jnp.transpose(x, (1, 0, 2, 3, 4))
    B, T, _, H, W = x.shape
    cur = jnp.transpose(x, (0, 1, 3, 4, 2)).astype(jnp.float32)
    layer_outputs, last_states = [], []
    for p in params:
        h = jnp.zeros((B, H, W, p["hidden"]), jnp.float32)
        outs = []
        for t in range(T):
            h = _cell_ref(cur[:, t], h, p, cdt)
            outs.append(h)
        layer_out = jnp.stack(outs, axis=1)
        cur = layer_out
        layer_outputs.append(layer_out)
        last_states.append(h)
    if not return_all_layers:
        layer_outputs = layer_outputs[-1:]
        last_states = last_states[-1:]
    layer_outputs = [jnp.transpose(o, (0, 1, 4, 2, 3)) for o in layer_outputs]
    last_states = [jnp.transpose(s, (0, 3, 1, 2)) for s in last_states]
    return layer_outputs, last_states


if __name__ == "__main__":
    # ConvGRU(in_channels=4, hidden_channels=32, kernel_size=(3,3), num_layers=2,
    #         batch_first=False, bias=True, return_all_layers=False)
    T, B, Cin, H, W = 8, 2, 4, 16, 16
    hidden, num_layers, ksize = 32, 2, (3, 3)

    key = jax.random.PRNGKey(0)
    key, kx = jax.random.split(key)
    x = jax.random.normal(kx, (T, B, Cin, H, W), jnp.float32)   # (t, b, c, h, w)
    params = init_params(key, Cin, hidden, ksize, num_layers)

    # f32 MXU operands: strict check against the pure-JAX reference.
    out32, st32 = conv_gru_forward(x, params, compute_dtype=jnp.float32)
    jax.block_until_ready((out32, st32))
    ref_o, ref_s = _forward_ref(x, params, jnp.float32)
    err_o = float(jnp.max(jnp.abs(out32[0] - ref_o[0])))
    err_s = float(jnp.max(jnp.abs(st32[0] - ref_s[0])))
    assert out32[0].shape == (B, T, hidden, H, W)
    assert st32[0].shape == (B, hidden, H, W)
    assert err_o < 1e-3 and err_s < 1e-3, (err_o, err_s)

    # bf16 MXU operands (review default for v6e/v7x): compare against a
    # reference that also uses bf16 conv operands with f32 accumulation; the
    # residual difference is accumulation-order only (plus tiny carried ulps).
    out16, st16 = conv_gru_forward(x, params, compute_dtype=jnp.bfloat16)
    jax.block_until_ready((out16, st16))
    ref_o16, ref_s16 = _forward_ref(x, params, jnp.bfloat16)
    err_o16 = float(jnp.max(jnp.abs(out16[0] - ref_o16[0])))
    err_s16 = float(jnp.max(jnp.abs(st16[0] - ref_s16[0])))
    assert err_o16 < 3e-2 and err_s16 < 3e-2, (err_o16, err_s16)

    print("KERNEL_OK")
</pallas_src>

<mosaic_0001>
module attributes {stable_mosaic.version = 11 : i64} {
  func.func @_gx_kernel(%arg0: i32, %arg1: memref<1x16x16x4xf32, #tpu.memory_space<vmem>>, %arg2: memref<3x3x4x96xf32, #tpu.memory_space<vmem>>, %arg3: memref<1x96xf32, #tpu.memory_space<vmem>>, %arg4: memref<1x256x96xf32, #tpu.memory_space<vmem>>, %arg5: memref<18x18x4xf32, #tpu.memory_space<vmem>>) attributes {dimension_semantics = [#tpu.dimension_semantics<parallel>], iteration_bounds = array<i64: 16>, scalar_prefetch = 0 : i64, scratch_operands = 1 : i64, tpu.core_type = #tpu.core_type<tc>, window_params = [{transform_indices = @transform_0, window_bounds = array<i64: 1, 16, 16, 4>}, {pipeline_mode = #tpu.pipeline_mode<synchronous>, transform_indices = @transform_1, window_bounds = array<i64: 3, 3, 4, 96>}, {pipeline_mode = #tpu.pipeline_mode<synchronous>, transform_indices = @transform_2, window_bounds = array<i64: 1, 96>}, {transform_indices = @transform_3, window_bounds = array<i64: 1, 256, 96>}]} {
    %cst = arith.constant 0.000000e+00 : f32
    %0 = vector.broadcast %cst : f32 to vector<1x18x4xf32>
    %c0 = arith.constant 0 : index
    %c0_0 = arith.constant 0 : index
    %c0_1 = arith.constant 0 : index
    %1 = vector.load %arg5[%c0, %c0_0, %c0_1] : memref<18x18x4xf32, #tpu.memory_space<vmem>>, vector<1x18x4xf32>
    tpu.vector_store %arg5[%c0, %c0_0, %c0_1], %0 {strides = array<i32>} : memref<18x18x4xf32, #tpu.memory_space<vmem>>, vector<1x18x4xf32>,
    %cst_2 = arith.constant 0.000000e+00 : f32
    %2 = vector.broadcast %cst_2 : f32 to vector<1x18x4xf32>
    %c17 = arith.constant 17 : index
    %c0_3 = arith.constant 0 : index
    %c0_4 = arith.constant 0 : index
    %3 = vector.load %arg5[%c17, %c0_3, %c0_4] : memref<18x18x4xf32, #tpu.memory_space<vmem>>, vector<1x18x4xf32>
    tpu.vector_store %arg5[%c17, %c0_3, %c0_4], %2 {strides = array<i32>} : memref<18x18x4xf32, #tpu.memory_space<vmem>>, vector<1x18x4xf32>,
    %cst_5 = arith.constant 0.000000e+00 : f32
    %4 = vector.broadcast %cst_5 : f32 to vector<18x1x4xf32>
    %c0_6 = arith.constant 0 : index
    %c0_7 = arith.constant 0 : index
    %c0_8 = arith.constant 0 : index
    %5 = vector.load %arg5[%c0_6, %c0_7, %c0_8] : memref<18x18x4xf32, #tpu.memory_space<vmem>>, vector<18x1x4xf32>
    tpu.vector_store %arg5[%c0_6, %c0_7, %c0_8], %4 {strides = array<i32>} : memref<18x18x4xf32, #tpu.memory_space<vmem>>, vector<18x1x4xf32>,
    %cst_9 = arith.constant 0.000000e+00 : f32
    %6 = vector.broadcast %cst_9 : f32 to vector<18x1x4xf32>
    %c0_10 = arith.constant 0 : index
    %c17_11 = arith.constant 17 : index
    %c0_12 = arith.constant 0 : index
    %7 = vector.load %arg5[%c0_10, %c17_11, %c0_12] : memref<18x18x4xf32, #tpu.memory_space<vmem>>, vector<18x1x4xf32>
    tpu.vector_store %arg5[%c0_10, %c17_11, %c0_12], %6 {strides = array<i32>} : memref<18x18x4xf32, #tpu.memory_space<vmem>>, vector<18x1x4xf32>,
    %c0_13 = arith.constant 0 : index
    %c0_14 = arith.constant 0 : index
    %c0_15 = arith.constant 0 : index
    %c0_16 = arith.constant 0 : index
    %8 = vector.load %arg1[%c0_13, %c0_14, %c0_15, %c0_16] : memref<1x16x16x4xf32, #tpu.memory_space<vmem>>, vector<1x16x16x4xf32>
    %9 = vector.shape_cast %8 : vector<1x16x16x4xf32> to vector<16x16x4xf32>
    %c1 = arith.constant 1 : index
    %c1_17 = arith.constant 1 : index
    %c0_18 = arith.constant 0 : index
    %10 = vector.load %arg5[%c1, %c1_17, %c0_18] : memref<18x18x4xf32, #tpu.memory_space<vmem>>, vector<16x16x4xf32>
    tpu.vector_store %arg5[%c1, %c1_17, %c0_18], %9 {strides = array<i32>} : memref<18x18x4xf32, #tpu.memory_space<vmem>>, vector<16x16x4xf32>,
    %cst_19 = arith.constant 0.000000e+00 : f32
    %11 = vector.broadcast %cst_19 : f32 to vector<256x96xf32>
    %c0_20 = arith.constant 0 : index
    %c0_21 = arith.constant 0 : index
    %c0_22 = arith.constant 0 : index
    %12 = vector.load %arg5[%c0_20, %c0_21, %c0_22] : memref<18x18x4xf32, #tpu.memory_space<vmem>>, vector<16x16x4xf32>
    %13 = vector.shape_cast %12 : vector<16x16x4xf32> to vector<256x4xf32>
    %c0_23 = arith.constant 0 : index
    %c0_24 = arith.constant 0 : index
    %c0_25 = arith.constant 0 : index
    %c0_26 = arith.constant 0 : index
    %14 = vector.load %arg2[%c0_23, %c0_24, %c0_25, %c0_26] : memref<3x3x4x96xf32, #tpu.memory_space<vmem>>, vector<1x1x4x96xf32>
    %15 = vector.shape_cast %14 : vector<1x1x4x96xf32> to vector<4x96xf32>
    %cst_27 = arith.constant dense<0.000000e+00> : vector<256x96xf32>
    %16 = tpu.matmul %13, %15, %cst_27 {dimension_numbers = #tpu.dot_dimension_numbers<[1], [0], [0], [1], [0, 0, 1, 1], [], []>} : vector<256x4xf32>, vector<4x96xf32>, vector<256x96xf32> -> vector<256x96xf32>
    %17 = arith.addf %11, %16 : vector<256x96xf32>
    %c0_28 = arith.constant 0 : index
    %c1_29 = arith.constant 1 : index
    %c0_30 = arith.constant 0 : index
    %18 = vector.load %arg5[%c0_28, %c1_29, %c0_30] : memref<18x18x4xf32, #tpu.memory_space<vmem>>, vector<16x16x4xf32>
    %19 = vector.shape_cast %18 : vector<16x16x4xf32> to vector<256x4xf32>
    %c0_31 = arith.constant 0 : index
    %c1_32 = arith.constant 1 : index
    %c0_33 = arith.constant 0 : index
    %c0_34 = arith.constant 0 : index
    %20 = vector.load %arg2[%c0_31, %c1_32, %c0_33, %c0_34] : memref<3x3x4x96xf32, #tpu.memory_space<vmem>>, vector<1x1x4x96xf32>
    %21 = vector.shape_cast %20 : vector<1x1x4x96xf32> to vector<4x96xf32>
    %cst_35 = arith.constant dense<0.000000e+00> : vector<256x96xf32>
    %22 = tpu.matmul %19, %21, %cst_35 {dimension_numbers = #tpu.dot_dimension_numbers<[1], [0], [0], [1], [0, 0, 1, 1], [], []>} : vector<256x4xf32>, vector<4x96xf32>, vector<256x96xf32> -> vector<256x96xf32>
    %23 = arith.addf %17, %22 : vector<256x96xf32>
    %c0_36 = arith.constant 0 : index
    %c2 = arith.constant 2 : index
    %c0_37 = arith.constant 0 : index
    %24 = vector.load %arg5[%c0_36, %c2, %c0_37] : memref<18x18x4xf32, #tpu.memory_space<vmem>>, vector<16x16x4xf32>
    %25 = vector.shape_cast %24 : vector<16x16x4xf32> to vector<256x4xf32>
    %c0_38 = arith.constant 0 : index
    %c2_39 = arith.constant 2 : index
    %c0_40 = arith.constant 0 : index
    %c0_41 = arith.constant 0 : index
    %26 = vector.load %arg2[%c0_38, %c2_39, %c0_40, %c0_41] : memref<3x3x4x96xf32, #tpu.memory_space<vmem>>, vector<1x1x4x96xf32>
    %27 = vector.shape_cast %26 : vector<1x1x4x96xf32> to vector<4x96xf32>
    %cst_42 = arith.constant dense<0.000000e+00> : vector<256x96xf32>
    %28 = tpu.matmul %25, %27, %cst_42 {dimension_numbers = #tpu.dot_dimension_numbers<[1], [0], [0], [1], [0, 0, 1, 1], [], []>} : vector<256x4xf32>, vector<4x96xf32>, vector<256x96xf32> -> vector<256x96xf32>
    %29 = arith.addf %23, %28 : vector<256x96xf32>
    %c1_43 = arith.constant 1 : index
    %c0_44 = arith.constant 0 : index
    %c0_45 = arith.constant 0 : index
    %30 = vector.load %arg5[%c1_43, %c0_44, %c0_45] : memref<18x18x4xf32, #tpu.memory_space<vmem>>, vector<16x16x4xf32>
    %31 = vector.shape_cast %30 : vector<16x16x4xf32> to vector<256x4xf32>
    %c1_46 = arith.constant 1 : index
    %c0_47 = arith.constant 0 : index
    %c0_48 = arith.constant 0 : index
    %c0_49 = arith.constant 0 : index
    %32 = vector.load %arg2[%c1_46, %c0_47, %c0_48, %c0_49] : memref<3x3x4x96xf32, #tpu.memory_space<vmem>>, vector<1x1x4x96xf32>
    %33 = vector.shape_cast %32 : vector<1x1x4x96xf32> to vector<4x96xf32>
    %cst_50 = arith.constant dense<0.000000e+00> : vector<256x96xf32>
    %34 = tpu.matmul %31, %33, %cst_50 {dimension_numbers = #tpu.dot_dimension_numbers<[1], [0], [0], [1], [0, 0, 1, 1], [], []>} : vector<256x4xf32>, vector<4x96xf32>, vector<256x96xf32> -> vector<256x96xf32>
    %35 = arith.addf %29, %34 : vector<256x96xf32>
    %c1_51 = arith.constant 1 : index
    %c1_52 = arith.constant 1 : index
    %c0_53 = arith.constant 0 : index
    %36 = vector.load %arg5[%c1_51, %c1_52, %c0_53] : memref<18x18x4xf32, #tpu.memory_space<vmem>>, vector<16x16x4xf32>
    %37 = vector.shape_cast %36 : vector<16x16x4xf32> to vector<256x4xf32>
    %c1_54 = arith.constant 1 : index
    %c1_55 = arith.constant 1 : index
    %c0_56 = arith.constant 0 : index
    %c0_57 = arith.constant 0 : index
    %38 = vector.load %arg2[%c1_54, %c1_55, %c0_56, %c0_57] : memref<3x3x4x96xf32, #tpu.memory_space<vmem>>, vector<1x1x4x96xf32>
    %39 = vector.shape_cast %38 : vector<1x1x4x96xf32> to vector<4x96xf32>
    %cst_58 = arith.constant dense<0.000000e+00> : vector<256x96xf32>
    %40 = tpu.matmul %37, %39, %cst_58 {dimension_numbers = #tpu.dot_dimension_numbers<[1], [0], [0], [1], [0, 0, 1, 1], [], []>} : vector<256x4xf32>, vector<4x96xf32>, vector<256x96xf32> -> vector<256x96xf32>
    %41 = arith.addf %35, %40 : vector<256x96xf32>
    %c1_59 = arith.constant 1 : index
    %c2_60 = arith.constant 2 : index
    %c0_61 = arith.constant 0 : index
    %42 = vector.load %arg5[%c1_59, %c2_60, %c0_61] : memref<18x18x4xf32, #tpu.memory_space<vmem>>, vector<16x16x4xf32>
    %43 = vector.shape_cast %42 : vector<16x16x4xf32> to vector<256x4xf32>
    %c1_62 = arith.constant 1 : index
    %c2_63 = arith.constant 2 : index
    %c0_64 = arith.constant 0 : index
    %c0_65 = arith.constant 0 : index
    %44 = vector.load %arg2[%c1_62, %c2_63, %c0_64, %c0_65] : memref<3x3x4x96xf32, #tpu.memory_space<vmem>>, vector<1x1x4x96xf32>
    %45 = vector.shape_cast %44 : vector<1x1x4x96xf32> to vector<4x96xf32>
    %cst_66 = arith.constant dense<0.000000e+00> : vector<256x96xf32>
    %46 = tpu.matmul %43, %45, %cst_66 {dimension_numbers = #tpu.dot_dimension_numbers<[1], [0], [0], [1], [0, 0, 1, 1], [], []>} : vector<256x4xf32>, vector<4x96xf32>, vector<256x96xf32> -> vector<256x96xf32>
    %47 = arith.addf %41, %46 : vector<256x96xf32>
    %c2_67 = arith.constant 2 : index
    %c0_68 = arith.constant 0 : index
    %c0_69 = arith.constant 0 : index
    %48 = vector.load %arg5[%c2_67, %c0_68, %c0_69] : memref<18x18x4xf32, #tpu.memory_space<vmem>>, vector<16x16x4xf32>
    %49 = vector.shape_cast %48 : vector<16x16x4xf32> to vector<256x4xf32>
    %c2_70 = arith.constant 2 : index
    %c0_71 = arith.constant 0 : index
    %c0_72 = arith.constant 0 : index
    %c0_73 = arith.constant 0 : index
    %50 = vector.load %arg2[%c2_70, %c0_71, %c0_72, %c0_73] : memref<3x3x4x96xf32, #tpu.memory_space<vmem>>, vector<1x1x4x96xf32>
    %51 = vector.shape_cast %50 : vector<1x1x4x96xf32> to vector<4x96xf32>
    %cst_74 = arith.constant dense<0.000000e+00> : vector<256x96xf32>
    %52 = tpu.matmul %49, %51, %cst_74 {dimension_numbers = #tpu.dot_dimension_numbers<[1], [0], [0], [1], [0, 0, 1, 1], [], []>} : vector<256x4xf32>, vector<4x96xf32>, vector<256x96xf32> -> vector<256x96xf32>
    %53 = arith.addf %47, %52 : vector<256x96xf32>
    %c2_75 = arith.constant 2 : index
    %c1_76 = arith.constant 1 : index
    %c0_77 = arith.constant 0 : index
    %54 = vector.load %arg5[%c2_75, %c1_76, %c0_77] : memref<18x18x4xf32, #tpu.memory_space<vmem>>, vector<16x16x4xf32>
    %55 = vector.shape_cast %54 : vector<16x16x4xf32> to vector<256x4xf32>
    %c2_78 = arith.constant 2 : index
    %c1_79 = arith.constant 1 : index
    %c0_80 = arith.constant 0 : index
    %c0_81 = arith.constant 0 : index
    %56 = vector.load %arg2[%c2_78, %c1_79, %c0_80, %c0_81] : memref<3x3x4x96xf32, #tpu.memory_space<vmem>>, vector<1x1x4x96xf32>
    %57 = vector.shape_cast %56 : vector<1x1x4x96xf32> to vector<4x96xf32>
    %cst_82 = arith.constant dense<0.000000e+00> : vector<256x96xf32>
    %58 = tpu.matmul %55, %57, %cst_82 {dimension_numbers = #tpu.dot_dimension_numbers<[1], [0], [0], [1], [0, 0, 1, 1], [], []>} : vector<256x4xf32>, vector<4x96xf32>, vector<256x96xf32> -> vector<256x96xf32>
    %59 = arith.addf %53, %58 : vector<256x96xf32>
    %c2_83 = arith.constant 2 : index
    %c2_84 = arith.constant 2 : index
    %c0_85 = arith.constant 0 : index
    %60 = vector.load %arg5[%c2_83, %c2_84, %c0_85] : memref<18x18x4xf32, #tpu.memory_space<vmem>>, vector<16x16x4xf32>
    %61 = vector.shape_cast %60 : vector<16x16x4xf32> to vector<256x4xf32>
    %c2_86 = arith.constant 2 : index
    %c2_87 = arith.constant 2 : index
    %c0_88 = arith.constant 0 : index
    %c0_89 = arith.constant 0 : index
    %62 = vector.load %arg2[%c2_86, %c2_87, %c0_88, %c0_89] : memref<3x3x4x96xf32, #tpu.memory_space<vmem>>, vector<1x1x4x96xf32>
    %63 = vector.shape_cast %62 : vector<1x1x4x96xf32> to vector<4x96xf32>
    %cst_90 = arith.constant dense<0.000000e+00> : vector<256x96xf32>
    %64 = tpu.matmul %61, %63, %cst_90 {dimension_numbers = #tpu.dot_dimension_numbers<[1], [0], [0], [1], [0, 0, 1, 1], [], []>} : vector<256x4xf32>, vector<4x96xf32>, vector<256x96xf32> -> vector<256x96xf32>
    %65 = arith.addf %59, %64 : vector<256x96xf32>
    %c0_91 = arith.constant 0 : index
    %c0_92 = arith.constant 0 : index
    %66 = vector.load %arg3[%c0_91, %c0_92] : memref<1x96xf32, #tpu.memory_space<vmem>>, vector<1x96xf32>
    %67 = vector.broadcast %66 : vector<1x96xf32> to vector<256x96xf32>
    %68 = arith.addf %65, %67 : vector<256x96xf32>
    %c0_93 = arith.constant 0 : index
    %c0_94 = arith.constant 0 : index
    %c0_95 = arith.constant 0 : index
    %69 = vector.load %arg4[%c0_93, %c0_94, %c0_95] : memref<1x256x96xf32, #tpu.memory_space<vmem>>, vector<1x256x96xf32>
    %70 = vector.shape_cast %69 : vector<1x256x96xf32> to vector<256x96xf32>
    %71 = vector.shape_cast %68 : vector<256x96xf32> to vector<1x256x96xf32>
    tpu.vector_store %arg4[%c0_93, %c0_94, %c0_95], %71 {strides = array<i32>} : memref<1x256x96xf32, #tpu.memory_space<vmem>>, vector<1x256x96xf32>,
    return
  }
  func.func @transform_0(%arg0: i32) -> (i32, i32, i32, i32) {
    %c0_i32 = arith.constant 0 : i32
    %c0_i32_0 = arith.constant 0 : i32
    %c0_i32_1 = arith.constant 0 : i32
    %c0_i32_2 = arith.constant 0 : i32
    return %arg0, %c0_i32, %c0_i32_0, %c0_i32_1 : i32, i32, i32, i32
  }
  func.func @transform_1(%arg0: i32) -> (i32, i32, i32, i32) {
    %c0_i32 = arith.constant 0 : i32
    %c0_i32_0 = arith.constant 0 : i32
    %c0_i32_1 = arith.constant 0 : i32
    %c0_i32_2 = arith.constant 0 : i32
    %c0_i32_3 = arith.constant 0 : i32
    return %c0_i32, %c0_i32_0, %c0_i32_1, %c0_i32_2 : i32, i32, i32, i32
  }
  func.func @transform_2(%arg0: i32) -> (i32, i32) {
    %c0_i32 = arith.constant 0 : i32
    %c0_i32_0 = arith.constant 0 : i32
    %c0_i32_1 = arith.constant 0 : i32
    return %c0_i32, %c0_i32_0 : i32, i32
  }
  func.func @transform_3(%arg0: i32) -> (i32, i32, i32) {
    %c0_i32 = arith.constant 0 : i32
    %c0_i32_0 = arith.constant 0 : i32
    %c0_i32_1 = arith.constant 0 : i32
    return %arg0, %c0_i32, %c0_i32_0 : i32, i32, i32
  }
}

</mosaic_0001>

<llo_original>
// kernel: tpu_custom_call.1
$region0: #{tpu_custom_call.1}
  #allocation0 [shape = 'u32[]', space=smem, size = 0x4, offset = 0x4, fixed_abs, tag = 'smem constant byte address 0x4 - core index']
  #allocation1 [shape = 'u32[144,128]{1,0:T(1,128)}', space=vmem, size = 0x12000, scoped, tag = 'internal scratch']
  #allocation2 [shape = 'f32[18,18,4]{2,1,0:T(8,128)}', space=vmem, size = 0x36000, scoped, tag = 'scratch operand']
  %s0 = inlined_call_operand.vmem [shape: f32[16,16,16,4], index: 0, kind: input, shape index: {}]
  %s1 = inlined_call_operand.vmem [shape: f32[3,3,4,96], index: 1, kind: input, shape index: {}]
  %s2 = inlined_call_operand.vmem [shape: f32[1,96], index: 2, kind: input, shape index: {}]
  %s3 = inlined_call_operand.vmem [shape: f32[16,256,96], index: 3, kind: output, shape index: {}]
  %s4 = sld [smem:[#allocation0]]
  $region45: #{tpu_custom_call.1} parent=0
    _
  %s6 = ssub.s32 1, %s4
  %s7 = scalar_select 0, %s6, %s4
  loop: start=0, step=1, limit=18
  $region2: #{tpu_custom_call.1} parent=0 // loop_pre_header
    _
  $region3: #{tpu_custom_call.1} parent=0 // loop_header
    %s9 = sphi 0, %s13
    %p10 = scmp.ge.s32.totalorder %s9, 18
    %s19 = sphi 0, %s21
    %s22 = sphi 0, %s19
    %s23 = sphi 0, %s22
    %s39 = sphi 0, %s23
    %s43 = sphi 0, %s43
    %s45 = sphi 0, %s43
    %s46 = sphi 0, %s45
    %s60 = sphi 0, %s46
    %s64 = sphi 0, %s64
    %s66 = sphi 0, %s64
    %s67 = sphi 0, %s66
    %s81 = sphi 0, %s67
    %s87 = sphi 0, %s89
    %s90 = sphi 0, %s87
    %s91 = sphi 0, %s90
    %s107 = sphi 0, %s91
  $region4: #{tpu_custom_call.1} parent=0 // loop_header_branch
    %12 = sbr.rel (%p10) target = $region8
  $region5: #{tpu_custom_call.1} parent=0 // loop_body
    %s14 = ssub.s32 %s9, 1
    %s15 = ssub.s32 %s9, 2
    %s16 = sadd.s32 %s9, 1
    %s17 = ssub.s32 %s9, %s16
    %p18 = scmp.eq.s32.totalorder %s17, 0
    %s20 = sadd.s32 %s19, 1
    %s21 = scalar_select %p18, %s19, %s20
    %p24 = pneg %p18
    %p25 = scmp.eq.s32.totalorder %s9, 15
    %p26 = por %p24, %p25
    %p27 = scmp.ne.s32.totalorder %s19, %s22
    %p28 = scmp.eq.s32.totalorder %s9, 0
    %p29 = por %p27, %p28
    %p30 = scmp.ne.s32.totalorder %s19, %s22
    %p31 = scmp.eq.s32.totalorder %s14, 15
    %p32 = por %p30, %p31
    %p33 = scmp.ne.s32.totalorder %s22, %s23
    %p34 = scmp.eq.s32.totalorder %s14, 0
    %p35 = por %p33, %p34
    %p36 = scmp.ne.s32.totalorder %s22, %s23
    %p37 = scmp.eq.s32.totalorder %s15, 15
    %p38 = por %p36, %p37
    %p40 = scmp.ne.s32.totalorder %s23, %s39
    %p41 = scmp.eq.s32.totalorder %s15, 0
    %p42 = por %p40, %p41
    %s44 = sadd.s32 %s43, 1
    %p47 = scmp.eq.s32.totalorder %s9, 15
    %p48 = scmp.ne.s32.totalorder %s43, %s45
    %p49 = scmp.eq.s32.totalorder %s9, 0
    %p50 = por %p48, %p49
    %p51 = scmp.ne.s32.totalorder %s43, %s45
    %p52 = scmp.eq.s32.totalorder %s14, 15
    %p53 = por %p51, %p52
    %p54 = scmp.ne.s32.totalorder %s45, %s46
    %p55 = scmp.eq.s32.totalorder %s14, 0
    %p56 = por %p54, %p55
    %p57 = scmp.ne.s32.totalorder %s45, %s46
    %p58 = scmp.eq.s32.totalorder %s15, 15
    %p59 = por %p57, %p58
    %p61 = scmp.ne.s32.totalorder %s46, %s60
    %p62 = scmp.eq.s32.totalorder %s15, 0
    %p63 = por %p61, %p62
    %s65 = sadd.s32 %s64, 1
    %p68 = scmp.eq.s32.totalorder %s9, 15
    %p69 = scmp.ne.s32.totalorder %s64, %s66
    %p70 = scmp.eq.s32.totalorder %s9, 0
    %p71 = por %p69, %p70
    %p72 = scmp.ne.s32.totalorder %s64, %s66
    %p73 = scmp.eq.s32.totalorder %s14, 15
    %p74 = por %p72, %p73
    %p75 = scmp.ne.s32.totalorder %s66, %s67
    %p76 = scmp.eq.s32.totalorder %s14, 0
    %p77 = por %p75, %p76
    %p78 = scmp.ne.s32.totalorder %s66, %s67
    %p79 = scmp.eq.s32.totalorder %s15, 15
    %p80 = por %p78, %p79
    %p82 = scmp.ne.s32.totalorder %s67, %s81
    %p83 = scmp.eq.s32.totalorder %s15, 0
    %p84 = por %p82, %p83
    %s85 = ssub.s32 %s9, %s16
    %p86 = scmp.eq.s32.totalorder %s85, 0
    %s88 = sadd.s32 %s87, 1
    %s89 = scalar_select %p86, %s87, %s88
    %p92 = pneg %p86
    %p93 = scmp.eq.s32.totalorder %s9, 15
    %p94 = por %p92, %p93
    %p95 = scmp.ne.s32.totalorder %s87, %s90
    %p96 = scmp.eq.s32.totalorder %s9, 0
    %p97 = por %p95, %p96
    %p98 = scmp.ne.s32.totalorder %s87, %s90
    %p99 = scmp.eq.s32.totalorder %s14, 15
    %p100 = por %p98, %p99
    %p101 = scmp.ne.s32.totalorder %s90, %s91
    %p102 = scmp.eq.s32.totalorder %s14, 0
    %p103 = por %p101, %p102
    %p104 = scmp.ne.s32.totalorder %s90, %s91
    %p105 = scmp.eq.s32.totalorder %s15, 15
    %p106 = por %p104, %p105
    %p108 = scmp.ne.s32.totalorder %s91, %s107
    %p109 = scmp.eq.s32.totalorder %s15, 0
    %p110 = por %p108, %p109
    %p111 = scmp.le.s32.totalorder 1, %s9
    %p112 = scmp.lt.s32.totalorder %s9, 17
    %p113 = pnand %p111, %p112
    %p114 = pneg %p113
    // Predicated region
    $region9: #{tpu_custom_call.1} parent=5 // pred_check
      _
    $region10: #{tpu_custom_call.1} parent=5 // pred_check_branch
      %116 = sbr.rel (%p113) target = $region12
    $region11: #{tpu_custom_call.1} parent=5 // pred_region
      %s117 = ssub.s32 %s9, 1
      // Predicated region
      $region13: #{tpu_custom_call.1} parent=11 // pred_check
        %p118 = pneg %p56
      $region14: #{tpu_custom_call.1} parent=11 // pred_check_branch
        %120 = sbr.rel (%p118) target = $region16
      $region15: #{tpu_custom_call.1} parent=11 // pred_region
        _
      $region16: #{tpu_custom_call.1} parent=11 // pred_fallthru
        _
      // Predicated region
      $region17: #{tpu_custom_call.1} parent=11 // pred_check
        %p121 = pneg %p77
      $region18: #{tpu_custom_call.1} parent=11 // pred_check_branch
        %123 = sbr.rel (%p121) target = $region20
      $region19: #{tpu_custom_call.1} parent=11 // pred_region
        _
      $region20: #{tpu_custom_call.1} parent=11 // pred_fallthru
        _
    $region12: #{tpu_custom_call.1} parent=5 // pred_fallthru
      _
    %p124 = scmp.lt.s32.totalorder %s9, 16
    // Predicated region
    $region21: #{tpu_custom_call.1} parent=5 // pred_check
      %p125 = pneg %p124
    $region22: #{tpu_custom_call.1} parent=5 // pred_check_branch
      %127 = sbr.rel (%p125) target = $region24
    $region23: #{tpu_custom_call.1} parent=5 // pred_region
      // Predicated region
      $region25: #{tpu_custom_call.1} parent=23 // pred_check
        %p128 = pneg %p29
      $region26: #{tpu_custom_call.1} parent=23 // pred_check_branch
        %130 = sbr.rel (%p128) target = $region28
      $region27: #{tpu_custom_call.1} parent=23 // pred_region
        %p131 = scmp.lt.s32.totalorder %s9, 15
        %s132 = scalar_select %p131, %s9, 15
        %s133 = smul.addr %s132, 32
        %s134 = smul.addr %s133, 8
        %s135 = scalar_lea.vmem %s0, %s134
      $region28: #{tpu_custom_call.1} parent=23 // pred_fallthru
        _
    $region24: #{tpu_custom_call.1} parent=5 // pred_fallthru
      _
    %p136 = scmp.le.s32.totalorder 1, %s9
    %p137 = scmp.lt.s32.totalorder %s9, 17
    %p138 = pnand %p136, %p137
    %p139 = pneg %p138
    // Predicated region
    $region29: #{tpu_custom_call.1} parent=5 // pred_check
      _
    $region30: #{tpu_custom_call.1} parent=5 // pred_check_branch
      %141 = sbr.rel (%p138) target = $region32
    $region31: #{tpu_custom_call.1} parent=5 // pred_region
      %s142 = ssub.s32 %s9, 1
      %p143 = scmp.lt.s32.totalorder %s14, 15
      %s144 = scalar_select %p143, %s14, 15
      %s145 = smul.addr %s144, 32
      %s146 = smul.addr %s145, 8
      %s147 = scalar_lea.vmem %s0, %s146
      %p148 = pneg %p35
      %p149 = pneg %p32
      %p150 = pneg %p56
      %p151 = pneg %p53
      %p152 = pneg %p77
      %p153 = pneg %p74
      %p154 = pneg %p103
      %p155 = pneg %p100
      %p156 = scmp.lt.s32.totalorder %s14, 15
      %s157 = scalar_select %p156, %s14, 15
      %s158 = smul.addr %s157, 32
      %s159 = smul.addr %s158, 8
      %s160 = scalar_lea.vmem %s3, %s159
      %p161 = scmp.lt.s32.totalorder %s14, 15
      %s162 = scalar_select %p161, %s14, 15
      %s163 = smul.addr %s162, 32
      %s164 = smul.addr %s163, 8
      %s165 = scalar_lea.vmem %s0, %s164
      %p166 = scmp.lt.s32.totalorder %s14, 15
      %s167 = scalar_select %p166, %s14, 15
      %s168 = smul.addr %s167, 32
      %s169 = smul.addr %s168, 8
      %s170 = scalar_lea.vmem %s3, %s169
      %vm171 = vcmask 31744
      %172 = vst.msk [vmem:[#allocation2] sm:$0xff] %vm171, 0.0
      %173 = vst.msk [vmem:[#allocation2 + $0x8] sm:$0xff] %vm171, 0.0
      %vm174 = vcmask 25600
      %175 = vst.msk [vmem:[#allocation2 + $0x10] sm:$0x3] %vm174, 0.0
      %s176 = scalar_lea.vmem [#allocation2], 408
      %177 = vst.msk [vmem:[%s176] sm:$0xff] %vm171, 0.0
      %178 = vst.msk [vmem:[%s176 + $0x8] sm:$0xff] %vm171, 0.0
      %179 = vst.msk [vmem:[%s176 + $0x10] sm:$0x3] %vm174, 0.0
      %vm180 = vcmask 24576
      %181 = vst.msk [vmem:[#allocation2] sm:$0x1] %vm180, 0.0
      %182 = vst.msk [vmem:[#allocation2 + $0x18] sm:$0x1] %vm180, 0.0
      %183 = vst.msk [vmem:[#allocation2 + $0x30] sm:$0x1] %vm180, 0.0
      %184 = vst.msk [vmem:[#allocation2 + $0x48] sm:$0x1] %vm180, 0.0
      %185 = vst.msk [vmem:[#allocation2 + $0x60] sm:$0x1] %vm180, 0.0
      %186 = vst.msk [vmem:[#allocation2 + $0x78] sm:$0x1] %vm180, 0.0
      %187 = vst.msk [vmem:[#allocation2 + $0x90] sm:$0x1] %vm180, 0.0
      %188 = vst.msk [vmem:[#allocation2 + $0xa8] sm:$0x1] %vm180, 0.0
      %189 = vst.msk [vmem:[#allocation2 + $0xc0] sm:$0x1] %vm180, 0.0
      %190 = vst.msk [vmem:[#allocation2 + $0xd8] sm:$0x1] %vm180, 0.0
      %191 = vst.msk [vmem:[#allocation2 + $0xf0] sm:$0x1] %vm180, 0.0
      %192 = vst.msk [vmem:[#allocation2 + $0x108] sm:$0x1] %vm180, 0.0
      %193 = vst.msk [vmem:[#allocation2 + $0x120] sm:$0x1] %vm180, 0.0
      %194 = vst.msk [vmem:[#allocation2 + $0x138] sm:$0x1] %vm180, 0.0
      %195 = vst.msk [vmem:[#allocation2 + $0x150] sm:$0x1] %vm180, 0.0
      %196 = vst.msk [vmem:[#allocation2 + $0x168] sm:$0x1] %vm180, 0.0
      %197 = vst.msk [vmem:[#allocation2 + $0x180] sm:$0x1] %vm180, 0.0
      %198 = vst.msk [vmem:[#allocation2 + $0x198] sm:$0x1] %vm180, 0.0
      %199 = vst.msk [vmem:[#allocation2 + $0x11] sm:$0x1] %vm180, 0.0
      %200 = vst.msk [vmem:[#allocation2 + $0x29] sm:$0x1] %vm180, 0.0
      %201 = vst.msk [vmem:[#allocation2 + $0x41] sm:$0x1] %vm180, 0.0
      %202 = vst.msk [vmem:[#allocation2 + $0x59] sm:$0x1] %vm180, 0.0
      %203 = vst.msk [vmem:[#allocation2 + $0x71] sm:$0x1] %vm180, 0.0
      %204 = vst.msk [vmem:[#allocation2 + $0x89] sm:$0x1] %vm180, 0.0
      %205 = vst.msk [vmem:[#allocation2 + $0xa1] sm:$0x1] %vm180, 0.0
      %206 = vst.msk [vmem:[#allocation2 + $0xb9] sm:$0x1] %vm180, 0.0
      %207 = vst.msk [vmem:[#allocation2 + $0xd1] sm:$0x1] %vm180, 0.0
      %208 = vst.msk [vmem:[#allocation2 + $0xe9] sm:$0x1] %vm180, 0.0
      %209 = vst.msk [vmem:[#allocation2 + $0x101] sm:$0x1] %vm180, 0.0
      %210 = vst.msk [vmem:[#allocation2 + $0x119] sm:$0x1] %vm180, 0.0
      %211 = vst.msk [vmem:[#allocation2 + $0x131] sm:$0x1] %vm180, 0.0
      %212 = vst.msk [vmem:[#allocation2 + $0x149] sm:$0x1] %vm180, 0.0
      %213 = vst.msk [vmem:[#allocation2 + $0x161] sm:$0x1] %vm180, 0.0
      %214 = vst.msk [vmem:[#allocation2 + $0x179] sm:$0x1] %vm180, 0.0
      %215 = vst.msk [vmem:[#allocation2 + $0x191] sm:$0x1] %vm180, 0.0
      %216 = vst.msk [vmem:[#allocation2 + $0x1a9] sm:$0x1] %vm180, 0.0
      %v217 = vld [vmem:[%s165] sm:$0xff]
      %v218 = vld [vmem:[%s165 + $0x8] sm:$0xff]
      %v219 = vld [vmem:[%s165 + $0x10] sm:$0xff]
      %v220 = vld [vmem:[%s165 + $0x18] sm:$0xff]
      %v221 = vld [vmem:[%s165 + $0x20] sm:$0xff]
      %v222 = vld [vmem:[%s165 + $0x28] sm:$0xff]
      %v223 = vld [vmem:[%s165 + $0x30] sm:$0xff]
      %v224 = vld [vmem:[%s165 + $0x38] sm:$0xff]
      %v225 = vld [vmem:[%s165 + $0x40] sm:$0xff]
      %v226 = vld [vmem:[%s165 + $0x48] sm:$0xff]
      %v227 = vld [vmem:[%s165 + $0x50] sm:$0xff]
      %v228 = vld [vmem:[%s165 + $0x58] sm:$0xff]
      %v229 = vld [vmem:[%s165 + $0x60] sm:$0xff]
      %v230 = vld [vmem:[%s165 + $0x68] sm:$0xff]
      %v231 = vld [vmem:[%s165 + $0x70] sm:$0xff]
      %v232 = vld [vmem:[%s165 + $0x78] sm:$0xff]
      %v233 = vld [vmem:[%s165 + $0x80] sm:$0xff]
      %v234 = vld [vmem:[%s165 + $0x88] sm:$0xff]
      %v235 = vld [vmem:[%s165 + $0x90] sm:$0xff]
      %v236 = vld [vmem:[%s165 + $0x98] sm:$0xff]
      %v237 = vld [vmem:[%s165 + $0xa0] sm:$0xff]
      %v238 = vld [vmem:[%s165 + $0xa8] sm:$0xff]
      %v239 = vld [vmem:[%s165 + $0xb0] sm:$0xff]
      %v240 = vld [vmem:[%s165 + $0xb8] sm:$0xff]
      %v241 = vld [vmem:[%s165 + $0xc0] sm:$0xff]
      %v242 = vld [vmem:[%s165 + $0xc8] sm:$0xff]
      %v243 = vld [vmem:[%s165 + $0xd0] sm:$0xff]
      %v244 = vld [vmem:[%s165 + $0xd8] sm:$0xff]
      %v245 = vld [vmem:[%s165 + $0xe0] sm:$0xff]
      %v246 = vld [vmem:[%s165 + $0xe8] sm:$0xff]
      %v247 = vld [vmem:[%s165 + $0xf0] sm:$0xff]
      %v248 = vld [vmem:[%s165 + $0xf8] sm:$0xff]
      %s249 = scalar_lea.vmem [#allocation2], 24
      %250 = vst.msk [vmem:[%s249 + $0x1] sm:$0xff] %vm171, %v217
      %251 = vst.msk [vmem:[%s249 + $0x9] sm:$0xff] %vm171, %v218
      %252 = vst.msk [vmem:[%s249 + $0x19] sm:$0xff] %vm171, %v219
      %253 = vst.msk [vmem:[%s249 + $0x21] sm:$0xff] %vm171, %v220
      %254 = vst.msk [vmem:[%s249 + $0x31] sm:$0xff] %vm171, %v221
      %255 = vst.msk [vmem:[%s249 + $0x39] sm:$0xff] %vm171, %v222
      %256 = vst.msk [vmem:[%s249 + $0x49] sm:$0xff] %vm171, %v223
      %257 = vst.msk [vmem:[%s249 + $0x51] sm:$0xff] %vm171, %v224
      %258 = vst.msk [vmem:[%s249 + $0x61] sm:$0xff] %vm171, %v225
      %259 = vst.msk [vmem:[%s249 + $0x69] sm:$0xff] %vm171, %v226
      %260 = vst.msk [vmem:[%s249 + $0x79] sm:$0xff] %vm171, %v227
      %261 = vst.msk [vmem:[%s249 + $0x81] sm:$0xff] %vm171, %v228
      %262 = vst.msk [vmem:[%s249 + $0x91] sm:$0xff] %vm171, %v229
      %263 = vst.msk [vmem:[%s249 + $0x99] sm:$0xff] %vm171, %v230
      %264 = vst.msk [vmem:[%s249 + $0xa9] sm:$0xff] %vm171, %v231
      %265 = vst.msk [vmem:[%s249 + $0xb1] sm:$0xff] %vm171, %v232
      %266 = vst.msk [vmem:[%s249 + $0xc1] sm:$0xff] %vm171, %v233
      %267 = vst.msk [vmem:[%s249 + $0xc9] sm:$0xff] %vm171, %v234
      %268 = vst.msk [vmem:[%s249 + $0xd9] sm:$0xff] %vm171, %v235
      %269 = vst.msk [vmem:[%s249 + $0xe1] sm:$0xff] %vm171, %v236
      %270 = vst.msk [vmem:[%s249 + $0xf1] sm:$0xff] %vm171, %v237
      %271 = vst.msk [vmem:[%s249 + $0xf9] sm:$0xff] %vm171, %v238
      %272 = vst.msk [vmem:[%s249 + $0x109] sm:$0xff] %vm171, %v239
      %273 = vst.msk [vmem:[%s249 + $0x111] sm:$0xff] %vm171, %v240
      %274 = vst.msk [vmem:[%s249 + $0x121] sm:$0xff] %vm171, %v241
      %275 = vst.msk [vmem:[%s249 + $0x129] sm:$0xff] %vm171, %v242
      %276 = vst.msk [vmem:[%s249 + $0x139] sm:$0xff] %vm171, %v243
      %277 = vst.msk [vmem:[%s249 + $0x141] sm:$0xff] %vm171, %v244
      %278 = vst.msk [vmem:[%s249 + $0x151] sm:$0xff] %vm171, %v245
      %279 = vst.msk [vmem:[%s249 + $0x159] sm:$0xff] %vm171, %v246
      %280 = vst.msk [vmem:[%s249 + $0x169] sm:$0xff] %vm171, %v247
      %281 = vst.msk [vmem:[%s249 + $0x171] sm:$0xff] %vm171, %v248
      %v282 = vld [vmem:[#allocation2] sm:$0xff]
      %v283 = vld [vmem:[#allocation2 + $0x8] sm:$0xff]
      %v284 = vld [vmem:[#allocation2 + $0x18] sm:$0xff]
      %v285 = vld [vmem:[#allocation2 + $0x20] sm:$0xff]
      %v286 = vld [vmem:[#allocation2 + $0x30] sm:$0xff]
      %v287 = vld [vmem:[#allocation2 + $0x38] sm:$0xff]
      %v288 = vld [vmem:[#allocation2 + $0x48] sm:$0xff]
      %v289 = vld [vmem:[#allocation2 + $0x50] sm:$0xff]
      %v290 = vld [vmem:[#allocation2 + $0x60] sm:$0xff]
      %v291 = vld [vmem:[#allocation2 + $0x68] sm:$0xff]
      %v292 = vld [vmem:[#allocation2 + $0x78] sm:$0xff]
      %v293 = vld [vmem:[#allocation2 + $0x80] sm:$0xff]
      %v294 = vld [vmem:[#allocation2 + $0x90] sm:$0xff]
      %v295 = vld [vmem:[#allocation2 + $0x98] sm:$0xff]
      %v296 = vld [vmem:[#allocation2 + $0xa8] sm:$0xff]
      %v297 = vld [vmem:[#allocation2 + $0xb0] sm:$0xff]
      %v298 = vld [vmem:[#allocation2 + $0xc0] sm:$0xff]
      %v299 = vld [vmem:[#allocation2 + $0xc8] sm:$0xff]
      %v300 = vld [vmem:[#allocation2 + $0xd8] sm:$0xff]
      %v301 = vld [vmem:[#allocation2 + $0xe0] sm:$0xff]
      %v302 = vld [vmem:[#allocation2 + $0xf0] sm:$0xff]
      %v303 = vld [vmem:[#allocation2 + $0xf8] sm:$0xff]
      %v304 = vld [vmem:[#allocation2 + $0x108] sm:$0xff]
      %v305 = vld [vmem:[#allocation2 + $0x110] sm:$0xff]
      %v306 = vld [vmem:[#allocation2 + $0x120] sm:$0xff]
      %v307 = vld [vmem:[#allocation2 + $0x128] sm:$0xff]
      %v308 = vld [vmem:[#allocation2 + $0x138] sm:$0xff]
      %v309 = vld [vmem:[#allocation2 + $0x140] sm:$0xff]
      %v310 = vld [vmem:[#allocation2 + $0x150] sm:$0xff]
      %v311 = vld [vmem:[#allocation2 + $0x158] sm:$0xff]
      %v312 = vld [vmem:[#allocation2 + $0x168] sm:$0xff]
      %v313 = vld [vmem:[#allocation2 + $0x170] sm:$0xff]
      %v314 = vld [vmem:[%s1] sm:$0xf]
      %v315 = vld [vmem:[#allocation2 + $0x1] sm:$0xff]
      %v316 = vld [vmem:[#allocation2 + $0x9] sm:$0xff]
      %v317 = vld [vmem:[#allocation2 + $0x19] sm:$0xff]
      %v318 = vld [vmem:[#allocation2 + $0x21] sm:$0xff]
      %v319 = vld [vmem:[#allocation2 + $0x31] sm:$0xff]
      %v320 = vld [vmem:[#allocation2 + $0x39] sm:$0xff]
      %v321 = vld [vmem:[#allocation2 + $0x49] sm:$0xff]
      %v322 = vld [vmem:[#allocation2 + $0x51] sm:$0xff]
      %v323 = vld [vmem:[#allocation2 + $0x61] sm:$0xff]
      %v324 = vld [vmem:[#allocation2 + $0x69] sm:$0xff]
      %v325 = vld [vmem:[#allocation2 + $0x79] sm:$0xff]
      %v326 = vld [vmem:[#allocation2 + $0x81] sm:$0xff]
      %v327 = vld [vmem:[#allocation2 + $0x91] sm:$0xff]
      %v328 = vld [vmem:[#allocation2 + $0x99] sm:$0xff]
      %v329 = vld [vmem:[#allocation2 + $0xa9] sm:$0xff]
      %v330 = vld [vmem:[#allocation2 + $0xb1] sm:$0xff]
      %v331 = vld [vmem:[#allocation2 + $0xc1] sm:$0xff]
      %v332 = vld [vmem:[#allocation2 + $0xc9] sm:$0xff]
      %v333 = vld [vmem:[#allocation2 + $0xd9] sm:$0xff]
      %v334 = vld [vmem:[#allocation2 + $0xe1] sm:$0xff]
      %v335 = vld [vmem:[#allocation2 + $0xf1] sm:$0xff]
      %v336 = vld [vmem:[#allocation2 + $0xf9] sm:$0xff]
      %v337 = vld [vmem:[#allocation2 + $0x109] sm:$0xff]
      %v338 = vld [vmem:[#allocation2 + $0x111] sm:$0xff]
      %v339 = vld [vmem:[#allocation2 + $0x121] sm:$0xff]
      %v340 = vld [vmem:[#allocation2 + $0x129] sm:$0xff]
      %v341 = vld [vmem:[#allocation2 + $0x139] sm:$0xff]
      %v342 = vld [vmem:[#allocation2 + $0x141] sm:$0xff]
      %v343 = vld [vmem:[#allocation2 + $0x151] sm:$0xff]
      %v344 = vld [vmem:[#allocation2 + $0x159] sm:$0xff]
      %v345 = vld [vmem:[#allocation2 + $0x169] sm:$0xff]
      %v346 = vld [vmem:[#allocation2 + $0x171] sm:$0xff]
      %s347 = scalar_lea.vmem %s1, 4
      %v348 = vld [vmem:[%s347] sm:$0xf]
      %v350 = vsel %vm171, %v315, 0
      %v353 = vsel %vm171, %v316, 0
      %v356 = vsel %vm171, %v317, 0
      %v359 = vsel %vm171, %v318, 0
      %v362 = vsel %vm171, %v319, 0
      %v365 = vsel %vm171, %v320, 0
      %v368 = vsel %vm171, %v321, 0
      %v371 = vsel %vm171, %v322, 0
      %v374 = vsel %vm171, %v323, 0
      %v377 = vsel %vm171, %v324, 0
      %v380 = vsel %vm171, %v325, 0
      %v383 = vsel %vm171, %v326, 0
      %v386 = vsel %vm171, %v327, 0
      %v389 = vsel %vm171, %v328, 0
      %v392 = vsel %vm171, %v329, 0
      %v395 = vsel %vm171, %v330, 0
      %v398 = vsel %vm171, %v331, 0
      %v401 = vsel %vm171, %v332, 0
      %v404 = vsel %vm171, %v333, 0
      %v407 = vsel %vm171, %v334, 0
      %v410 = vsel %vm171, %v335, 0
      %v413 = vsel %vm171, %v336, 0
      %v416 = vsel %vm171, %v337, 0
      %v419 = vsel %vm171, %v338, 0
      %v422 = vsel %vm171, %v339, 0
      %v425 = vsel %vm171, %v340, 0
      %v428 = vsel %vm171, %v341, 0
      %v431 = vsel %vm171, %v342, 0
      %v434 = vsel %vm171, %v343, 0
      %v437 = vsel %vm171, %v344, 0
      %v440 = vsel %vm171, %v345, 0
      %v443 = vsel %vm171, %v346, 0
      %vm445 = vcmask 1043456
      %v447 = vsel %vm445, %v348, 0
      %449 = vmatprep.subr.mxu0 0.0
      %450 = vmatpush1.msra.mxu0 %v447
      %451 = vmatprep.subr.mxu0 0.0
      %452 = vmatpush1.msra.mxu0 0.0
      %453 = vmatprep.subr.mxu0 0.0
      %454 = vmatpush1.msra.mxu0 0.0
      %455 = vmatprep.subr.mxu0 0.0
      %456 = vmatpush1.msra.mxu0 0.0
      %457 = vmatprep.subr.mxu0 0.0
      %458 = vmatpush1.msra.mxu0 0.0
      %459 = vmatprep.subr.mxu0 0.0
      %460 = vmatpush1.msra.mxu0 0.0
      %461 = vmatprep.subr.mxu0 0.0
      %462 = vmatpush1.msra.mxu0 0.0
      %463 = vmatprep.subr.mxu0 0.0
      %464 = vmatpush1.msra.mxu0 0.0
      %465 = vmatprep.subr.mxu0 0.0
      %466 = vmatpush1.msra.mxu0 0.0
      %467 = vmatprep.subr.mxu0 0.0
      %468 = vmatpush1.msra.mxu0 0.0
      %469 = vmatprep.subr.mxu0 0.0
      %470 = vmatpush1.msra.mxu0 0.0
      %471 = vmatprep.subr.mxu0 0.0
      %472 = vmatpush1.msra.mxu0 0.0
      %473 = vmatprep.subr.mxu0 0.0
      %474 = vmatpush1.msra.mxu0 0.0
      %475 = vmatprep.subr.mxu0 0.0
      %476 = vmatpush1.msra.mxu0 0.0
      %477 = vmatprep.subr.mxu0 0.0
      %478 = vmatpush1.msra.mxu0 0.0
      %479 = vmatprep.subr.mxu0 0.0
      %480 = vmatpush1.msra.mxu0 0.0
      %481 = vmatprep.subr.mxu0 0.0
      %482 = vmatpush1.msra.mxu0 0.0
      %483 = vmatprep.subr.mxu0 0.0
      %484 = vmatpush1.msra.mxu0 0.0
      %485 = vmatprep.subr.mxu0 0.0
      %486 = vmatpush1.msra.mxu0 0.0
      %487 = vmatprep.subr.mxu0 0.0
      %488 = vmatpush1.msra.mxu0 0.0
      %489 = vmatprep.subr.mxu0 0.0
      %490 = vmatpush1.msra.mxu0 0.0
      %491 = vmatprep.subr.mxu0 0.0
      %492 = vmatpush1.msra.mxu0 0.0
      %493 = vmatprep.subr.mxu0 0.0
      %494 = vmatpush1.msra.mxu0 0.0
      %495 = vmatprep.subr.mxu0 0.0
      %496 = vmatpush1.msra.mxu0 0.0
      %497 = vmatprep.subr.mxu0 0.0
      %498 = vmatpush1.msra.mxu0 0.0
      %499 = vmatprep.subr.mxu0 0.0
      %500 = vmatpush1.msra.mxu0 0.0
      %501 = vmatprep.subr.mxu0 0.0
      %502 = vmatpush1.msra.mxu0 0.0
      %503 = vmatprep.subr.mxu0 0.0
      %504 = vmatpush1.msra.mxu0 0.0
      %505 = vmatprep.subr.mxu0 0.0
      %506 = vmatpush1.msra.mxu0 0.0
      %507 = vmatprep.subr.mxu0 0.0
      %508 = vmatpush1.msra.mxu0 0.0
      %509 = vmatprep.subr.mxu0 0.0
      %510 = vmatpush1.msra.mxu0 0.0
      %511 = vmatprep.subr.mxu0 0.0
      %512 = vmatpush1.msra.mxu0 0.0
      %513 = vmatprep.mubr.f32.mxu0 0.0
      %514 = vmatmul.mubr.f32.gmra.mrb[0].mxu0 %v350
      %v515 = vpop.f32.mrb[0].mxu0
      %v516 = vadd.f32 0.0, %v515
      %v517 = vpop.f32.mrb[0].mxu0
      %518 = vmatprep.mubr.f32.mxu0 0.0
      %519 = vmatmul.mubr.f32.gmra.mrb[0].mxu0 %v353
      %v520 = vpop.f32.mrb[0].mxu0
      %v521 = vadd.f32 0.0, %v520
      %v522 = vpop.f32.mrb[0].mxu0
      %523 = vmatprep.mubr.f32.mxu0 0.0
      %524 = vmatmul.mubr.f32.gmra.mrb[0].mxu0 %v356
      %v525 = vpop.f32.mrb[0].mxu0
      %v526 = vadd.f32 0.0, %v525
      %v527 = vpop.f32.mrb[0].mxu0
      %528 = vmatprep.mubr.f32.mxu0 0.0
      %529 = vmatmul.mubr.f32.gmra.mrb[0].mxu0 %v359
      %v530 = vpop.f32.mrb[0].mxu0
      %v531 = vadd.f32 0.0, %v530
      %v532 = vpop.f32.mrb[0].mxu0
      %533 = vmatprep.mubr.f32.mxu0 0.0
      %534 = vmatmul.mubr.f32.gmra.mrb[0].mxu0 %v362
      %v535 = vpop.f32.mrb[0].mxu0
      %v536 = vadd.f32 0.0, %v535
      %v537 = vpop.f32.mrb[0].mxu0
      %538 = vmatprep.mubr.f32.mxu0 0.0
      %539 = vmatmul.mubr.f32.gmra.mrb[0].mxu0 %v365
      %v540 = vpop.f32.mrb[0].mxu0
      %v541 = vadd.f32 0.0, %v540
      %v542 = vpop.f32.mrb[0].mxu0
      %543 = vmatprep.mubr.f32.mxu0 0.0
      %544 = vmatmul.mubr.f32.gmra.mrb[0].mxu0 %v368
      %v545 = vpop.f32.mrb[0].mxu0
      %v546 = vadd.f32 0.0, %v545
      %v547 = vpop.f32.mrb[0].mxu0
      %548 = vmatprep.mubr.f32.mxu0 0.0
      %549 = vmatmul.mubr.f32.gmra.mrb[0].mxu0 %v371
      %v550 = vpop.f32.mrb[0].mxu0
      %v551 = vadd.f32 0.0, %v550
      %v552 = vpop.f32.mrb[0].mxu0
      %553 = vmatprep.mubr.f32.mxu0 0.0
      %554 = vmatmul.mubr.f32.gmra.mrb[0].mxu0 %v374
      %v555 = vpop.f32.mrb[0].mxu0
      %v556 = vadd.f32 0.0, %v555
      %v557 = vpop.f32.mrb[0].mxu0
      %558 = vmatprep.mubr.f32.mxu0 0.0
      %559 = vmatmul.mubr.f32.gmra.mrb[0].mxu0 %v377
      %v560 = vpop.f32.mrb[0].mxu0
      %v561 = vadd.f32 0.0, %v560
      %v562 = vpop.f32.mrb[0].mxu0
      %563 = vmatprep.mubr.f32.mxu0 0.0
      %564 = vmatmul.mubr.f32.gmra.mrb[0].mxu0 %v380
      %v565 = vpop.f32.mrb[0].mxu0
      %v566 = vadd.f32 0.0, %v565
      %v567 = vpop.f32.mrb[0].mxu0
      %568 = vmatprep.mubr.f32.mxu0 0.0
      %569 = vmatmul.mubr.f32.gmra.mrb[0].mxu0 %v383
      %v570 = vpop.f32.mrb[0].mxu0
      %v571 = vadd.f32 0.0, %v570
      %v572 = vpop.f32.mrb[0].mxu0
      %573 = vmatprep.mubr.f32.mxu0 0.0
      %574 = vmatmul.mubr.f32.gmra.mrb[0].mxu0 %v386
      %v575 = vpop.f32.mrb[0].mxu0
      %v576 = vadd.f32 0.0, %v575
      %v577 = vpop.f32.mrb[0].mxu0
      %578 = vmatprep.mubr.f32.mxu0 0.0
      %579 = vmatmul.mubr.f32.gmra.mrb[0].mxu0 %v389
      %v580 = vpop.f32.mrb[0].mxu0
      %v581 = vadd.f32 0.0, %v580
      %v582 = vpop.f32.mrb[0].mxu0
      %583 = vmatprep.mubr.f32.mxu0 0.0
      %584 = vmatmul.mubr.f32.gmra.mrb[0].mxu0 %v392
      %v585 = vpop.f32.mrb[0].mxu0
      %v586 = vadd.f32 0.0, %v585
      %v587 = vpop.f32.mrb[0].mxu0
      %588 = vmatprep.mubr.f32.mxu0 0.0
      %589 = vmatmul.mubr.f32.gmra.mrb[0].mxu0 %v395
      %v590 = vpop.f32.mrb[0].mxu0
      %v591 = vadd.f32 0.0, %v590
      %v592 = vpop.f32.mrb[0].mxu0
      %593 = vmatprep.mubr.f32.mxu0 0.0
      %594 = vmatmul.mubr.f32.gmra.mrb[0].mxu0 %v398
      %v595 = vpop.f32.mrb[0].mxu0
      %v596 = vadd.f32 0.0, %v595
      %v597 = vpop.f32.mrb[0].mxu0
      %598 = vmatprep.mubr.f32.mxu0 0.0
      %599 = vmatmul.mubr.f32.gmra.mrb[0].mxu0 %v401
      %v600 = vpop.f32.mrb[0].mxu0
      %v601 = vadd.f32 0.0, %v600
      %v602 = vpop.f32.mrb[0].mxu0
      %603 = vmatprep.mubr.f32.mxu0 0.0
      %604 = vmatmul.mubr.f32.gmra.mrb[0].mxu0 %v404
      %v605 = vpop.f32.mrb[0].mxu0
      %v606 = vadd.f32 0.0, %v605
      %v607 = vpop.f32.mrb[0].mxu0
      %608 = vmatprep.mubr.f32.mxu0 0.0
      %609 = vmatmul.mubr.f32.gmra.mrb[0].mxu0 %v407
      %v610 = vpop.f32.mrb[0].mxu0
      %v611 = vadd.f32 0.0, %v610
      %v612 = vpop.f32.mrb[0].mxu0
      %613 = vmatprep.mubr.f32.mxu0 0.0
      %614 = vmatmul.mubr.f32.gmra.mrb[0].mxu0 %v410
      %v615 = vpop.f32.mrb[0].mxu0
      %v616 = vadd.f32 0.0, %v615
      %v617 = vpop.f32.mrb[0].mxu0
      %618 = vmatprep.mubr.f32.mxu0 0.0
      %619 = vmatmul.mubr.f32.gmra.mrb[0].mxu0 %v413
      %v620 = vpop.f32.mrb[0].mxu0
      %v621 = vadd.f32 0.0, %v620
      %v622 = vpop.f32.mrb[0].mxu0
      %623 = vmatprep.mubr.f32.mxu0 0.0
      %624 = vmatmul.mubr.f32.gmra.mrb[0].mxu0 %v416
      %v625 = vpop.f32.mrb[0].mxu0
      %v626 = vadd.f32 0.0, %v625
      %v627 = vpop.f32.mrb[0].mxu0
      %628 = vmatprep.mubr.f32.mxu0 0.0
      %629 = vmatmul.mubr.f32.gmra.mrb[0].mxu0 %v419
      %v630 = vpop.f32.mrb[0].mxu0
      %v631 = vadd.f32 0.0, %v630
      %v632 = vpop.f32.mrb[0].mxu0
      %633 = vmatprep.mubr.f32.mxu0 0.0
      %634 = vmatmul.mubr.f32.gmra.mrb[0].mxu0 %v422
      %v635 = vpop.f32.mrb[0].mxu0
      %v636 = vadd.f32 0.0, %v635
      %v637 = vpop.f32.mrb[0].mxu0
      %638 = vmatprep.mubr.f32.mxu0 0.0
      %639 = vmatmul.mubr.f32.gmra.mrb[0].mxu0 %v425
      %v640 = vpop.f32.mrb[0].mxu0
      %v641 = vadd.f32 0.0, %v640
      %v642 = vpop.f32.mrb[0].mxu0
      %643 = vmatprep.mubr.f32.mxu0 0.0
      %644 = vmatmul.mubr.f32.gmra.mrb[0].mxu0 %v428
      %v645 = vpop.f32.mrb[0].mxu0
      %v646 = vadd.f32 0.0, %v645
      %v647 = vpop.f32.mrb[0].mxu0
      %648 = vmatprep.mubr.f32.mxu0 0.0
      %649 = vmatmul.mubr.f32.gmra.mrb[0].mxu0 %v431
      %v650 = vpop.f32.mrb[0].mxu0
      %v651 = vadd.f32 0.0, %v650
      %v652 = vpop.f32.mrb[0].mxu0
      %653 = vmatprep.mubr.f32.mxu0 0.0
      %654 = vmatmul.mubr.f32.gmra.mrb[0].mxu0 %v434
      %v655 = vpop.f32.mrb[0].mxu0
      %v656 = vadd.f32 0.0, %v655
      %v657 = vpop.f32.mrb[0].mxu0
      %658 = vmatprep.mubr.f32.mxu0 0.0
      %659 = vmatmul.mubr.f32.gmra.mrb[0].mxu0 %v437
      %v660 = vpop.f32.mrb[0].mxu0
      %v661 = vadd.f32 0.0, %v660
      %v662 = vpop.f32.mrb[0].mxu0
      %663 = vmatprep.mubr.f32.mxu0 0.0
      %664 = vmatmul.mubr.f32.gmra.mrb[0].mxu0 %v440
      %v665 = vpop.f32.mrb[0].mxu0
      %v666 = vadd.f32 0.0, %v665
      %v667 = vpop.f32.mrb[0].mxu0
      %668 = vmatprep.mubr.f32.mxu0 0.0
      %669 = vmatmul.mubr.f32.gmra.mrb[0].mxu0 %v443
      %v670 = vpop.f32.mrb[0].mxu0
      %v671 = vadd.f32 0.0, %v670
      %v672 = vpop.f32.mrb[0].mxu0
      %673 = vdwg.mxu0
      %v675 = vsel %vm171, %v282, 0
      %v678 = vsel %vm171, %v283, 0
      %v681 = vsel %vm171, %v284, 0
      %v684 = vsel %vm171, %v285, 0
      %v687 = vsel %vm171, %v286, 0
      %v690 = vsel %vm171, %v287, 0
      %v693 = vsel %vm171, %v288, 0
      %v696 = vsel %vm171, %v289, 0
      %v699 = vsel %vm171, %v290, 0
      %v702 = vsel %vm171, %v291, 0
      %v705 = vsel %vm171, %v292, 0
      %v708 = vsel %vm171, %v293, 0
      %v711 = vsel %vm171, %v294, 0
      %v714 = vsel %vm171, %v295, 0
      %v717 = vsel %vm171, %v296, 0
      %v720 = vsel %vm171, %v297, 0
      %v723 = vsel %vm171, %v298, 0
      %v726 = vsel %vm171, %v299, 0
      %v729 = vsel %vm171, %v300, 0
      %v732 = vsel %vm171, %v301, 0
      %v735 = vsel %vm171, %v302, 0
      %v738 = vsel %vm171, %v303, 0
      %v741 = vsel %vm171, %v304, 0
      %v744 = vsel %vm171, %v305, 0
      %v747 = vsel %vm171, %v306, 0
      %v750 = vsel %vm171, %v307, 0
      %v753 = vsel %vm171, %v308, 0
      %v756 = vsel %vm171, %v309, 0
      %v759 = vsel %vm171, %v310, 0
      %v762 = vsel %vm171, %v311, 0
      %v765 = vsel %vm171, %v312, 0
      %v768 = vsel %vm171, %v313, 0
      %v771 = vsel %vm445, %v314, 0
      %773 = vmatprep.subr.mxu0 0.0
      %774 = vmatpush1.msra.mxu0 %v771
      %775 = vmatprep.subr.mxu0 0.0
      %776 = vmatpush1.msra.mxu0 0.0
      %777 = vmatprep.subr.mxu0 0.0
      %778 = vmatpush1.msra.mxu0 0.0
      %779 = vmatprep.subr.mxu0 0.0
      %780 = vmatpush1.msra.mxu0 0.0
      %781 = vmatprep.subr.mxu0 0.0
      %782 = vmatpush1.msra.mxu0 0.0
      %783 = vmatprep.subr.mxu0 0.0
      %784 = vmatpush1.msra.mxu0 0.0
      %785 = vmatprep.subr.mxu0 0.0
      %786 = vmatpush1.msra.mxu0 0.0
      %787 = vmatprep.subr.mxu0 0.0
      %788 = vmatpush1.msra.mxu0 0.0
      %789 = vmatprep.subr.mxu0 0.0
      %790 = vmatpush1.msra.mxu0 0.0
      %791 = vmatprep.subr.mxu0 0.0
      %792 = vmatpush1.msra.mxu0 0.0
      %793 = vmatprep.subr.mxu0 0.0
      %794 = vmatpush1.msra.mxu0 0.0
      %795 = vmatprep.subr.mxu0 0.0
      %796 = vmatpush1.msra.mxu0 0.0
      %797 = vmatprep.subr.mxu0 0.0
      %798 = vmatpush1.msra.mxu0 0.0
      %799 = vmatprep.subr.mxu0 0.0
      %800 = vmatpush1.msra.mxu0 0.0
      %801 = vmatprep.subr.mxu0 0.0
      %802 = vmatpush1.msra.mxu0 0.0
      %803 = vmatprep.subr.mxu0 0.0
      %804 = vmatpush1.msra.mxu0 0.0
      %805 = vmatprep.subr.mxu0 0.0
      %806 = vmatpush1.msra.mxu0 0.0
      %807 = vmatprep.subr.mxu0 0.0
      %808 = vmatpush1.msra.mxu0 0.0
      %809 = vmatprep.subr.mxu0 0.0
      %810 = vmatpush1.msra.mxu0 0.0
      %811 = vmatprep.subr.mxu0 0.0
      %812 = vmatpush1.msra.mxu0 0.0
      %813 = vmatprep.subr.mxu0 0.0
      %814 = vmatpush1.msra.mxu0 0.0
      %815 = vmatprep.subr.mxu0 0.0
      %816 = vmatpush1.msra.mxu0 0.0
      %817 = vmatprep.subr.mxu0 0.0
      %818 = vmatpush1.msra.mxu0 0.0
      %819 = vmatprep.subr.mxu0 0.0
      %820 = vmatpush1.msra.mxu0 0.0
      %821 = vmatprep.subr.mxu0 0.0
      %822 = vmatpush1.msra.mxu0 0.0
      %823 = vmatprep.subr.mxu0 0.0
      %824 = vmatpush1.msra.mxu0 0.0
      %825 = vmatprep.subr.mxu0 0.0
      %826 = vmatpush1.msra.mxu0 0.0
      %827 = vmatprep.subr.mxu0 0.0
      %828 = vmatpush1.msra.mxu0 0.0
      %829 = vmatprep.subr.mxu0 0.0
      %830 = vmatpush1.msra.mxu0 0.0
      %831 = vmatprep.subr.mxu0 0.0
      %832 = vmatpush1.msra.mxu0 0.0
      %833 = vmatprep.subr.mxu0 0.0
      %834 = vmatpush1.msra.mxu0 0.0
      %835 = vmatprep.subr.mxu0 0.0
      %836 = vmatpush1.msra.mxu0 0.0
      %837 = vmatprep.mubr.f32.mxu0 0.0
      %838 = vmatmul.mubr.f32.gmra.mrb[0].mxu0 %v675
      %v839 = vpop.f32.mrb[0].mxu0
      %v840 = vadd.f32 %v516, %v839
      %v841 = vpop.f32.mrb[0].mxu0
      %842 = vmatprep.mubr.f32.mxu0 0.0
      %843 = vmatmul.mubr.f32.gmra.mrb[0].mxu0 %v678
      %v844 = vpop.f32.mrb[0].mxu0
      %v845 = vadd.f32 %v521, %v844
      %v846 = vpop.f32.mrb[0].mxu0
      %847 = vmatprep.mubr.f32.mxu0 0.0
      %848 = vmatmul.mubr.f32.gmra.mrb[0].mxu0 %v681
      %v849 = vpop.f32.mrb[0].mxu0
      %v850 = vadd.f32 %v526, %v849
      %v851 = vpop.f32.mrb[0].mxu0
      %852 = vmatprep.mubr.f32.mxu0 0.0
      %853 = vmatmul.mubr.f32.gmra.mrb[0].mxu0 %v684
      %v854 = vpop.f32.mrb[0].mxu0
      %v855 = vadd.f32 %v531, %v854
      %v856 = vpop.f32.mrb[0].mxu0
      %857 = vmatprep.mubr.f32.mxu0 0.0
      %858 = vmatmul.mubr.f32.gmra.mrb[0].mxu0 %v687
      %v859 = vpop.f32.mrb[0].mxu0
      %v860 = vadd.f32 %v536, %v859
      %v861 = vpop.f32.mrb[0].mxu0
      %862 = vmatprep.mubr.f32.mxu0 0.0
      %863 = vmatmul.mubr.f32.gmra.mrb[0].mxu0 %v690
      %v864 = vpop.f32.mrb[0].mxu0
      %v865 = vadd.f32 %v541, %v864
      %v866 = vpop.f32.mrb[0].mxu0
      %867 = vmatprep.mubr.f32.mxu0 0.0
      %868 = vmatmul.mubr.f32.gmra.mrb[0].mxu0 %v693
      %v869 = vpop.f32.mrb[0].mxu0
      %v870 = vadd.f32 %v546, %v869
      %v871 = vpop.f32.mrb[0].mxu0
      %872 = vmatprep.mubr.f32.mxu0 0.0
      %873 = vmatmul.mubr.f32.gmra.mrb[0].mxu0 %v696
      %v874 = vpop.f32.mrb[0].mxu0
      %v875 = vadd.f32 %v551, %v874
      %v876 = vpop.f32.mrb[0].mxu0
      %877 = vmatprep.mubr.f32.mxu0 0.0
      %878 = vmatmul.mubr.f32.gmra.mrb[0].mxu0 %v699
      %v879 = vpop.f32.mrb[0].mxu0
      %v880 = vadd.f32 %v556, %v879
      %v881 = vpop.f32.mrb[0].mxu0
      %882 = vmatprep.mubr.f32.mxu0 0.0
      %883 = vmatmul.mubr.f32.gmra.mrb[0].mxu0 %v702
      %v884 = vpop.f32.mrb[0].mxu0
      %v885 = vadd.f32 %v561, %v884
      %v886 = vpop.f32.mrb[0].mxu0
      %887 = vmatprep.mubr.f32.mxu0 0.0
      %888 = vmatmul.mubr.f32.gmra.mrb[0].mxu0 %v705
      %v889 = vpop.f32.mrb[0].mxu0
      %v890 = vadd.f32 %v566, %v889
      %v891 = vpop.f32.mrb[0].mxu0
      %892 = vmatprep.mubr.f32.mxu0 0.0
      %893 = vmatmul.mubr.f32.gmra.mrb[0].mxu0 %v708
      %v894 = vpop.f32.mrb[0].mxu0
      %v895 = vadd.f32 %v571, %v894
      %v896 = vpop.f32.mrb[0].mxu0
      %897 = vmatprep.mubr.f32.mxu0 0.0
      %898 = vmatmul.mubr.f32.gmra.mrb[0].mxu0 %v711
      %v899 = vpop.f32.mrb[0].mxu0
      %v900 = vadd.f32 %v576, %v899
      %v901 = vpop.f32.mrb[0].mxu0
      %902 = vmatprep.mubr.f32.mxu0 0.0
      %903 = vmatmul.mubr.f32.gmra.mrb[0].mxu0 %v714
      %v904 = vpop.f32.mrb[0].mxu0
      %v905 = vadd.f32 %v581, %v904
      %v906 = vpop.f32.mrb[0].mxu0
      %907 = vmatprep.mubr.f32.mxu0 0.0
      %908 = vmatmul.mubr.f32.gmra.mrb[0].mxu0 %v717
      %v909 = vpop.f32.mrb[0].mxu0
      %v910 = vadd.f32 %v586, %v909
      %v911 = vpop.f32.mrb[0].mxu0
      %912 = vmatprep.mubr.f32.mxu0 0.0
      %913 = vmatmul.mubr.f32.gmra.mrb[0].mxu0 %v720
      %v914 = vpop.f32.mrb[0].mxu0
      %v915 = vadd.f32 %v591, %v914
      %v916 = vpop.f32.mrb[0].mxu0
      %917 = vmatprep.mubr.f32.mxu0 0.0
      %918 = vmatmul.mubr.f32.gmra.mrb[0].mxu0 %v723
      %v919 = vpop.f32.mrb[0].mxu0
      %v920 = vadd.f32 %v596, %v919
      %v921 = vpop.f32.mrb[0].mxu0
      %922 = vmatprep.mubr.f32.mxu0 0.0
      %923 = vmatmul.mubr.f32.gmra.mrb[0].mxu0 %v726
      %v924 = vpop.f32.mrb[0].mxu0
      %v925 = vadd.f32 %v601, %v924
      %v926 = vpop.f32.mrb[0].mxu0
      %927 = vmatprep.mubr.f32.mxu0 0.0
      %928 = vmatmul.mubr.f32.gmra.mrb[0].mxu0 %v729
      %v929 = vpop.f32.mrb[0].mxu0
      %v930 = vadd.f32 %v606, %v929
      %v931 = vpop.f32.mrb[0].mxu0
      %932 = vmatprep.mubr.f32.mxu0 0.0
      %933 = vmatmul.mubr.f32.gmra.mrb[0].mxu0 %v732
      %v934 = vpop.f32.mrb[0].mxu0
      %v935 = vadd.f32 %v611, %v934
      %v936 = vpop.f32.mrb[0].mxu0
      %937 = vmatprep.mubr.f32.mxu0 0.0
      %938 = vmatmul.mubr.f32.gmra.mrb[0].mxu0 %v735
      %v939 = vpop.f32.mrb[0].mxu0
      %v940 = vadd.f32 %v616, %v939
      %v941 = vpop.f32.mrb[0].mxu0
      %942 = vmatprep.mubr.f32.mxu0 0.0
      %943 = vmatmul.mubr.f32.gmra.mrb[0].mxu0 %v738
      %v944 = vpop.f32.mrb[0].mxu0
      %v945 = vadd.f32 %v621, %v944
      %v946 = vpop.f32.mrb[0].mxu0
      %947 = vmatprep.mubr.f32.mxu0 0.0
      %948 = vmatmul.mubr.f32.gmra.mrb[0].mxu0 %v741
      %v949 = vpop.f32.mrb[0].mxu0
      %v950 = vadd.f32 %v626, %v949
      %v951 = vpop.f32.mrb[0].mxu0
      %952 = vmatprep.mubr.f32.mxu0 0.0
      %953 = vmatmul.mubr.f32.gmra.mrb[0].mxu0 %v744
      %v954 = vpop.f32.mrb[0].mxu0
      %v955 = vadd.f32 %v631, %v954
      %v956 = vpop.f32.mrb[0].mxu0
      %957 = vmatprep.mubr.f32.mxu0 0.0
      %958 = vmatmul.mubr.f32.gmra.mrb[0].mxu0 %v747
      %v959 = vpop.f32.mrb[0].mxu0
      %v960 = vadd.f32 %v636, %v959
      %v961 = vpop.f32.mrb[0].mxu0
      %962 = vmatprep.mubr.f32.mxu0 0.0
      %963 = vmatmul.mubr.f32.gmra.mrb[0].mxu0 %v750
      %v964 = vpop.f32.mrb[0].mxu0
      %v965 = vadd.f32 %v641, %v964
      %v966 = vpop.f32.mrb[0].mxu0
      %967 = vmatprep.mubr.f32.mxu0 0.0
      %968 = vmatmul.mubr.f32.gmra.mrb[0].mxu0 %v753
      %v969 = vpop.f32.mrb[0].mxu0
      %v970 = vadd.f32 %v646, %v969
      %v971 = vpop.f32.mrb[0].mxu0
      %972 = vmatprep.mubr.f32.mxu0 0.0
      %973 = vmatmul.mubr.f32.gmra.mrb[0].mxu0 %v756
      %v974 = vpop.f32.mrb[0].mxu0
      %v975 = vadd.f32 %v651, %v974
      %v976 = vpop.f32.mrb[0].mxu0
      %977 = vmatprep.mubr.f32.mxu0 0.0
      %978 = vmatmul.mubr.f32.gmra.mrb[0].mxu0 %v759
      %v979 = vpop.f32.mrb[0].mxu0
      %v980 = vadd.f32 %v656, %v979
      %v981 = vpop.f32.mrb[0].mxu0
      %982 = vmatprep.mubr.f32.mxu0 0.0
      %983 = vmatmul.mubr.f32.gmra.mrb[0].mxu0 %v762
      %v984 = vpop.f32.mrb[0].mxu0
      %v985 = vadd.f32 %v661, %v984
      %v986 = vpop.f32.mrb[0].mxu0
      %987 = vmatprep.mubr.f32.mxu0 0.0
      %988 = vmatmul.mubr.f32.gmra.mrb[0].mxu0 %v765
      %v989 = vpop.f32.mrb[0].mxu0
      %v990 = vadd.f32 %v666, %v989
      %v991 = vpop.f32.mrb[0].mxu0
      %992 = vmatprep.mubr.f32.mxu0 0.0
      %993 = vmatmul.mubr.f32.gmra.mrb[0].mxu0 %v768
      %v994 = vpop.f32.mrb[0].mxu0
      %v995 = vadd.f32 %v671, %v994
      %v996 = vpop.f32.mrb[0].mxu0
      %997 = vdwg.mxu0
      %v998 = vld [vmem:[#allocation2 + $0x2] sm:$0xff]
      %v999 = vld [vmem:[#allocation2 + $0xa] sm:$0xff]
      %v1000 = vld [vmem:[#allocation2 + $0x1a] sm:$0xff]
      %v1001 = vld [vmem:[#allocation2 + $0x22] sm:$0xff]
      %v1002 = vld [vmem:[#allocation2 + $0x32] sm:$0xff]
      %v1003 = vld [vmem:[#allocation2 + $0x3a] sm:$0xff]
      %v1004 = vld [vmem:[#allocation2 + $0x4a] sm:$0xff]
      %v1005 = vld [vmem:[#allocation2 + $0x52] sm:$0xff]
      %v1006 = vld [vmem:[#allocation2 + $0x62] sm:$0xff]
      %v1007 = vld [vmem:[#allocation2 + $0x6a] sm:$0xff]
      %v1008 = vld [vmem:[#allocation2 + $0x7a] sm:$0xff]
      %v1009 = vld [vmem:[#allocation2 + $0x82] sm:$0xff]
      %v1010 = vld [vmem:[#allocation2 + $0x92] sm:$0xff]
      %v1011 = vld [vmem:[#allocation2 + $0x9a] sm:$0xff]
      %v1012 = vld [vmem:[#allocation2 + $0xaa] sm:$0xff]
      %v1013 = vld [vmem:[#allocation2 + $0xb2] sm:$0xff]
      %v1014 = vld [vmem:[#allocation2 + $0xc2] sm:$0xff]
      %v1015 = vld [vmem:[#allocation2 + $0xca] sm:$0xff]
      %v1016 = vld [vmem:[#allocation2 + $0xda] sm:$0xff]
      %v1017 = vld [vmem:[#allocation2 + $0xe2] sm:$0xff]
      %v1018 = vld [vmem:[#allocation2 + $0xf2] sm:$0xff]
      %v1019 = vld [vmem:[#allocation2 + $0xfa] sm:$0xff]
      %v1020 = vld [vmem:[#allocation2 + $0x10a] sm:$0xff]
      %v1021 = vld [vmem:[#allocation2 + $0x112] sm:$0xff]
      %v1022 = vld [vmem:[#allocation2 + $0x122] sm:$0xff]
      %v1023 = vld [vmem:[#allocation2 + $0x12a] sm:$0xff]
      %v1024 = vld [vmem:[#allocation2 + $0x13a] sm:$0xff]
      %v1025 = vld [vmem:[#allocation2 + $0x142] sm:$0xff]
      %v1026 = vld [vmem:[#allocation2 + $0x152] sm:$0xff]
      %v1027 = vld [vmem:[#allocation2 + $0x15a] sm:$0xff]
      %v1028 = vld [vmem:[#allocation2 + $0x16a] sm:$0xff]
      %v1029 = vld [vmem:[#allocation2 + $0x172] sm:$0xff]
      %s1030 = scalar_lea.vmem %s1, 8
      %v1031 = vld [vmem:[%s1030] sm:$0xf]
      %v1033 = vsel %vm171, %v998, 0
      %v1036 = vsel %vm171, %v999, 0
      %v1039 = vsel %vm171, %v1000, 0
      %v1042 = vsel %vm171, %v1001, 0
      %v1045 = vsel %vm171, %v1002, 0
      %v1048 = vsel %vm171, %v1003, 0
      %v1051 = vsel %vm171, %v1004, 0
      %v1054 = vsel %vm171, %v1005, 0
      %v1057 = vsel %vm171, %v1006, 0
      %v1060 = vsel %vm171, %v1007, 0
      %v1063 = vsel %vm171, %v1008, 0
      %v1066 = vsel %vm171, %v1009, 0
      %v1069 = vsel %vm171, %v1010, 0
      %v1072 = vsel %vm171, %v1011, 0
      %v1075 = vsel %vm171, %v1012, 0
      %v1078 = vsel %vm171, %v1013, 0
      %v1081 = vsel %vm171, %v1014, 0
      %v1084 = vsel %vm171, %v1015, 0
      %v1087 = vsel %vm171, %v1016, 0
      %v1090 = vsel %vm171, %v1017, 0
      %v1093 = vsel %vm171, %v1018, 0
      %v1096 = vsel %vm171, %v1019, 0
      %v1099 = vsel %vm171, %v1020, 0
      %v1102 = vsel %vm171, %v1021, 0
      %v1105 = vsel %vm171, %v1022, 0
      %v1108 = vsel %vm171, %v1023, 0
      %v1111 = vsel %vm171, %v1024, 0
      %v1114 = vsel %vm171, %v1025, 0
      %v1117 = vsel %vm171, %v1026, 0
      %v1120 = vsel %vm171, %v1027, 0
      %v1123 = vsel %vm171, %v1028, 0
      %v1126 = vsel %vm171, %v1029, 0
      %v1129 = vsel %vm445, %v1031, 0
      %1131 = vmatprep.subr.mxu0 0.0
      %1132 = vmatpush1.msra.mxu0 %v1129
      %1133 = vmatprep.subr.mxu0 0.0
      %1134 = vmatpush1.msra.mxu0 0.0
      %1135 = vmatprep.subr.mxu0 0.0
      %1136 = vmatpush1.msra.mxu0 0.0
      %1137 = vmatprep.subr.mxu0 0.0
      %1138 = vmatpush1.msra.mxu0 0.0
      %1139 = vmatprep.subr.mxu0 0.0
      %1140 = vmatpush1.msra.mxu0 0.0
      %1141 = vmatprep.subr.mxu0 0.0
      %1142 = vmatpush1.msra.mxu0 0.0
      %1143 = vmatprep.subr.mxu0 0.0
      %1144 = vmatpush1.msra.mxu0 0.0
      %1145 = vmatprep.subr.mxu0 0.0
      %1146 = vmatpush1.msra.mxu0 0.0
      %1147 = vmatprep.subr.mxu0 0.0
      %1148 = vmatpush1.msra.mxu0 0.0
      %1149 = vmatprep.subr.mxu0 0.0
      %1150 = vmatpush1.msra.mxu0 0.0
      %1151 = vmatprep.subr.mxu0 0.0
      %1152 = vmatpush1.msra.mxu0 0.0
      %1153 = vmatprep.subr.mxu0 0.0
      %1154 = vmatpush1.msra.mxu0 0.0
      %1155 = vmatprep.subr.mxu0 0.0
      %1156 = vmatpush1.msra.mxu0 0.0
      %1157 = vmatprep.subr.mxu0 0.0
      %1158 = vmatpush1.msra.mxu0 0.0
      %1159 = vmatprep.subr.mxu0 0.0
      %1160 = vmatpush1.msra.mxu0 0.0
      %1161 = vmatprep.subr.mxu0 0.0
      %1162 = vmatpush1.msra.mxu0 0.0
      %1163 = vmatprep.subr.mxu0 0.0
      %1164 = vmatpush1.msra.mxu0 0.0
      %1165 = vmatprep.subr.mxu0 0.0
      %1166 = vmatpush1.msra.mxu0 0.0
      %1167 = vmatprep.subr.mxu0 0.0
      %1168 = vmatpush1.msra.mxu0 0.0
      %1169 = vmatprep.subr.mxu0 0.0
      %1170 = vmatpush1.msra.mxu0 0.0
      %1171 = vmatprep.subr.mxu0 0.0
      %1172 = vmatpush1.msra.mxu0 0.0
      %1173 = vmatprep.subr.mxu0 0.0
      %1174 = vmatpush1.msra.mxu0 0.0
      %1175 = vmatprep.subr.mxu0 0.0
      %1176 = vmatpush1.msra.mxu0 0.0
      %1177 = vmatprep.subr.mxu0 0.0
      %1178 = vmatpush1.msra.mxu0 0.0
      %1179 = vmatprep.subr.mxu0 0.0
      %1180 = vmatpush1.msra.mxu0 0.0
      %1181 = vmatprep.subr.mxu0 0.0
      %1182 = vmatpush1.msra.mxu0 0.0
      %1183 = vmatprep.subr.mxu0 0.0
      %1184 = vmatpush1.msra.mxu0 0.0
      %1185 = vmatprep.subr.mxu0 0.0
      %1186 = vmatpush1.msra.mxu0 0.0
      %1187 = vmatprep.subr.mxu0 0.0
      %1188 = vmatpush1.msra.mxu0 0.0
      %1189 = vmatprep.subr.mxu0 0.0
      %1190 = vmatpush1.msra.mxu0 0.0
      %1191 = vmatprep.subr.mxu0 0.0
      %1192 = vmatpush1.msra.mxu0 0.0
      %1193 = vmatprep.subr.mxu0 0.0
      %1194 = vmatpush1.msra.mxu0 0.0
      %1195 = vmatprep.mubr.f32.mxu0 0.0
      %1196 = vmatmul.mubr.f32.gmra.mrb[0].mxu0 %v1033
      %v1197 = vpop.f32.mrb[0].mxu0
      %v1198 = vadd.f32 0.0, %v1197
      %v1199 = vpop.f32.mrb[0].mxu0
      %1200 = vmatprep.mubr.f32.mxu0 0.0
      %1201 = vmatmul.mubr.f32.gmra.mrb[0].mxu0 %v1036
      %v1202 = vpop.f32.mrb[0].mxu0
      %v1203 = vadd.f32 0.0, %v1202
      %v1204 = vpop.f32.mrb[0].mxu0
      %1205 = vmatprep.mubr.f32.mxu0 0.0
      %1206 = vmatmul.mubr.f32.gmra.mrb[0].mxu0 %v1039
      %v1207 = vpop.f32.mrb[0].mxu0
      %v1208 = vadd.f32 0.0, %v1207
      %v1209 = vpop.f32.mrb[0].mxu0
      %1210 = vmatprep.mubr.f32.mxu0 0.0
      %1211 = vmatmul.mubr.f32.gmra.mrb[0].mxu0 %v1042
      %v1212 = vpop.f32.mrb[0].mxu0
      %v1213 = vadd.f32 0.0, %v1212
      %v1214 = vpop.f32.mrb[0].mxu0
      %1215 = vmatprep.mubr.f32.mxu0 0.0
      %1216 = vmatmul.mubr.f32.gmra.mrb[0].mxu0 %v1045
      %v1217 = vpop.f32.mrb[0].mxu0
      %v1218 = vadd.f32 0.0, %v1217
      %v1219 = vpop.f32.mrb[0].mxu0
      %1220 = vmatprep.mubr.f32.mxu0 0.0
      %1221 = vmatmul.mubr.f32.gmra.mrb[0].mxu0 %v1048
      %v1222 = vpop.f32.mrb[0].mxu0
      %v1223 = vadd.f32 0.0, %v1222
      %v1224 = vpop.f32.mrb[0].mxu0
      %1225 = vmatprep.mubr.f32.mxu0 0.0
      %1226 = vmatmul.mubr.f32.gmra.mrb[0].mxu0 %v1051
      %v1227 = vpop.f32.mrb[0].mxu0
      %v1228 = vadd.f32 0.0, %v1227
      %v1229 = vpop.f32.mrb[0].mxu0
      %1230 = vmatprep.mubr.f32.mxu0 0.0
      %1231 = vmatmul.mubr.f32.gmra.mrb[0].mxu0 %v1054
      %v1232 = vpop.f32.mrb[0].mxu0
      %v1233 = vadd.f32 0.0, %v1232
      %v1234 = vpop.f32.mrb[0].mxu0
      %1235 = vmatprep.mubr.f32.mxu0 0.0
      %1236 = vmatmul.mubr.f32.gmra.mrb[0].mxu0 %v1057
      %v1237 = vpop.f32.mrb[0].mxu0
      %v1238 = vadd.f32 0.0, %v1237
      %v1239 = vpop.f32.mrb[0].mxu0
      %1240 = vmatprep.mubr.f32.mxu0 0.0
      %1241 = vmatmul.mubr.f32.gmra.mrb[0].mxu0 %v1060
      %v1242 = vpop.f32.mrb[0].mxu0
      %v1243 = vadd.f32 0.0, %v1242
      %v1244 = vpop.f32.mrb[0].mxu0
      %1245 = vmatprep.mubr.f32.mxu0 0.0
      %1246 = vmatmul.mubr.f32.gmra.mrb[0].mxu0 %v1063
      %v1247 = vpop.f32.mrb[0].mxu0
      %v1248 = vadd.f32 0.0, %v1247
      %v1249 = vpop.f32.mrb[0].mxu0
      %1250 = vmatprep.mubr.f32.mxu0 0.0
      %1251 = vmatmul.mubr.f32.gmra.mrb[0].mxu0 %v1066
      %v1252 = vpop.f32.mrb[0].mxu0
      %v1253 = vadd.f32 0.0, %v1252
      %v1254 = vpop.f32.mrb[0].mxu0
      %1255 = vmatprep.mubr.f32.mxu0 0.0
      %1256 = vmatmul.mubr.f32.gmra.mrb[0].mxu0 %v1069
      %v1257 = vpop.f32.mrb[0].mxu0
      %v1258 = vadd.f32 0.0, %v1257
      %v1259 = vpop.f32.mrb[0].mxu0
      %1260 = vmatprep.mubr.f32.mxu0 0.0
      %1261 = vmatmul.mubr.f32.gmra.mrb[0].mxu0 %v1072
      %v1262 = vpop.f32.mrb[0].mxu0
      %v1263 = vadd.f32 0.0, %v1262
      %v1264 = vpop.f32.mrb[0].mxu0
      %1265 = vmatprep.mubr.f32.mxu0 0.0
      %1266 = vmatmul.mubr.f32.gmra.mrb[0].mxu0 %v1075
      %v1267 = vpop.f32.mrb[0].mxu0
      %v1268 = vadd.f32 0.0, %v1267
      %v1269 = vpop.f32.mrb[0].mxu0
      %1270 = vmatprep.mubr.f32.mxu0 0.0
      %1271 = vmatmul.mubr.f32.gmra.mrb[0].mxu0 %v1078
      %v1272 = vpop.f32.mrb[0].mxu0
      %v1273 = vadd.f32 0.0, %v1272
      %v1274 = vpop.f32.mrb[0].mxu0
      %1275 = vmatprep.mubr.f32.mxu0 0.0
      %1276 = vmatmul.mubr.f32.gmra.mrb[0].mxu0 %v1081
      %v1277 = vpop.f32.mrb[0].mxu0
      %v1278 = vadd.f32 0.0, %v1277
      %v1279 = vpop.f32.mrb[0].mxu0
      %1280 = vmatprep.mubr.f32.mxu0 0.0
      %1281 = vmatmul.mubr.f32.gmra.mrb[0].mxu0 %v1084
      %v1282 = vpop.f32.mrb[0].mxu0
      %v1283 = vadd.f32 0.0, %v1282
      %v1284 = vpop.f32.mrb[0].mxu0
      %1285 = vmatprep.mubr.f32.mxu0 0.0
      %1286 = vmatmul.mubr.f32.gmra.mrb[0].mxu0 %v1087
      %v1287 = vpop.f32.mrb[0].mxu0
      %v1288 = vadd.f32 0.0, %v1287
      %v1289 = vpop.f32.mrb[0].mxu0
      %1290 = vmatprep.mubr.f32.mxu0 0.0
      %1291 = vmatmul.mubr.f32.gmra.mrb[0].mxu0 %v1090
      %v1292 = vpop.f32.mrb[0].mxu0
      %v1293 = vadd.f32 0.0, %v1292
      %v1294 = vpop.f32.mrb[0].mxu0
      %1295 = vmatprep.mubr.f32.mxu0 0.0
      %1296 = vmatmul.mubr.f32.gmra.mrb[0].mxu0 %v1093
      %v1297 = vpop.f32.mrb[0].mxu0
      %v1298 = vadd.f32 0.0, %v1297
      %v1299 = vpop.f32.mrb[0].mxu0
      %1300 = vmatprep.mubr.f32.mxu0 0.0
      %1301 = vmatmul.mubr.f32.gmra.mrb[0].mxu0 %v1096
      %v1302 = vpop.f32.mrb[0].mxu0
      %v1303 = vadd.f32 0.0, %v1302
      %v1304 = vpop.f32.mrb[0].mxu0
      %1305 = vmatprep.mubr.f32.mxu0 0.0
      %1306 = vmatmul.mubr.f32.gmra.mrb[0].mxu0 %v1099
      %v1307 = vpop.f32.mrb[0].mxu0
      %v1308 = vadd.f32 0.0, %v1307
      %v1309 = vpop.f32.mrb[0].mxu0
      %1310 = vmatprep.mubr.f32.mxu0 0.0
      %1311 = vmatmul.mubr.f32.gmra.mrb[0].mxu0 %v1102
      %v1312 = vpop.f32.mrb[0].mxu0
      %v1313 = vadd.f32 0.0, %v1312
      %v1314 = vpop.f32.mrb[0].mxu0
      %1315 = vmatprep.mubr.f32.mxu0 0.0
      %1316 = vmatmul.mubr.f32.gmra.mrb[0].mxu0 %v1105
      %v1317 = vpop.f32.mrb[0].mxu0
      %v1318 = vadd.f32 0.0, %v1317
      %v1319 = vpop.f32.mrb[0].mxu0
      %1320 = vmatprep.mubr.f32.mxu0 0.0
      %1321 = vmatmul.mubr.f32.gmra.mrb[0].mxu0 %v1108
      %v1322 = vpop.f32.mrb[0].mxu0
      %v1323 = vadd.f32 0.0, %v1322
      %v1324 = vpop.f32.mrb[0].mxu0
      %1325 = vmatprep.mubr.f32.mxu0 0.0
      %1326 = vmatmul.mubr.f32.gmra.mrb[0].mxu0 %v1111
      %v1327 = vpop.f32.mrb[0].mxu0
      %v1328 = vadd.f32 0.0, %v1327
      %v1329 = vpop.f32.mrb[0].mxu0
      %1330 = vmatprep.mubr.f32.mxu0 0.0
      %1331 = vmatmul.mubr.f32.gmra.mrb[0].mxu0 %v1114
      %v1332 = vpop.f32.mrb[0].mxu0
      %v1333 = vadd.f32 0.0, %v1332
      %v1334 = vpop.f32.mrb[0].mxu0
      %1335 = vmatprep.mubr.f32.mxu0 0.0
      %1336 = vmatmul.mubr.f32.gmra.mrb[0].mxu0 %v1117
      %v1337 = vpop.f32.mrb[0].mxu0
      %v1338 = vadd.f32 0.0, %v1337
      %v1339 = vpop.f32.mrb[0].mxu0
      %1340 = vmatprep.mubr.f32.mxu0 0.0
      %1341 = vmatmul.mubr.f32.gmra.mrb[0].mxu0 %v1120
      %v1342 = vpop.f32.mrb[0].mxu0
      %v1343 = vadd.f32 0.0, %v1342
      %v1344 = vpop.f32.mrb[0].mxu0
      %1345 = vmatprep.mubr.f32.mxu0 0.0
      %1346 = vmatmul.mubr.f32.gmra.mrb[0].mxu0 %v1123
      %v1347 = vpop.f32.mrb[0].mxu0
      %v1348 = vadd.f32 0.0, %v1347
      %v1349 = vpop.f32.mrb[0].mxu0
      %1350 = vmatprep.mubr.f32.mxu0 0.0
      %1351 = vmatmul.mubr.f32.gmra.mrb[0].mxu0 %v1126
      %v1352 = vpop.f32.mrb[0].mxu0
      %v1353 = vadd.f32 0.0, %v1352
      %v1354 = vpop.f32.mrb[0].mxu0
      %1355 = vdwg.mxu0
      %v1356 = vadd.f32 %v840, %v1198
      %v1357 = vadd.f32 %v845, %v1203
      %v1358 = vadd.f32 %v850, %v1208
      %v1359 = vadd.f32 %v855, %v1213
      %v1360 = vadd.f32 %v860, %v1218
      %v1361 = vadd.f32 %v865, %v1223
      %v1362 = vadd.f32 %v870, %v1228
      %v1363 = vadd.f32 %v875, %v1233
      %v1364 = vadd.f32 %v880, %v1238
      %v1365 = vadd.f32 %v885, %v1243
      %v1366 = vadd.f32 %v890, %v1248
      %v1367 = vadd.f32 %v895, %v1253
      %v1368 = vadd.f32 %v900, %v1258
      %v1369 = vadd.f32 %v905, %v1263
      %v1370 = vadd.f32 %v910, %v1268
      %v1371 = vadd.f32 %v915, %v1273
      %v1372 = vadd.f32 %v920, %v1278
      %v1373 = vadd.f32 %v925, %v1283
      %v1374 = vadd.f32 %v930, %v1288
      %v1375 = vadd.f32 %v935, %v1293
      %v1376 = vadd.f32 %v940, %v1298
      %v1377 = vadd.f32 %v945, %v1303
      %v1378 = vadd.f32 %v950, %v1308
      %v1379 = vadd.f32 %v955, %v1313
      %v1380 = vadd.f32 %v960, %v1318
      %v1381 = vadd.f32 %v965, %v1323
      %v1382 = vadd.f32 %v970, %v1328
      %v1383 = vadd.f32 %v975, %v1333
      %v1384 = vadd.f32 %v980, %v1338
      %v1385 = vadd.f32 %v985, %v1343
      %v1386 = vadd.f32 %v990, %v1348
      %v1387 = vadd.f32 %v995, %v1353
      %v1388 = vld [vmem:[%s249] sm:$0xff]
      %v1389 = vld [vmem:[%s249 + $0x8] sm:$0xff]
      %v1390 = vld [vmem:[%s249 + $0x18] sm:$0xff]
      %v1391 = vld [vmem:[%s249 + $0x20] sm:$0xff]
      %v1392 = vld [vmem:[%s249 + $0x30] sm:$0xff]
      %v1393 = vld [vmem:[%s249 + $0x38] sm:$0xff]
      %v1394 = vld [vmem:[%s249 + $0x48] sm:$0xff]
      %v1395 = vld [vmem:[%s249 + $0x50] sm:$0xff]
      %v1396 = vld [vmem:[%s249 + $0x60] sm:$0xff]
      %v1397 = vld [vmem:[%s249 + $0x68] sm:$0xff]
      %v1398 = vld [vmem:[%s249 + $0x78] sm:$0xff]
      %v1399 = vld [vmem:[%s249 + $0x80] sm:$0xff]
      %v1400 = vld [vmem:[%s249 + $0x90] sm:$0xff]
      %v1401 = vld [vmem:[%s249 + $0x98] sm:$0xff]
      %v1402 = vld [vmem:[%s249 + $0xa8] sm:$0xff]
      %v1403 = vld [vmem:[%s249 + $0xb0] sm:$0xff]
      %v1404 = vld [vmem:[%s249 + $0xc0] sm:$0xff]
      %v1405 = vld [vmem:[%s249 + $0xc8] sm:$0xff]
      %v1406 = vld [vmem:[%s249 + $0xd8] sm:$0xff]
      %v1407 = vld [vmem:[%s249 + $0xe0] sm:$0xff]
      %v1408 = vld [vmem:[%s249 + $0xf0] sm:$0xff]
      %v1409 = vld [vmem:[%s249 + $0xf8] sm:$0xff]
      %v1410 = vld [vmem:[%s249 + $0x108] sm:$0xff]
      %v1411 = vld [vmem:[%s249 + $0x110] sm:$0xff]
      %v1412 = vld [vmem:[%s249 + $0x120] sm:$0xff]
      %v1413 = vld [vmem:[%s249 + $0x128] sm:$0xff]
      %v1414 = vld [vmem:[%s249 + $0x138] sm:$0xff]
      %v1415 = vld [vmem:[%s249 + $0x140] sm:$0xff]
      %v1416 = vld [vmem:[%s249 + $0x150] sm:$0xff]
      %v1417 = vld [vmem:[%s249 + $0x158] sm:$0xff]
      %v1418 = vld [vmem:[%s249 + $0x168] sm:$0xff]
      %v1419 = vld [vmem:[%s249 + $0x170] sm:$0xff]
      %s1420 = scalar_lea.vmem %s1, 12
      %v1421 = vld [vmem:[%s1420] sm:$0xf]
      %v1423 = vsel %vm171, %v1388, 0
      %v1426 = vsel %vm171, %v1389, 0
      %v1429 = vsel %vm171, %v1390, 0
      %v1432 = vsel %vm171, %v1391, 0
      %v1435 = vsel %vm171, %v1392, 0
      %v1438 = vsel %vm171, %v1393, 0
      %v1441 = vsel %vm171, %v1394, 0
      %v1444 = vsel %vm171, %v1395, 0
      %v1447 = vsel %vm171, %v1396, 0
      %v1450 = vsel %vm171, %v1397, 0
      %v1453 = vsel %vm171, %v1398, 0
      %v1456 = vsel %vm171, %v1399, 0
      %v1459 = vsel %vm171, %v1400, 0
      %v1462 = vsel %vm171, %v1401, 0
      %v1465 = vsel %vm171, %v1402, 0
      %v1468 = vsel %vm171, %v1403, 0
      %v1471 = vsel %vm171, %v1404, 0
      %v1474 = vsel %vm171, %v1405, 0
      %v1477 = vsel %vm171, %v1406, 0
      %v1480 = vsel %vm171, %v1407, 0
      %v1483 = vsel %vm171, %v1408, 0
      %v1486 = vsel %vm171, %v1409, 0
      %v1489 = vsel %vm171, %v1410, 0
      %v1492 = vsel %vm171, %v1411, 0
      %v1495 = vsel %vm171, %v1412, 0
      %v1498 = vsel %vm171, %v1413, 0
      %v1501 = vsel %vm171, %v1414, 0
      %v1504 = vsel %vm171, %v1415, 0
      %v1507 = vsel %vm171, %v1416, 0
      %v1510 = vsel %vm171, %v1417, 0
      %v1513 = vsel %vm171, %v1418, 0
      %v1516 = vsel %vm171, %v1419, 0
      %v1519 = vsel %vm445, %v1421, 0
      %1521 = vmatprep.subr.mxu0 0.0
      %1522 = vmatpush1.msra.mxu0 %v1519
      %1523 = vmatprep.subr.mxu0 0.0
      %1524 = vmatpush1.msra.mxu0 0.0
      %1525 = vmatprep.subr.mxu0 0.0
      %1526 = vmatpush1.msra.mxu0 0.0
      %1527 = vmatprep.subr.mxu0 0.0
      %1528 = vmatpush1.msra.mxu0 0.0
      %1529 = vmatprep.subr.mxu0 0.0
      %1530 = vmatpush1.msra.mxu0 0.0
      %1531 = vmatprep.subr.mxu0 0.0
      %1532 = vmatpush1.msra.mxu0 0.0
      %1533 = vmatprep.subr.mxu0 0.0
      %1534 = vmatpush1.msra.mxu0 0.0
      %1535 = vmatprep.subr.mxu0 0.0
      %1536 = vmatpush1.msra.mxu0 0.0
      %1537 = vmatprep.subr.mxu0 0.0
      %1538 = vmatpush1.msra.mxu0 0.0
      %1539 = vmatprep.subr.mxu0 0.0
      %1540 = vmatpush1.msra.mxu0 0.0
      %1541 = vmatprep.subr.mxu0 0.0
      %1542 = vmatpush1.msra.mxu0 0.0
      %1543 = vmatprep.subr.mxu0 0.0
      %1544 = vmatpush1.msra.mxu0 0.0
      %1545 = vmatprep.subr.mxu0 0.0
      %1546 = vmatpush1.msra.mxu0 0.0
      %1547 = vmatprep.subr.mxu0 0.0
      %1548 = vmatpush1.msra.mxu0 0.0
      %1549 = vmatprep.subr.mxu0 0.0
      %1550 = vmatpush1.msra.mxu0 0.0
      %1551 = vmatprep.subr.mxu0 0.0
      %1552 = vmatpush1.msra.mxu0 0.0
      %1553 = vmatprep.subr.mxu0 0.0
      %1554 = vmatpush1.msra.mxu0 0.0
      %1555 = vmatprep.subr.mxu0 0.0
      %1556 = vmatpush1.msra.mxu0 0.0
      %1557 = vmatprep.subr.mxu0 0.0
      %1558 = vmatpush1.msra.mxu0 0.0
      %1559 = vmatprep.subr.mxu0 0.0
      %1560 = vmatpush1.msra.mxu0 0.0
      %1561 = vmatprep.subr.mxu0 0.0
      %1562 = vmatpush1.msra.mxu0 0.0
      %1563 = vmatprep.subr.mxu0 0.0
      %1564 = vmatpush1.msra.mxu0 0.0
      %1565 = vmatprep.subr.mxu0 0.0
      %1566 = vmatpush1.msra.mxu0 0.0
      %1567 = vmatprep.subr.mxu0 0.0
      %1568 = vmatpush1.msra.mxu0 0.0
      %1569 = vmatprep.subr.mxu0 0.0
      %1570 = vmatpush1.msra.mxu0 0.0
      %1571 = vmatprep.subr.mxu0 0.0
      %1572 = vmatpush1.msra.mxu0 0.0
      %1573 = vmatprep.subr.mxu0 0.0
      %1574 = vmatpush1.msra.mxu0 0.0
      %1575 = vmatprep.subr.mxu0 0.0
      %1576 = vmatpush1.msra.mxu0 0.0
      %1577 = vmatprep.subr.mxu0 0.0
      %1578 = vmatpush1.msra.mxu0 0.0
      %1579 = vmatprep.subr.mxu0 0.0
      %1580 = vmatpush1.msra.mxu0 0.0
      %1581 = vmatprep.subr.mxu0 0.0
      %1582 = vmatpush1.msra.mxu0 0.0
      %1583 = vmatprep.subr.mxu0 0.0
      %1584 = vmatpush1.msra.mxu0 0.0
      %1585 = vmatprep.mubr.f32.mxu0 0.0
      %1586 = vmatmul.mubr.f32.gmra.mrb[0].mxu0 %v1423
      %v1587 = vpop.f32.mrb[0].mxu0
      %v1588 = vadd.f32 0.0, %v1587
      %v1589 = vpop.f32.mrb[0].mxu0
      %1590 = vmatprep.mubr.f32.mxu0 0.0
      %1591 = vmatmul.mubr.f32.gmra.mrb[0].mxu0 %v1426
      %v1592 = vpop.f32.mrb[0].mxu0
      %v1593 = vadd.f32 0.0, %v1592
      %v1594 = vpop.f32.mrb[0].mxu0
      %1595 = vmatprep.mubr.f32.mxu0 0.0
      %1596 = vmatmul.mubr.f32.gmra.mrb[0].mxu0 %v1429
      %v1597 = vpop.f32.mrb[0].mxu0
      %v1598 = vadd.f32 0.0, %v1597
      %v1599 = vpop.f32.mrb[0].mxu0
      %1600 = vmatprep.mubr.f32.mxu0 0.0
      %1601 = vmatmul.mubr.f32.gmra.mrb[0].mxu0 %v1432
      %v1602 = vpop.f32.mrb[0].mxu0
      %v1603 = vadd.f32 0.0, %v1602
      %v1604 = vpop.f32.mrb[0].mxu0
      %1605 = vmatprep.mubr.f32.mxu0 0.0
      %1606 = vmatmul.mubr.f32.gmra.mrb[0].mxu0 %v1435
      %v1607 = vpop.f32.mrb[0].mxu0
      %v1608 = vadd.f32 0.0, %v1607
      %v1609 = vpop.f32.mrb[0].mxu0
      %1610 = vmatprep.mubr.f32.mxu0 0.0
      %1611 = vmatmul.mubr.f32.gmra.mrb[0].mxu0 %v1438
      %v1612 = vpop.f32.mrb[0].mxu0
      %v1613 = vadd.f32 0.0, %v1612
      %v1614 = vpop.f32.mrb[0].mxu0
      %1615 = vmatprep.mubr.f32.mxu0 0.0
      %1616 = vmatmul.mubr.f32.gmra.mrb[0].mxu0 %v1441
      %v1617 = vpop.f32.mrb[0].mxu0
      %v1618 = vadd.f32 0.0, %v1617
      %v1619 = vpop.f32.mrb[0].mxu0
      %1620 = vmatprep.mubr.f32.mxu0 0.0
      %1621 = vmatmul.mubr.f32.gmra.mrb[0].mxu0 %v1444
      %v1622 = vpop.f32.mrb[0].mxu0
      %v1623 = vadd.f32 0.0, %v1622
      %v1624 = vpop.f32.mrb[0].mxu0
      %1625 = vmatprep.mubr.f32.mxu0 0.0
      %1626 = vmatmul.mubr.f32.gmra.mrb[0].mxu0 %v1447
      %v1627 = vpop.f32.mrb[0].mxu0
      %v1628 = vadd.f32 0.0, %v1627
      %v1629 = vpop.f32.mrb[0].mxu0
      %1630 = vmatprep.mubr.f32.mxu0 0.0
      %1631 = vmatmul.mubr.f32.gmra.mrb[0].mxu0 %v1450
      %v1632 = vpop.f32.mrb[0].mxu0
      %v1633 = vadd.f32 0.0, %v1632
      %v1634 = vpop.f32.mrb[0].mxu0
      %1635 = vmatprep.mubr.f32.mxu0 0.0
      %1636 = vmatmul.mubr.f32.gmra.mrb[0].mxu0 %v1453
      %v1637 = vpop.f32.mrb[0].mxu0
      %v1638 = vadd.f32 0.0, %v1637
      %v1639 = vpop.f32.mrb[0].mxu0
      %1640 = vmatprep.mubr.f32.mxu0 0.0
      %1641 = vmatmul.mubr.f32.gmra.mrb[0].mxu0 %v1456
      %v1642 = vpop.f32.mrb[0].mxu0
      %v1643 = vadd.f32 0.0, %v1642
      %v1644 = vpop.f32.mrb[0].mxu0
      %1645 = vmatprep.mubr.f32.mxu0 0.0
      %1646 = vmatmul.mubr.f32.gmra.mrb[0].mxu0 %v1459
      %v1647 = vpop.f32.mrb[0].mxu0
      %v1648 = vadd.f32 0.0, %v1647
      %v1649 = vpop.f32.mrb[0].mxu0
      %1650 = vmatprep.mubr.f32.mxu0 0.0
      %1651 = vmatmul.mubr.f32.gmra.mrb[0].mxu0 %v1462
      %v1652 = vpop.f32.mrb[0].mxu0
      %v1653 = vadd.f32 0.0, %v1652
      %v1654 = vpop.f32.mrb[0].mxu0
      %1655 = vmatprep.mubr.f32.mxu0 0.0
      %1656 = vmatmul.mubr.f32.gmra.mrb[0].mxu0 %v1465
      %v1657 = vpop.f32.mrb[0].mxu0
      %v1658 = vadd.f32 0.0, %v1657
      %v1659 = vpop.f32.mrb[0].mxu0
      %1660 = vmatprep.mubr.f32.mxu0 0.0
      %1661 = vmatmul.mubr.f32.gmra.mrb[0].mxu0 %v1468
      %v1662 = vpop.f32.mrb[0].mxu0
      %v1663 = vadd.f32 0.0, %v1662
      %v1664 = vpop.f32.mrb[0].mxu0
      %1665 = vmatprep.mubr.f32.mxu0 0.0
      %1666 = vmatmul.mubr.f32.gmra.mrb[0].mxu0 %v1471
      %v1667 = vpop.f32.mrb[0].mxu0
      %v1668 = vadd.f32 0.0, %v1667
      %v1669 = vpop.f32.mrb[0].mxu0
      %1670 = vmatprep.mubr.f32.mxu0 0.0
      %1671 = vmatmul.mubr.f32.gmra.mrb[0].mxu0 %v1474
      %v1672 = vpop.f32.mrb[0].mxu0
      %v1673 = vadd.f32 0.0, %v1672
      %v1674 = vpop.f32.mrb[0].mxu0
      %1675 = vmatprep.mubr.f32.mxu0 0.0
      %1676 = vmatmul.mubr.f32.gmra.mrb[0].mxu0 %v1477
      %v1677 = vpop.f32.mrb[0].mxu0
      %v1678 = vadd.f32 0.0, %v1677
      %v1679 = vpop.f32.mrb[0].mxu0
      %1680 = vmatprep.mubr.f32.mxu0 0.0
      %1681 = vmatmul.mubr.f32.gmra.mrb[0].mxu0 %v1480
      %v1682 = vpop.f32.mrb[0].mxu0
      %v1683 = vadd.f32 0.0, %v1682
      %v1684 = vpop.f32.mrb[0].mxu0
      %1685 = vmatprep.mubr.f32.mxu0 0.0
      %1686 = vmatmul.mubr.f32.gmra.mrb[0].mxu0 %v1483
      %v1687 = vpop.f32.mrb[0].mxu0
      %v1688 = vadd.f32 0.0, %v1687
      %v1689 = vpop.f32.mrb[0].mxu0
      %1690 = vmatprep.mubr.f32.mxu0 0.0
      %1691 = vmatmul.mubr.f32.gmra.mrb[0].mxu0 %v1486
      %v1692 = vpop.f32.mrb[0].mxu0
      %v1693 = vadd.f32 0.0, %v1692
      %v1694 = vpop.f32.mrb[0].mxu0
      %1695 = vmatprep.mubr.f32.mxu0 0.0
      %1696 = vmatmul.mubr.f32.gmra.mrb[0].mxu0 %v1489
      %v1697 = vpop.f32.mrb[0].mxu0
      %v1698 = vadd.f32 0.0, %v1697
      %v1699 = vpop.f32.mrb[0].mxu0
      %1700 = vmatprep.mubr.f32.mxu0 0.0
      %1701 = vmatmul.mubr.f32.gmra.mrb[0].mxu0 %v1492
      %v1702 = vpop.f32.mrb[0].mxu0
      %v1703 = vadd.f32 0.0, %v1702
      %v1704 = vpop.f32.mrb[0].mxu0
      %1705 = vmatprep.mubr.f32.mxu0 0.0
      %1706 = vmatmul.mubr.f32.gmra.mrb[0].mxu0 %v1495
      %v1707 = vpop.f32.mrb[0].mxu0
      %v1708 = vadd.f32 0.0, %v1707
      %v1709 = vpop.f32.mrb[0].mxu0
      %1710 = vmatprep.mubr.f32.mxu0 0.0
      %1711 = vmatmul.mubr.f32.gmra.mrb[0].mxu0 %v1498
      %v1712 = vpop.f32.mrb[0].mxu0
      %v1713 = vadd.f32 0.0, %v1712
      %v1714 = vpop.f32.mrb[0].mxu0
      %1715 = vmatprep.mubr.f32.mxu0 0.0
      %1716 = vmatmul.mubr.f32.gmra.mrb[0].mxu0 %v1501
      %v1717 = vpop.f32.mrb[0].mxu0
      %v1718 = vadd.f32 0.0, %v1717
      %v1719 = vpop.f32.mrb[0].mxu0
      %1720 = vmatprep.mubr.f32.mxu0 0.0
      %1721 = vmatmul.mubr.f32.gmra.mrb[0].mxu0 %v1504
      %v1722 = vpop.f32.mrb[0].mxu0
      %v1723 = vadd.f32 0.0, %v1722
      %v1724 = vpop.f32.mrb[0].mxu0
      %1725 = vmatprep.mubr.f32.mxu0 0.0
      %1726 = vmatmul.mubr.f32.gmra.mrb[0].mxu0 %v1507
      %v1727 = vpop.f32.mrb[0].mxu0
      %v1728 = vadd.f32 0.0, %v1727
      %v1729 = vpop.f32.mrb[0].mxu0
      %1730 = vmatprep.mubr.f32.mxu0 0.0
      %1731 = vmatmul.mubr.f32.gmra.mrb[0].mxu0 %v1510
      %v1732 = vpop.f32.mrb[0].mxu0
      %v1733 = vadd.f32 0.0, %v1732
      %v1734 = vpop.f32.mrb[0].mxu0
      %1735 = vmatprep.mubr.f32.mxu0 0.0
      %1736 = vmatmul.mubr.f32.gmra.mrb[0].mxu0 %v1513
      %v1737 = vpop.f32.mrb[0].mxu0
      %v1738 = vadd.f32 0.0, %v1737
      %v1739 = vpop.f32.mrb[0].mxu0
      %1740 = vmatprep.mubr.f32.mxu0 0.0
      %1741 = vmatmul.mubr.f32.gmra.mrb[0].mxu0 %v1516
      %v1742 = vpop.f32.mrb[0].mxu0
      %v1743 = vadd.f32 0.0, %v1742
      %v1744 = vpop.f32.mrb[0].mxu0
      %1745 = vdwg.mxu0
      %v1746 = vadd.f32 %v1356, %v1588
      %v1747 = vadd.f32 %v1357, %v1593
      %v1748 = vadd.f32 %v1358, %v1598
      %v1749 = vadd.f32 %v1359, %v1603
      %v1750 = vadd.f32 %v1360, %v1608
      %v1751 = vadd.f32 %v1361, %v1613
      %v1752 = vadd.f32 %v1362, %v1618
      %v1753 = vadd.f32 %v1363, %v1623
      %v1754 = vadd.f32 %v1364, %v1628
      %v1755 = vadd.f32 %v1365, %v1633
      %v1756 = vadd.f32 %v1366, %v1638
      %v1757 = vadd.f32 %v1367, %v1643
      %v1758 = vadd.f32 %v1368, %v1648
      %v1759 = vadd.f32 %v1369, %v1653
      %v1760 = vadd.f32 %v1370, %v1658
      %v1761 = vadd.f32 %v1371, %v1663
      %v1762 = vadd.f32 %v1372, %v1668
      %v1763 = vadd.f32 %v1373, %v1673
      %v1764 = vadd.f32 %v1374, %v1678
      %v1765 = vadd.f32 %v1375, %v1683
      %v1766 = vadd.f32 %v1376, %v1688
      %v1767 = vadd.f32 %v1377, %v1693
      %v1768 = vadd.f32 %v1378, %v1698
      %v1769 = vadd.f32 %v1379, %v1703
      %v1770 = vadd.f32 %v1380, %v1708
      %v1771 = vadd.f32 %v1381, %v1713
      %v1772 = vadd.f32 %v1382, %v1718
      %v1773 = vadd.f32 %v1383, %v1723
      %v1774 = vadd.f32 %v1384, %v1728
      %v1775 = vadd.f32 %v1385, %v1733
      %v1776 = vadd.f32 %v1386, %v1738
      %v1777 = vadd.f32 %v1387, %v1743
      %v1778 = vld [vmem:[%s249 + $0x1] sm:$0xff]
      %v1779 = vld [vmem:[%s249 + $0x9] sm:$0xff]
      %v1780 = vld [vmem:[%s249 + $0x19] sm:$0xff]
      %v1781 = vld [vmem:[%s249 + $0x21] sm:$0xff]
      %v1782 = vld [vmem:[%s249 + $0x31] sm:$0xff]
      %v1783 = vld [vmem:[%s249 + $0x39] sm:$0xff]
      %v1784 = vld [vmem:[%s249 + $0x49] sm:$0xff]
      %v1785 = vld [vmem:[%s249 + $0x51] sm:$0xff]
      %v1786 = vld [vmem:[%s249 + $0x61] sm:$0xff]
      %v1787 = vld [vmem:[%s249 + $0x69] sm:$0xff]
      %v1788 = vld [vmem:[%s249 + $0x79] sm:$0xff]
      %v1789 = vld [vmem:[%s249 + $0x81] sm:$0xff]
      %v1790 = vld [vmem:[%s249 + $0x91] sm:$0xff]
      %v1791 = vld [vmem:[%s249 + $0x99] sm:$0xff]
      %v1792 = vld [vmem:[%s249 + $0xa9] sm:$0xff]
      %v1793 = vld [vmem:[%s249 + $0xb1] sm:$0xff]
      %v1794 = vld [vmem:[%s249 + $0xc1] sm:$0xff]
      %v1795 = vld [vmem:[%s249 + $0xc9] sm:$0xff]
      %v1796 = vld [vmem:[%s249 + $0xd9] sm:$0xff]
      %v1797 = vld [vmem:[%s249 + $0xe1] sm:$0xff]
      %v1798 = vld [vmem:[%s249 + $0xf1] sm:$0xff]
      %v1799 = vld [vmem:[%s249 + $0xf9] sm:$0xff]
      %v1800 = vld [vmem:[%s249 + $0x109] sm:$0xff]
      %v1801 = vld [vmem:[%s249 + $0x111] sm:$0xff]
      %v1802 = vld [vmem:[%s249 + $0x121] sm:$0xff]
      %v1803 = vld [vmem:[%s249 + $0x129] sm:$0xff]
      %v1804 = vld [vmem:[%s249 + $0x139] sm:$0xff]
      %v1805 = vld [vmem:[%s249 + $0x141] sm:$0xff]
      %v1806 = vld [vmem:[%s249 + $0x151] sm:$0xff]
      %v1807 = vld [vmem:[%s249 + $0x159] sm:$0xff]
      %v1808 = vld [vmem:[%s249 + $0x169] sm:$0xff]
      %v1809 = vld [vmem:[%s249 + $0x171] sm:$0xff]
      %s1810 = scalar_lea.vmem %s1, 16
      %v1811 = vld [vmem:[%s1810] sm:$0xf]
      %v1813 = vsel %vm171, %v1778, 0
      %v1816 = vsel %vm171, %v1779, 0
      %v1819 = vsel %vm171, %v1780, 0
      %v1822 = vsel %vm171, %v1781, 0
      %v1825 = vsel %vm171, %v1782, 0
      %v1828 = vsel %vm171, %v1783, 0
      %v1831 = vsel %vm171, %v1784, 0
      %v1834 = vsel %vm171, %v1785, 0
      %v1837 = vsel %vm171, %v1786, 0
      %v1840 = vsel %vm171, %v1787, 0
      %v1843 = vsel %vm171, %v1788, 0
      %v1846 = vsel %vm171, %v1789, 0
      %v1849 = vsel %vm171, %v1790, 0
      %v1852 = vsel %vm171, %v1791, 0
      %v1855 = vsel %vm171, %v1792, 0
      %v1858 = vsel %vm171, %v1793, 0
      %v1861 = vsel %vm171, %v1794, 0
      %v1864 = vsel %vm171, %v1795, 0
      %v1867 = vsel %vm171, %v1796, 0
      %v1870 = vsel %vm171, %v1797, 0
      %v1873 = vsel %vm171, %v1798, 0
      %v1876 = vsel %vm171, %v1799, 0
      %v1879 = vsel %vm171, %v1800, 0
      %v1882 = vsel %vm171, %v1801, 0
      %v1885 = vsel %vm171, %v1802, 0
      %v1888 = vsel %vm171, %v1803, 0
      %v1891 = vsel %vm171, %v1804, 0
      %v1894 = vsel %vm171, %v1805, 0
      %v1897 = vsel %vm171, %v1806, 0
      %v1900 = vsel %vm171, %v1807, 0
      %v1903 = vsel %vm171, %v1808, 0
      %v1906 = vsel %vm171, %v1809, 0
      %v1909 = vsel %vm445, %v1811, 0
      %1911 = vmatprep.subr.mxu0 0.0
      %1912 = vmatpush1.msra.mxu0 %v1909
      %1913 = vmatprep.subr.mxu0 0.0
      %1914 = vmatpush1.msra.mxu0 0.0
      %1915 = vmatprep.subr.mxu0 0.0
      %1916 = vmatpush1.msra.mxu0 0.0
      %1917 = vmatprep.subr.mxu0 0.0
      %1918 = vmatpush1.msra.mxu0 0.0
      %1919 = vmatprep.subr.mxu0 0.0
      %1920 = vmatpush1.msra.mxu0 0.0
      %1921 = vmatprep.subr.mxu0 0.0
      %1922 = vmatpush1.msra.mxu0 0.0
      %1923 = vmatprep.subr.mxu0 0.0
      %1924 = vmatpush1.msra.mxu0 0.0
      %1925 = vmatprep.subr.mxu0 0.0
      %1926 = vmatpush1.msra.mxu0 0.0
      %1927 = vmatprep.subr.mxu0 0.0
      %1928 = vmatpush1.msra.mxu0 0.0
      %1929 = vmatprep.subr.mxu0 0.0
      %1930 = vmatpush1.msra.mxu0 0.0
      %1931 = vmatprep.subr.mxu0 0.0
      %1932 = vmatpush1.msra.mxu0 0.0
      %1933 = vmatprep.subr.mxu0 0.0
      %1934 = vmatpush1.msra.mxu0 0.0
      %1935 = vmatprep.subr.mxu0 0.0
      %1936 = vmatpush1.msra.mxu0 0.0
      %1937 = vmatprep.subr.mxu0 0.0
      %1938 = vmatpush1.msra.mxu0 0.0
      %1939 = vmatprep.subr.mxu0 0.0
      %1940 = vmatpush1.msra.mxu0 0.0
      %1941 = vmatprep.subr.mxu0 0.0
      %1942 = vmatpush1.msra.mxu0 0.0
      %1943 = vmatprep.subr.mxu0 0.0
      %1944 = vmatpush1.msra.mxu0 0.0
      %1945 = vmatprep.subr.mxu0 0.0
      %1946 = vmatpush1.msra.mxu0 0.0
      %1947 = vmatprep.subr.mxu0 0.0
      %1948 = vmatpush1.msra.mxu0 0.0
      %1949 = vmatprep.subr.mxu0 0.0
      %1950 = vmatpush1.msra.mxu0 0.0
      %1951 = vmatprep.subr.mxu0 0.0
      %1952 = vmatpush1.msra.mxu0 0.0
      %1953 = vmatprep.subr.mxu0 0.0
      %1954 = vmatpush1.msra.mxu0 0.0
      %1955 = vmatprep.subr.mxu0 0.0
      %1956 = vmatpush1.msra.mxu0 0.0
      %1957 = vmatprep.subr.mxu0 0.0
      %1958 = vmatpush1.msra.mxu0 0.0
      %1959 = vmatprep.subr.mxu0 0.0
      %1960 = vmatpush1.msra.mxu0 0.0
      %1961 = vmatprep.subr.mxu0 0.0
      %1962 = vmatpush1.msra.mxu0 0.0
      %1963 = vmatprep.subr.mxu0 0.0
      %1964 = vmatpush1.msra.mxu0 0.0
      %1965 = vmatprep.subr.mxu0 0.0
      %1966 = vmatpush1.msra.mxu0 0.0
      %1967 = vmatprep.subr.mxu0 0.0
      %1968 = vmatpush1.msra.mxu0 0.0
      %1969 = vmatprep.subr.mxu0 0.0
      %1970 = vmatpush1.msra.mxu0 0.0
      %1971 = vmatprep.subr.mxu0 0.0
      %1972 = vmatpush1.msra.mxu0 0.0
      %1973 = vmatprep.subr.mxu0 0.0
      %1974 = vmatpush1.msra.mxu0 0.0
      %1975 = vmatprep.mubr.f32.mxu0 0.0
      %1976 = vmatmul.mubr.f32.gmra.mrb[0].mxu0 %v1813
      %v1977 = vpop.f32.mrb[0].mxu0
      %v1978 = vadd.f32 0.0, %v1977
      %v1979 = vpop.f32.mrb[0].mxu0
      %1980 = vmatprep.mubr.f32.mxu0 0.0
      %1981 = vmatmul.mubr.f32.gmra.mrb[0].mxu0 %v1816
      %v1982 = vpop.f32.mrb[0].mxu0
      %v1983 = vadd.f32 0.0, %v1982
      %v1984 = vpop.f32.mrb[0].mxu0
      %1985 = vmatprep.mubr.f32.mxu0 0.0
      %1986 = vmatmul.mubr.f32.gmra.mrb[0].mxu0 %v1819
      %v1987 = vpop.f32.mrb[0].mxu0
      %v1988 = vadd.f32 0.0, %v1987
      %v1989 = vpop.f32.mrb[0].mxu0
      %1990 = vmatprep.mubr.f32.mxu0 0.0
      %1991 = vmatmul.mubr.f32.gmra.mrb[0].mxu0 %v1822
      %v1992 = vpop.f32.mrb[0].mxu0
      %v1993 = vadd.f32 0.0, %v1992
      %v1994 = vpop.f32.mrb[0].mxu0
      %1995 = vmatprep.mubr.f32.mxu0 0.0
      %1996 = vmatmul.mubr.f32.gmra.mrb[0].mxu0 %v1825
      %v1997 = vpop.f32.mrb[0].mxu0
      %v1998 = vadd.f32 0.0, %v1997
      %v1999 = vpop.f32.mrb[0].mxu0
      %2000 = vmatprep.mubr.f32.mxu0 0.0
      %2001 = vmatmul.mubr.f32.gmra.mrb[0].mxu0 %v1828
      %v2002 = vpop.f32.mrb[0].mxu0
      %v2003 = vadd.f32 0.0, %v2002
      %v2004 = vpop.f32.mrb[0].mxu0
      %2005 = vmatprep.mubr.f32.mxu0 0.0
      %2006 = vmatmul.mubr.f32.gmra.mrb[0].mxu0 %v1831
      %v2007 = vpop.f32.mrb[0].mxu0
      %v2008 = vadd.f32 0.0, %v2007
      %v2009 = vpop.f32.mrb[0].mxu0
      %2010 = vmatprep.mubr.f32.mxu0 0.0
      %2011 = vmatmul.mubr.f32.gmra.mrb[0].mxu0 %v1834
      %v2012 = vpop.f32.mrb[0].mxu0
      %v2013 = vadd.f32 0.0, %v2012
      %v2014 = vpop.f32.mrb[0].mxu0
      %2015 = vmatprep.mubr.f32.mxu0 0.0
      %2016 = vmatmul.mubr.f32.gmra.mrb[0].mxu0 %v1837
      %v2017 = vpop.f32.mrb[0].mxu0
      %v2018 = vadd.f32 0.0, %v2017
      %v2019 = vpop.f32.mrb[0].mxu0
      %2020 = vmatprep.mubr.f32.mxu0 0.0
      %2021 = vmatmul.mubr.f32.gmra.mrb[0].mxu0 %v1840
      %v2022 = vpop.f32.mrb[0].mxu0
      %v2023 = vadd.f32 0.0, %v2022
      %v2024 = vpop.f32.mrb[0].mxu0
      %2025 = vmatprep.mubr.f32.mxu0 0.0
      %2026 = vmatmul.mubr.f32.gmra.mrb[0].mxu0 %v1843
      %v2027 = vpop.f32.mrb[0].mxu0
      %v2028 = vadd.f32 0.0, %v2027
      %v2029 = vpop.f32.mrb[0].mxu0
      %2030 = vmatprep.mubr.f32.mxu0 0.0
      %2031 = vmatmul.mubr.f32.gmra.mrb[0].mxu0 %v1846
      %v2032 = vpop.f32.mrb[0].mxu0
      %v2033 = vadd.f32 0.0, %v2032
      %v2034 = vpop.f32.mrb[0].mxu0
      %2035 = vmatprep.mubr.f32.mxu0 0.0
      %2036 = vmatmul.mubr.f32.gmra.mrb[0].mxu0 %v1849
      %v2037 = vpop.f32.mrb[0].mxu0
      %v2038 = vadd.f32 0.0, %v2037
      %v2039 = vpop.f32.mrb[0].mxu0
      %2040 = vmatprep.mubr.f32.mxu0 0.0
      %2041 = vmatmul.mubr.f32.gmra.mrb[0].mxu0 %v1852
      %v2042 = vpop.f32.mrb[0].mxu0
      %v2043 = vadd.f32 0.0, %v2042
      %v2044 = vpop.f32.mrb[0].mxu0
      %2045 = vmatprep.mubr.f32.mxu0 0.0
      %2046 = vmatmul.mubr.f32.gmra.mrb[0].mxu0 %v1855
      %v2047 = vpop.f32.mrb[0].mxu0
      %v2048 = vadd.f32 0.0, %v2047
      %v2049 = vpop.f32.mrb[0].mxu0
      %2050 = vmatprep.mubr.f32.mxu0 0.0
      %2051 = vmatmul.mubr.f32.gmra.mrb[0].mxu0 %v1858
      %v2052 = vpop.f32.mrb[0].mxu0
      %v2053 = vadd.f32 0.0, %v2052
      %v2054 = vpop.f32.mrb[0].mxu0
      %2055 = vmatprep.mubr.f32.mxu0 0.0
      %2056 = vmatmul.mubr.f32.gmra.mrb[0].mxu0 %v1861
      %v2057 = vpop.f32.mrb[0].mxu0
      %v2058 = vadd.f32 0.0, %v2057
      %v2059 = vpop.f32.mrb[0].mxu0
      %2060 = vmatprep.mubr.f32.mxu0 0.0
      %2061 = vmatmul.mubr.f32.gmra.mrb[0].mxu0 %v1864
      %v2062 = vpop.f32.mrb[0].mxu0
      %v2063 = vadd.f32 0.0, %v2062
      %v2064 = vpop.f32.mrb[0].mxu0
      %2065 = vmatprep.mubr.f32.mxu0 0.0
      %2066 = vmatmul.mubr.f32.gmra.mrb[0].mxu0 %v1867
      %v2067 = vpop.f32.mrb[0].mxu0
      %v2068 = vadd.f32 0.0, %v2067
      %v2069 = vpop.f32.mrb[0].mxu0
      %2070 = vmatprep.mubr.f32.mxu0 0.0
      %2071 = vmatmul.mubr.f32.gmra.mrb[0].mxu0 %v1870
      %v2072 = vpop.f32.mrb[0].mxu0
      %v2073 = vadd.f32 0.0, %v2072
      %v2074 = vpop.f32.mrb[0].mxu0
      %2075 = vmatprep.mubr.f32.mxu0 0.0
      %2076 = vmatmul.mubr.f32.gmra.mrb[0].mxu0 %v1873
      %v2077 = vpop.f32.mrb[0].mxu0
      %v2078 = vadd.f32 0.0, %v2077
      %v2079 = vpop.f32.mrb[0].mxu0
      %2080 = vmatprep.mubr.f32.mxu0 0.0
      %2081 = vmatmul.mubr.f32.gmra.mrb[0].mxu0 %v1876
      %v2082 = vpop.f32.mrb[0].mxu0
      %v2083 = vadd.f32 0.0, %v2082
      %v2084 = vpop.f32.mrb[0].mxu0
      %2085 = vmatprep.mubr.f32.mxu0 0.0
      %2086 = vmatmul.mubr.f32.gmra.mrb[0].mxu0 %v1879
      %v2087 = vpop.f32.mrb[0].mxu0
      %v2088 = vadd.f32 0.0, %v2087
      %v2089 = vpop.f32.mrb[0].mxu0
      %2090 = vmatprep.mubr.f32.mxu0 0.0
      %2091 = vmatmul.mubr.f32.gmra.mrb[0].mxu0 %v1882
      %v2092 = vpop.f32.mrb[0].mxu0
      %v2093 = vadd.f32 0.0, %v2092
      %v2094 = vpop.f32.mrb[0].mxu0
      %2095 = vmatprep.mubr.f32.mxu0 0.0
      %2096 = vmatmul.mubr.f32.gmra.mrb[0].mxu0 %v1885
      %v2097 = vpop.f32.mrb[0].mxu0
      %v2098 = vadd.f32 0.0, %v2097
      %v2099 = vpop.f32.mrb[0].mxu0
      %2100 = vmatprep.mubr.f32.mxu0 0.0
      %2101 = vmatmul.mubr.f32.gmra.mrb[0].mxu0 %v1888
      %v2102 = vpop.f32.mrb[0].mxu0
      %v2103 = vadd.f32 0.0, %v2102
      %v2104 = vpop.f32.mrb[0].mxu0
      %2105 = vmatprep.mubr.f32.mxu0 0.0
      %2106 = vmatmul.mubr.f32.gmra.mrb[0].mxu0 %v1891
      %v2107 = vpop.f32.mrb[0].mxu0
      %v2108 = vadd.f32 0.0, %v2107
      %v2109 = vpop.f32.mrb[0].mxu0
      %2110 = vmatprep.mubr.f32.mxu0 0.0
      %2111 = vmatmul.mubr.f32.gmra.mrb[0].mxu0 %v1894
      %v2112 = vpop.f32.mrb[0].mxu0
      %v2113 = vadd.f32 0.0, %v2112
      %v2114 = vpop.f32.mrb[0].mxu0
      %2115 = vmatprep.mubr.f32.mxu0 0.0
      %2116 = vmatmul.mubr.f32.gmra.mrb[0].mxu0 %v1897
      %v2117 = vpop.f32.mrb[0].mxu0
      %v2118 = vadd.f32 0.0, %v2117
      %v2119 = vpop.f32.mrb[0].mxu0
      %2120 = vmatprep.mubr.f32.mxu0 0.0
      %2121 = vmatmul.mubr.f32.gmra.mrb[0].mxu0 %v1900
      %v2122 = vpop.f32.mrb[0].mxu0
      %v2123 = vadd.f32 0.0, %v2122
      %v2124 = vpop.f32.mrb[0].mxu0
      %2125 = vmatprep.mubr.f32.mxu0 0.0
      %2126 = vmatmul.mubr.f32.gmra.mrb[0].mxu0 %v1903
      %v2127 = vpop.f32.mrb[0].mxu0
      %v2128 = vadd.f32 0.0, %v2127
      %v2129 = vpop.f32.mrb[0].mxu0
      %2130 = vmatprep.mubr.f32.mxu0 0.0
      %2131 = vmatmul.mubr.f32.gmra.mrb[0].mxu0 %v1906
      %v2132 = vpop.f32.mrb[0].mxu0
      %v2133 = vadd.f32 0.0, %v2132
      %v2134 = vpop.f32.mrb[0].mxu0
      %2135 = vdwg.mxu0
      %v2136 = vadd.f32 %v1746, %v1978
      %v2137 = vadd.f32 %v1747, %v1983
      %v2138 = vadd.f32 %v1748, %v1988
      %v2139 = vadd.f32 %v1749, %v1993
      %v2140 = vadd.f32 %v1750, %v1998
      %v2141 = vadd.f32 %v1751, %v2003
      %v2142 = vadd.f32 %v1752, %v2008
      %v2143 = vadd.f32 %v1753, %v2013
      %v2144 = vadd.f32 %v1754, %v2018
      %v2145 = vadd.f32 %v1755, %v2023
      %v2146 = vadd.f32 %v1756, %v2028
      %v2147 = vadd.f32 %v1757, %v2033
      %v2148 = vadd.f32 %v1758, %v2038
      %v2149 = vadd.f32 %v1759, %v2043
      %v2150 = vadd.f32 %v1760, %v2048
      %v2151 = vadd.f32 %v1761, %v2053
      %v2152 = vadd.f32 %v1762, %v2058
      %v2153 = vadd.f32 %v1763, %v2063
      %v2154 = vadd.f32 %v1764, %v2068
      %v2155 = vadd.f32 %v1765, %v2073
      %v2156 = vadd.f32 %v1766, %v2078
      %v2157 = vadd.f32 %v1767, %v2083
      %v2158 = vadd.f32 %v1768, %v2088
      %v2159 = vadd.f32 %v1769, %v2093
      %v2160 = vadd.f32 %v1770, %v2098
      %v2161 = vadd.f32 %v1771, %v2103
      %v2162 = vadd.f32 %v1772, %v2108
      %v2163 = vadd.f32 %v1773, %v2113
      %v2164 = vadd.f32 %v1774, %v2118
      %v2165 = vadd.f32 %v1775, %v2123
      %v2166 = vadd.f32 %v1776, %v2128
      %v2167 = vadd.f32 %v1777, %v2133
      %v2168 = vld [vmem:[%s249 + $0x2] sm:$0xff]
      %v2169 = vld [vmem:[%s249 + $0xa] sm:$0xff]
      %v2170 = vld [vmem:[%s249 + $0x1a] sm:$0xff]
      %v2171 = vld [vmem:[%s249 + $0x22] sm:$0xff]
      %v2172 = vld [vmem:[%s249 + $0x32] sm:$0xff]
      %v2173 = vld [vmem:[%s249 + $0x3a] sm:$0xff]
      %v2174 = vld [vmem:[%s249 + $0x4a] sm:$0xff]
      %v2175 = vld [vmem:[%s249 + $0x52] sm:$0xff]
      %v2176 = vld [vmem:[%s249 + $0x62] sm:$0xff]
      %v2177 = vld [vmem:[%s249 + $0x6a] sm:$0xff]
      %v2178 = vld [vmem:[%s249 + $0x7a] sm:$0xff]
      %v2179 = vld [vmem:[%s249 + $0x82] sm:$0xff]
      %v2180 = vld [vmem:[%s249 + $0x92] sm:$0xff]
      %v2181 = vld [vmem:[%s249 + $0x9a] sm:$0xff]
      %v2182 = vld [vmem:[%s249 + $0xaa] sm:$0xff]
      %v2183 = vld [vmem:[%s249 + $0xb2] sm:$0xff]
      %v2184 = vld [vmem:[%s249 + $0xc2] sm:$0xff]
      %v2185 = vld [vmem:[%s249 + $0xca] sm:$0xff]
      %v2186 = vld [vmem:[%s249 + $0xda] sm:$0xff]
      %v2187 = vld [vmem:[%s249 + $0xe2] sm:$0xff]
      %v2188 = vld [vmem:[%s249 + $0xf2] sm:$0xff]
      %v2189 = vld [vmem:[%s249 + $0xfa] sm:$0xff]
      %v2190 = vld [vmem:[%s249 + $0x10a] sm:$0xff]
      %v2191 = vld [vmem:[%s249 + $0x112] sm:$0xff]
      %v2192 = vld [vmem:[%s249 + $0x122] sm:$0xff]
      %v2193 = vld [vmem:[%s249 + $0x12a] sm:$0xff]
      %v2194 = vld [vmem:[%s249 + $0x13a] sm:$0xff]
      %v2195 = vld [vmem:[%s249 + $0x142] sm:$0xff]
      %v2196 = vld [vmem:[%s249 + $0x152] sm:$0xff]
      %v2197 = vld [vmem:[%s249 + $0x15a] sm:$0xff]
      %v2198 = vld [vmem:[%s249 + $0x16a] sm:$0xff]
      %v2199 = vld [vmem:[%s249 + $0x172] sm:$0xff]
      %s2200 = scalar_lea.vmem %s1, 20
      %v2201 = vld [vmem:[%s2200] sm:$0xf]
      %v2203 = vsel %vm171, %v2168, 0
      %v2206 = vsel %vm171, %v2169, 0
      %v2209 = vsel %vm171, %v2170, 0
      %v2212 = vsel %vm171, %v2171, 0
      %v2215 = vsel %vm171, %v2172, 0
      %v2218 = vsel %vm171, %v2173, 0
      %v2221 = vsel %vm171, %v2174, 0
      %v2224 = vsel %vm171, %v2175, 0
      %v2227 = vsel %vm171, %v2176, 0
      %v2230 = vsel %vm171, %v2177, 0
      %v2233 = vsel %vm171, %v2178, 0
      %v2236 = vsel %vm171, %v2179, 0
      %v2239 = vsel %vm171, %v2180, 0
      %v2242 = vsel %vm171, %v2181, 0
      %v2245 = vsel %vm171, %v2182, 0
      %v2248 = vsel %vm171, %v2183, 0
      %v2251 = vsel %vm171, %v2184, 0
      %v2254 = vsel %vm171, %v2185, 0
      %v2257 = vsel %vm171, %v2186, 0
      %v2260 = vsel %vm171, %v2187, 0
      %v2263 = vsel %vm171, %v2188, 0
      %v2266 = vsel %vm171, %v2189, 0
      %v2269 = vsel %vm171, %v2190, 0
      %v2272 = vsel %vm171, %v2191, 0
      %v2275 = vsel %vm171, %v2192, 0
      %v2278 = vsel %vm171, %v2193, 0
      %v2281 = vsel %vm171, %v2194, 0
      %v2284 = vsel %vm171, %v2195, 0
      %v2287 = vsel %vm171, %v2196, 0
      %v2290 = vsel %vm171, %v2197, 0
      %v2293 = vsel %vm171, %v2198, 0
      %v2296 = vsel %vm171, %v2199, 0
      %v2299 = vsel %vm445, %v2201, 0
      %2301 = vmatprep.subr.mxu0 0.0
      %2302 = vmatpush1.msra.mxu0 %v2299
      %2303 = vmatprep.subr.mxu0 0.0
      %2304 = vmatpush1.msra.mxu0 0.0
      %2305 = vmatprep.subr.mxu0 0.0
      %2306 = vmatpush1.msra.mxu0 0.0
      %2307 = vmatprep.subr.mxu0 0.0
      %2308 = vmatpush1.msra.mxu0 0.0
      %2309 = vmatprep.subr.mxu0 0.0
      %2310 = vmatpush1.msra.mxu0 0.0
      %2311 = vmatprep.subr.mxu0 0.0
      %2312 = vmatpush1.msra.mxu0 0.0
      %2313 = vmatprep.subr.mxu0 0.0
      %2314 = vmatpush1.msra.mxu0 0.0
      %2315 = vmatprep.subr.mxu0 0.0
      %2316 = vmatpush1.msra.mxu0 0.0
      %2317 = vmatprep.subr.mxu0 0.0
      %2318 = vmatpush1.msra.mxu0 0.0
      %2319 = vmatprep.subr.mxu0 0.0
      %2320 = vmatpush1.msra.mxu0 0.0
      %2321 = vmatprep.subr.mxu0 0.0
      %2322 = vmatpush1.msra.mxu0 0.0
      %2323 = vmatprep.subr.mxu0 0.0
      %2324 = vmatpush1.msra.mxu0 0.0
      %2325 = vmatprep.subr.mxu0 0.0
      %2326 = vmatpush1.msra.mxu0 0.0
      %2327 = vmatprep.subr.mxu0 0.0
      %2328 = vmatpush1.msra.mxu0 0.0
      %2329 = vmatprep.subr.mxu0 0.0
      %2330 = vmatpush1.msra.mxu0 0.0
      %2331 = vmatprep.subr.mxu0 0.0
      %2332 = vmatpush1.msra.mxu0 0.0
      %2333 = vmatprep.subr.mxu0 0.0
      %2334 = vmatpush1.msra.mxu0 0.0
      %2335 = vmatprep.subr.mxu0 0.0
      %2336 = vmatpush1.msra.mxu0 0.0
      %2337 = vmatprep.subr.mxu0 0.0
      %2338 = vmatpush1.msra.mxu0 0.0
      %2339 = vmatprep.subr.mxu0 0.0
      %2340 = vmatpush1.msra.mxu0 0.0
      %2341 = vmatprep.subr.mxu0 0.0
      %2342 = vmatpush1.msra.mxu0 0.0
      %2343 = vmatprep.subr.mxu0 0.0
      %2344 = vmatpush1.msra.mxu0 0.0
      %2345 = vmatprep.subr.mxu0 0.0
      %2346 = vmatpush1.msra.mxu0 0.0
      %2347 = vmatprep.subr.mxu0 0.0
      %2348 = vmatpush1.msra.mxu0 0.0
      %2349 = vmatprep.subr.mxu0 0.0
      %2350 = vmatpush1.msra.mxu0 0.0
      %2351 = vmatprep.subr.mxu0 0.0
      %2352 = vmatpush1.msra.mxu0 0.0
      %2353 = vmatprep.subr.mxu0 0.0
      %2354 = vmatpush1.msra.mxu0 0.0
      %2355 = vmatprep.subr.mxu0 0.0
      %2356 = vmatpush1.msra.mxu0 0.0
      %2357 = vmatprep.subr.mxu0 0.0
      %2358 = vmatpush1.msra.mxu0 0.0
      %2359 = vmatprep.subr.mxu0 0.0
      %2360 = vmatpush1.msra.mxu0 0.0
      %2361 = vmatprep.subr.mxu0 0.0
      %2362 = vmatpush1.msra.mxu0 0.0
      %2363 = vmatprep.subr.mxu0 0.0
      %2364 = vmatpush1.msra.mxu0 0.0
      %2365 = vmatprep.mubr.f32.mxu0 0.0
      %2366 = vmatmul.mubr.f32.gmra.mrb[0].mxu0 %v2203
      %v2367 = vpop.f32.mrb[0].mxu0
      %v2368 = vadd.f32 0.0, %v2367
      %v2369 = vpop.f32.mrb[0].mxu0
      %2370 = vmatprep.mubr.f32.mxu0 0.0
      %2371 = vmatmul.mubr.f32.gmra.mrb[0].mxu0 %v2206
      %v2372 = vpop.f32.mrb[0].mxu0
      %v2373 = vadd.f32 0.0, %v2372
      %v2374 = vpop.f32.mrb[0].mxu0
      %2375 = vmatprep.mubr.f32.mxu0 0.0
      %2376 = vmatmul.mubr.f32.gmra.mrb[0].mxu0 %v2209
      %v2377 = vpop.f32.mrb[0].mxu0
      %v2378 = vadd.f32 0.0, %v2377
      %v2379 = vpop.f32.mrb[0].mxu0
      %2380 = vmatprep.mubr.f32.mxu0 0.0
      %2381 = vmatmul.mubr.f32.gmra.mrb[0].mxu0 %v2212
      %v2382 = vpop.f32.mrb[0].mxu0
      %v2383 = vadd.f32 0.0, %v2382
      %v2384 = vpop.f32.mrb[0].mxu0
      %2385 = vmatprep.mubr.f32.mxu0 0.0
      %2386 = vmatmul.mubr.f32.gmra.mrb[0].mxu0 %v2215
      %v2387 = vpop.f32.mrb[0].mxu0
      %v2388 = vadd.f32 0.0, %v2387
      %v2389 = vpop.f32.mrb[0].mxu0
      %2390 = vmatprep.mubr.f32.mxu0 0.0
      %2391 = vmatmul.mubr.f32.gmra.mrb[0].mxu0 %v2218
      %v2392 = vpop.f32.mrb[0].mxu0
      %v2393 = vadd.f32 0.0, %v2392
      %v2394 = vpop.f32.mrb[0].mxu0
      %2395 = vmatprep.mubr.f32.mxu0 0.0
      %2396 = vmatmul.mubr.f32.gmra.mrb[0].mxu0 %v2221
      %v2397 = vpop.f32.mrb[0].mxu0
      %v2398 = vadd.f32 0.0, %v2397
      %v2399 = vpop.f32.mrb[0].mxu0
      %2400 = vmatprep.mubr.f32.mxu0 0.0
      %2401 = vmatmul.mubr.f32.gmra.mrb[0].mxu0 %v2224
      %v2402 = vpop.f32.mrb[0].mxu0
      %v2403 = vadd.f32 0.0, %v2402
      %v2404 = vpop.f32.mrb[0].mxu0
      %2405 = vmatprep.mubr.f32.mxu0 0.0
      %2406 = vmatmul.mubr.f32.gmra.mrb[0].mxu0 %v2227
      %v2407 = vpop.f32.mrb[0].mxu0
      %v2408 = vadd.f32 0.0, %v2407
      %v2409 = vpop.f32.mrb[0].mxu0
      %2410 = vmatprep.mubr.f32.mxu0 0.0
      %2411 = vmatmul.mubr.f32.gmra.mrb[0].mxu0 %v2230
      %v2412 = vpop.f32.mrb[0].mxu0
      %v2413 = vadd.f32 0.0, %v2412
      %v2414 = vpop.f32.mrb[0].mxu0
      %2415 = vmatprep.mubr.f32.mxu0 0.0
      %2416 = vmatmul.mubr.f32.gmra.mrb[0].mxu0 %v2233
      %v2417 = vpop.f32.mrb[0].mxu0
      %v2418 = vadd.f32 0.0, %v2417
      %v2419 = vpop.f32.mrb[0].mxu0
      %2420 = vmatprep.mubr.f32.mxu0 0.0
      %2421 = vmatmul.mubr.f32.gmra.mrb[0].mxu0 %v2236
      %v2422 = vpop.f32.mrb[0].mxu0
      %v2423 = vadd.f32 0.0, %v2422
      %v2424 = vpop.f32.mrb[0].mxu0
      %2425 = vmatprep.mubr.f32.mxu0 0.0
      %2426 = vmatmul.mubr.f32.gmra.mrb[0].mxu0 %v2239
      %v2427 = vpop.f32.mrb[0].mxu0
      %v2428 = vadd.f32 0.0, %v2427
      %v2429 = vpop.f32.mrb[0].mxu0
      %2430 = vmatprep.mubr.f32.mxu0 0.0
      %2431 = vmatmul.mubr.f32.gmra.mrb[0].mxu0 %v2242
      %v2432 = vpop.f32.mrb[0].mxu0
      %v2433 = vadd.f32 0.0, %v2432
      %v2434 = vpop.f32.mrb[0].mxu0
      %2435 = vmatprep.mubr.f32.mxu0 0.0
      %2436 = vmatmul.mubr.f32.gmra.mrb[0].mxu0 %v2245
      %v2437 = vpop.f32.mrb[0].mxu0
      %v2438 = vadd.f32 0.0, %v2437
      %v2439 = vpop.f32.mrb[0].mxu0
      %2440 = vmatprep.mubr.f32.mxu0 0.0
      %2441 = vmatmul.mubr.f32.gmra.mrb[0].mxu0 %v2248
      %v2442 = vpop.f32.mrb[0].mxu0
      %v2443 = vadd.f32 0.0, %v2442
      %v2444 = vpop.f32.mrb[0].mxu0
      %2445 = vmatprep.mubr.f32.mxu0 0.0
      %2446 = vmatmul.mubr.f32.gmra.mrb[0].mxu0 %v2251
      %v2447 = vpop.f32.mrb[0].mxu0
      %v2448 = vadd.f32 0.0, %v2447
      %v2449 = vpop.f32.mrb[0].mxu0
      %2450 = vmatprep.mubr.f32.mxu0 0.0
      %2451 = vmatmul.mubr.f32.gmra.mrb[0].mxu0 %v2254
      %v2452 = vpop.f32.mrb[0].mxu0
      %v2453 = vadd.f32 0.0, %v2452
      %v2454 = vpop.f32.mrb[0].mxu0
      %2455 = vmatprep.mubr.f32.mxu0 0.0
      %2456 = vmatmul.mubr.f32.gmra.mrb[0].mxu0 %v2257
      %v2457 = vpop.f32.mrb[0].mxu0
      %v2458 = vadd.f32 0.0, %v2457
      %v2459 = vpop.f32.mrb[0].mxu0
      %2460 = vmatprep.mubr.f32.mxu0 0.0
      %2461 = vmatmul.mubr.f32.gmra.mrb[0].mxu0 %v2260
      %v2462 = vpop.f32.mrb[0].mxu0
      %v2463 = vadd.f32 0.0, %v2462
      %v2464 = vpop.f32.mrb[0].mxu0
      %2465 = vmatprep.mubr.f32.mxu0 0.0
      %2466 = vmatmul.mubr.f32.gmra.mrb[0].mxu0 %v2263
      %v2467 = vpop.f32.mrb[0].mxu0
      %v2468 = vadd.f32 0.0, %v2467
      %v2469 = vpop.f32.mrb[0].mxu0
      %2470 = vmatprep.mubr.f32.mxu0 0.0
      %2471 = vmatmul.mubr.f32.gmra.mrb[0].mxu0 %v2266
      %v2472 = vpop.f32.mrb[0].mxu0
      %v2473 = vadd.f32 0.0, %v2472
      %v2474 = vpop.f32.mrb[0].mxu0
      %2475 = vmatprep.mubr.f32.mxu0 0.0
      %2476 = vmatmul.mubr.f32.gmra.mrb[0].mxu0 %v2269
      %v2477 = vpop.f32.mrb[0].mxu0
      %v2478 = vadd.f32 0.0, %v2477
      %v2479 = vpop.f32.mrb[0].mxu0
      %2480 = vmatprep.mubr.f32.mxu0 0.0
      %2481 = vmatmul.mubr.f32.gmra.mrb[0].mxu0 %v2272
      %v2482 = vpop.f32.mrb[0].mxu0
      %v2483 = vadd.f32 0.0, %v2482
      %v2484 = vpop.f32.mrb[0].mxu0
      %2485 = vmatprep.mubr.f32.mxu0 0.0
      %2486 = vmatmul.mubr.f32.gmra.mrb[0].mxu0 %v2275
      %v2487 = vpop.f32.mrb[0].mxu0
      %v2488 = vadd.f32 0.0, %v2487
      %v2489 = vpop.f32.mrb[0].mxu0
      %2490 = vmatprep.mubr.f32.mxu0 0.0
      %2491 = vmatmul.mubr.f32.gmra.mrb[0].mxu0 %v2278
      %v2492 = vpop.f32.mrb[0].mxu0
      %v2493 = vadd.f32 0.0, %v2492
      %v2494 = vpop.f32.mrb[0].mxu0
      %2495 = vmatprep.mubr.f32.mxu0 0.0
      %2496 = vmatmul.mubr.f32.gmra.mrb[0].mxu0 %v2281
      %v2497 = vpop.f32.mrb[0].mxu0
      %v2498 = vadd.f32 0.0, %v2497
      %v2499 = vpop.f32.mrb[0].mxu0
      %2500 = vmatprep.mubr.f32.mxu0 0.0
      %2501 = vmatmul.mubr.f32.gmra.mrb[0].mxu0 %v2284
      %v2502 = vpop.f32.mrb[0].mxu0
      %v2503 = vadd.f32 0.0, %v2502
      %v2504 = vpop.f32.mrb[0].mxu0
      %2505 = vmatprep.mubr.f32.mxu0 0.0
      %2506 = vmatmul.mubr.f32.gmra.mrb[0].mxu0 %v2287
      %v2507 = vpop.f32.mrb[0].mxu0
      %v2508 = vadd.f32 0.0, %v2507
      %v2509 = vpop.f32.mrb[0].mxu0
      %2510 = vmatprep.mubr.f32.mxu0 0.0
      %2511 = vmatmul.mubr.f32.gmra.mrb[0].mxu0 %v2290
      %v2512 = vpop.f32.mrb[0].mxu0
      %v2513 = vadd.f32 0.0, %v2512
      %v2514 = vpop.f32.mrb[0].mxu0
      %2515 = vmatprep.mubr.f32.mxu0 0.0
      %2516 = vmatmul.mubr.f32.gmra.mrb[0].mxu0 %v2293
      %v2517 = vpop.f32.mrb[0].mxu0
      %v2518 = vadd.f32 0.0, %v2517
      %v2519 = vpop.f32.mrb[0].mxu0
      %2520 = vmatprep.mubr.f32.mxu0 0.0
      %2521 = vmatmul.mubr.f32.gmra.mrb[0].mxu0 %v2296
      %v2522 = vpop.f32.mrb[0].mxu0
      %v2523 = vadd.f32 0.0, %v2522
      %v2524 = vpop.f32.mrb[0].mxu0
      %2525 = vdwg.mxu0
      %v2526 = vadd.f32 %v2136, %v2368
      %v2527 = vadd.f32 %v2137, %v2373
      %v2528 = vadd.f32 %v2138, %v2378
      %v2529 = vadd.f32 %v2139, %v2383
      %v2530 = vadd.f32 %v2140, %v2388
      %v2531 = vadd.f32 %v2141, %v2393
      %v2532 = vadd.f32 %v2142, %v2398
      %v2533 = vadd.f32 %v2143, %v2403
      %v2534 = vadd.f32 %v2144, %v2408
      %v2535 = vadd.f32 %v2145, %v2413
      %v2536 = vadd.f32 %v2146, %v2418
      %v2537 = vadd.f32 %v2147, %v2423
      %v2538 = vadd.f32 %v2148, %v2428
      %v2539 = vadd.f32 %v2149, %v2433
      %v2540 = vadd.f32 %v2150, %v2438
      %v2541 = vadd.f32 %v2151, %v2443
      %v2542 = vadd.f32 %v2152, %v2448
      %v2543 = vadd.f32 %v2153, %v2453
      %v2544 = vadd.f32 %v2154, %v2458
      %v2545 = vadd.f32 %v2155, %v2463
      %v2546 = vadd.f32 %v2156, %v2468
      %v2547 = vadd.f32 %v2157, %v2473
      %v2548 = vadd.f32 %v2158, %v2478
      %v2549 = vadd.f32 %v2159, %v2483
      %v2550 = vadd.f32 %v2160, %v2488
      %v2551 = vadd.f32 %v2161, %v2493
      %v2552 = vadd.f32 %v2162, %v2498
      %v2553 = vadd.f32 %v2163, %v2503
      %v2554 = vadd.f32 %v2164, %v2508
      %v2555 = vadd.f32 %v2165, %v2513
      %v2556 = vadd.f32 %v2166, %v2518
      %v2557 = vadd.f32 %v2167, %v2523
      %s2558 = scalar_lea.vmem [#allocation2], 48
      %v2559 = vld [vmem:[%s2558] sm:$0xff]
      %v2560 = vld [vmem:[%s2558 + $0x8] sm:$0xff]
      %v2561 = vld [vmem:[%s2558 + $0x18] sm:$0xff]
      %v2562 = vld [vmem:[%s2558 + $0x20] sm:$0xff]
      %v2563 = vld [vmem:[%s2558 + $0x30] sm:$0xff]
      %v2564 = vld [vmem:[%s2558 + $0x38] sm:$0xff]
      %v2565 = vld [vmem:[%s2558 + $0x48] sm:$0xff]
      %v2566 = vld [vmem:[%s2558 + $0x50] sm:$0xff]
      %v2567 = vld [vmem:[%s2558 + $0x60] sm:$0xff]
      %v2568 = vld [vmem:[%s2558 + $0x68] sm:$0xff]
      %v2569 = vld [vmem:[%s2558 + $0x78] sm:$0xff]
      %v2570 = vld [vmem:[%s2558 + $0x80] sm:$0xff]
      %v2571 = vld [vmem:[%s2558 + $0x90] sm:$0xff]
      %v2572 = vld [vmem:[%s2558 + $0x98] sm:$0xff]
      %v2573 = vld [vmem:[%s2558 + $0xa8] sm:$0xff]
      %v2574 = vld [vmem:[%s2558 + $0xb0] sm:$0xff]
      %v2575 = vld [vmem:[%s2558 + $0xc0] sm:$0xff]
      %v2576 = vld [vmem:[%s2558 + $0xc8] sm:$0xff]
      %v2577 = vld [vmem:[%s2558 + $0xd8] sm:$0xff]
      %v2578 = vld [vmem:[%s2558 + $0xe0] sm:$0xff]
      %v2579 = vld [vmem:[%s2558 + $0xf0] sm:$0xff]
      %v2580 = vld [vmem:[%s2558 + $0xf8] sm:$0xff]
      %v2581 = vld [vmem:[%s2558 + $0x108] sm:$0xff]
      %v2582 = vld [vmem:[%s2558 + $0x110] sm:$0xff]
      %v2583 = vld [vmem:[%s2558 + $0x120] sm:$0xff]
      %v2584 = vld [vmem:[%s2558 + $0x128] sm:$0xff]
      %v2585 = vld [vmem:[%s2558 + $0x138] sm:$0xff]
      %v2586 = vld [vmem:[%s2558 + $0x140] sm:$0xff]
      %v2587 = vld [vmem:[%s2558 + $0x150] sm:$0xff]
      %v2588 = vld [vmem:[%s2558 + $0x158] sm:$0xff]
      %v2589 = vld [vmem:[%s2558 + $0x168] sm:$0xff]
      %v2590 = vld [vmem:[%s2558 + $0x170] sm:$0xff]
      %s2591 = scalar_lea.vmem %s1, 24
      %v2592 = vld [vmem:[%s2591] sm:$0xf]
      %v2594 = vsel %vm171, %v2559, 0
      %v2597 = vsel %vm171, %v2560, 0
      %v2600 = vsel %vm171, %v2561, 0
      %v2603 = vsel %vm171, %v2562, 0
      %v2606 = vsel %vm171, %v2563, 0
      %v2609 = vsel %vm171, %v2564, 0
      %v2612 = vsel %vm171, %v2565, 0
      %v2615 = vsel %vm171, %v2566, 0
      %v2618 = vsel %vm171, %v2567, 0
      %v2621 = vsel %vm171, %v2568, 0
      %v2624 = vsel %vm171, %v2569, 0
      %v2627 = vsel %vm171, %v2570, 0
      %v2630 = vsel %vm171, %v2571, 0
      %v2633 = vsel %vm171, %v2572, 0
      %v2636 = vsel %vm171, %v2573, 0
      %v2639 = vsel %vm171, %v2574, 0
      %v2642 = vsel %vm171, %v2575, 0
      %v2645 = vsel %vm171, %v2576, 0
      %v2648 = vsel %vm171, %v2577, 0
      %v2651 = vsel %vm171, %v2578, 0
      %v2654 = vsel %vm171, %v2579, 0
      %v2657 = vsel %vm171, %v2580, 0
      %v2660 = vsel %vm171, %v2581, 0
      %v2663 = vsel %vm171, %v2582, 0
      %v2666 = vsel %vm171, %v2583, 0
      %v2669 = vsel %vm171, %v2584, 0
      %v2672 = vsel %vm171, %v2585, 0
      %v2675 = vsel %vm171, %v2586, 0
      %v2678 = vsel %vm171, %v2587, 0
      %v2681 = vsel %vm171, %v2588, 0
      %v2684 = vsel %vm171, %v2589, 0
      %v2687 = vsel %vm171, %v2590, 0
      %v2690 = vsel %vm445, %v2592, 0
      %2692 = vmatprep.subr.mxu0 0.0
      %2693 = vmatpush1.msra.mxu0 %v2690
      %2694 = vmatprep.subr.mxu0 0.0
      %2695 = vmatpush1.msra.mxu0 0.0
      %2696 = vmatprep.subr.mxu0 0.0
      %2697 = vmatpush1.msra.mxu0 0.0
      %2698 = vmatprep.subr.mxu0 0.0
      %2699 = vmatpush1.msra.mxu0 0.0
      %2700 = vmatprep.subr.mxu0 0.0
      %2701 = vmatpush1.msra.mxu0 0.0
      %2702 = vmatprep.subr.mxu0 0.0
      %2703 = vmatpush1.msra.mxu0 0.0
      %2704 = vmatprep.subr.mxu0 0.0
      %2705 = vmatpush1.msra.mxu0 0.0
      %2706 = vmatprep.subr.mxu0 0.0
      %2707 = vmatpush1.msra.mxu0 0.0
      %2708 = vmatprep.subr.mxu0 0.0
      %2709 = vmatpush1.msra.mxu0 0.0
      %2710 = vmatprep.subr.mxu0 0.0
      %2711 = vmatpush1.msra.mxu0 0.0
      %2712 = vmatprep.subr.mxu0 0.0
      %2713 = vmatpush1.msra.mxu0 0.0
      %2714 = vmatprep.subr.mxu0 0.0
      %2715 = vmatpush1.msra.mxu0 0.0
      %2716 = vmatprep.subr.mxu0 0.0
      %2717 = vmatpush1.msra.mxu0 0.0
      %2718 = vmatprep.subr.mxu0 0.0
      %2719 = vmatpush1.msra.mxu0 0.0
      %2720 = vmatprep.subr.mxu0 0.0
      %2721 = vmatpush1.msra.mxu0 0.0
      %2722 = vmatprep.subr.mxu0 0.0
      %2723 = vmatpush1.msra.mxu0 0.0
      %2724 = vmatprep.subr.mxu0 0.0
      %2725 = vmatpush1.msra.mxu0 0.0
      %2726 = vmatprep.subr.mxu0 0.0
      %2727 = vmatpush1.msra.mxu0 0.0
      %2728 = vmatprep.subr.mxu0 0.0
      %2729 = vmatpush1.msra.mxu0 0.0
      %2730 = vmatprep.subr.mxu0 0.0
      %2731 = vmatpush1.msra.mxu0 0.0
      %2732 = vmatprep.subr.mxu0 0.0
      %2733 = vmatpush1.msra.mxu0 0.0
      %2734 = vmatprep.subr.mxu0 0.0
      %2735 = vmatpush1.msra.mxu0 0.0
      %2736 = vmatprep.subr.mxu0 0.0
      %2737 = vmatpush1.msra.mxu0 0.0
      %2738 = vmatprep.subr.mxu0 0.0
      %2739 = vmatpush1.msra.mxu0 0.0
      %2740 = vmatprep.subr.mxu0 0.0
      %2741 = vmatpush1.msra.mxu0 0.0
      %2742 = vmatprep.subr.mxu0 0.0
      %2743 = vmatpush1.msra.mxu0 0.0
      %2744 = vmatprep.subr.mxu0 0.0
      %2745 = vmatpush1.msra.mxu0 0.0
      %2746 = vmatprep.subr.mxu0 0.0
      %2747 = vmatpush1.msra.mxu0 0.0
      %2748 = vmatprep.subr.mxu0 0.0
      %2749 = vmatpush1.msra.mxu0 0.0
      %2750 = vmatprep.subr.mxu0 0.0
      %2751 = vmatpush1.msra.mxu0 0.0
      %2752 = vmatprep.subr.mxu0 0.0
      %2753 = vmatpush1.msra.mxu0 0.0
      %2754 = vmatprep.subr.mxu0 0.0
      %2755 = vmatpush1.msra.mxu0 0.0
      %2756 = vmatprep.mubr.f32.mxu0 0.0
      %2757 = vmatmul.mubr.f32.gmra.mrb[0].mxu0 %v2594
      %v2758 = vpop.f32.mrb[0].mxu0
      %v2759 = vadd.f32 0.0, %v2758
      %v2760 = vpop.f32.mrb[0].mxu0
      %2761 = vmatprep.mubr.f32.mxu0 0.0
      %2762 = vmatmul.mubr.f32.gmra.mrb[0].mxu0 %v2597
      %v2763 = vpop.f32.mrb[0].mxu0
      %v2764 = vadd.f32 0.0, %v2763
      %v2765 = vpop.f32.mrb[0].mxu0
      %2766 = vmatprep.mubr.f32.mxu0 0.0
      %2767 = vmatmul.mubr.f32.gmra.mrb[0].mxu0 %v2600
      %v2768 = vpop.f32.mrb[0].mxu0
      %v2769 = vadd.f32 0.0, %v2768
      %v2770 = vpop.f32.mrb[0].mxu0
      %2771 = vmatprep.mubr.f32.mxu0 0.0
      %2772 = vmatmul.mubr.f32.gmra.mrb[0].mxu0 %v2603
      %v2773 = vpop.f32.mrb[0].mxu0
      %v2774 = vadd.f32 0.0, %v2773
      %v2775 = vpop.f32.mrb[0].mxu0
      %2776 = vmatprep.mubr.f32.mxu0 0.0
      %2777 = vmatmul.mubr.f32.gmra.mrb[0].mxu0 %v2606
      %v2778 = vpop.f32.mrb[0].mxu0
      %v2779 = vadd.f32 0.0, %v2778
      %v2780 = vpop.f32.mrb[0].mxu0
      %2781 = vmatprep.mubr.f32.mxu0 0.0
      %2782 = vmatmul.mubr.f32.gmra.mrb[0].mxu0 %v2609
      %v2783 = vpop.f32.mrb[0].mxu0
      %v2784 = vadd.f32 0.0, %v2783
      %v2785 = vpop.f32.mrb[0].mxu0
      %2786 = vmatprep.mubr.f32.mxu0 0.0
      %2787 = vmatmul.mubr.f32.gmra.mrb[0].mxu0 %v2612
      %v2788 = vpop.f32.mrb[0].mxu0
      %v2789 = vadd.f32 0.0, %v2788
      %v2790 = vpop.f32.mrb[0].mxu0
      %2791 = vmatprep.mubr.f32.mxu0 0.0
      %2792 = vmatmul.mubr.f32.gmra.mrb[0].mxu0 %v2615
      %v2793 = vpop.f32.mrb[0].mxu0
      %v2794 = vadd.f32 0.0, %v2793
      %v2795 = vpop.f32.mrb[0].mxu0
      %2796 = vmatprep.mubr.f32.mxu0 0.0
      %2797 = vmatmul.mubr.f32.gmra.mrb[0].mxu0 %v2618
      %v2798 = vpop.f32.mrb[0].mxu0
      %v2799 = vadd.f32 0.0, %v2798
      %v2800 = vpop.f32.mrb[0].mxu0
      %2801 = vmatprep.mubr.f32.mxu0 0.0
      %2802 = vmatmul.mubr.f32.gmra.mrb[0].mxu0 %v2621
      %v2803 = vpop.f32.mrb[0].mxu0
      %v2804 = vadd.f32 0.0, %v2803
      %v2805 = vpop.f32.mrb[0].mxu0
      %2806 = vmatprep.mubr.f32.mxu0 0.0
      %2807 = vmatmul.mubr.f32.gmra.mrb[0].mxu0 %v2624
      %v2808 = vpop.f32.mrb[0].mxu0
      %v2809 = vadd.f32 0.0, %v2808
      %v2810 = vpop.f32.mrb[0].mxu0
      %2811 = vmatprep.mubr.f32.mxu0 0.0
      %2812 = vmatmul.mubr.f32.gmra.mrb[0].mxu0 %v2627
      %v2813 = vpop.f32.mrb[0].mxu0
      %v2814 = vadd.f32 0.0, %v2813
      %v2815 = vpop.f32.mrb[0].mxu0
      %2816 = vmatprep.mubr.f32.mxu0 0.0
      %2817 = vmatmul.mubr.f32.gmra.mrb[0].mxu0 %v2630
      %v2818 = vpop.f32.mrb[0].mxu0
      %v2819 = vadd.f32 0.0, %v2818
      %v2820 = vpop.f32.mrb[0].mxu0
      %2821 = vmatprep.mubr.f32.mxu0 0.0
      %2822 = vmatmul.mubr.f32.gmra.mrb[0].mxu0 %v2633
      %v2823 = vpop.f32.mrb[0].mxu0
      %v2824 = vadd.f32 0.0, %v2823
      %v2825 = vpop.f32.mrb[0].mxu0
      %2826 = vmatprep.mubr.f32.mxu0 0.0
      %2827 = vmatmul.mubr.f32.gmra.mrb[0].mxu0 %v2636
      %v2828 = vpop.f32.mrb[0].mxu0
      %v2829 = vadd.f32 0.0, %v2828
      %v2830 = vpop.f32.mrb[0].mxu0
      %2831 = vmatprep.mubr.f32.mxu0 0.0
      %2832 = vmatmul.mubr.f32.gmra.mrb[0].mxu0 %v2639
      %v2833 = vpop.f32.mrb[0].mxu0
      %v2834 = vadd.f32 0.0, %v2833
      %v2835 = vpop.f32.mrb[0].mxu0
      %2836 = vmatprep.mubr.f32.mxu0 0.0
      %2837 = vmatmul.mubr.f32.gmra.mrb[0].mxu0 %v2642
      %v2838 = vpop.f32.mrb[0].mxu0
      %v2839 = vadd.f32 0.0, %v2838
      %v2840 = vpop.f32.mrb[0].mxu0
      %2841 = vmatprep.mubr.f32.mxu0 0.0
      %2842 = vmatmul.mubr.f32.gmra.mrb[0].mxu0 %v2645
      %v2843 = vpop.f32.mrb[0].mxu0
      %v2844 = vadd.f32 0.0, %v2843
      %v2845 = vpop.f32.mrb[0].mxu0
      %2846 = vmatprep.mubr.f32.mxu0 0.0
      %2847 = vmatmul.mubr.f32.gmra.mrb[0].mxu0 %v2648
      %v2848 = vpop.f32.mrb[0].mxu0
      %v2849 = vadd.f32 0.0, %v2848
      %v2850 = vpop.f32.mrb[0].mxu0
      %2851 = vmatprep.mubr.f32.mxu0 0.0
      %2852 = vmatmul.mubr.f32.gmra.mrb[0].mxu0 %v2651
      %v2853 = vpop.f32.mrb[0].mxu0
      %v2854 = vadd.f32 0.0, %v2853
      %v2855 = vpop.f32.mrb[0].mxu0
      %2856 = vmatprep.mubr.f32.mxu0 0.0
      %2857 = vmatmul.mubr.f32.gmra.mrb[0].mxu0 %v2654
      %v2858 = vpop.f32.mrb[0].mxu0
      %v2859 = vadd.f32 0.0, %v2858
      %v2860 = vpop.f32.mrb[0].mxu0
      %2861 = vmatprep.mubr.f32.mxu0 0.0
      %2862 = vmatmul.mubr.f32.gmra.mrb[0].mxu0 %v2657
      %v2863 = vpop.f32.mrb[0].mxu0
      %v2864 = vadd.f32 0.0, %v2863
      %v2865 = vpop.f32.mrb[0].mxu0
      %2866 = vmatprep.mubr.f32.mxu0 0.0
      %2867 = vmatmul.mubr.f32.gmra.mrb[0].mxu0 %v2660
      %v2868 = vpop.f32.mrb[0].mxu0
      %v2869 = vadd.f32 0.0, %v2868
      %v2870 = vpop.f32.mrb[0].mxu0
      %2871 = vmatprep.mubr.f32.mxu0 0.0
      %2872 = vmatmul.mubr.f32.gmra.mrb[0].mxu0 %v2663
      %v2873 = vpop.f32.mrb[0].mxu0
      %v2874 = vadd.f32 0.0, %v2873
      %v2875 = vpop.f32.mrb[0].mxu0
      %2876 = vmatprep.mubr.f32.mxu0 0.0
      %2877 = vmatmul.mubr.f32.gmra.mrb[0].mxu0 %v2666
      %v2878 = vpop.f32.mrb[0].mxu0
      %v2879 = vadd.f32 0.0, %v2878
      %v2880 = vpop.f32.mrb[0].mxu0
      %2881 = vmatprep.mubr.f32.mxu0 0.0
      %2882 = vmatmul.mubr.f32.gmra.mrb[0].mxu0 %v2669
      %v2883 = vpop.f32.mrb[0].mxu0
      %v2884 = vadd.f32 0.0, %v2883
      %v2885 = vpop.f32.mrb[0].mxu0
      %2886 = vmatprep.mubr.f32.mxu0 0.0
      %2887 = vmatmul.mubr.f32.gmra.mrb[0].mxu0 %v2672
      %v2888 = vpop.f32.mrb[0].mxu0
      %v2889 = vadd.f32 0.0, %v2888
      %v2890 = vpop.f32.mrb[0].mxu0
      %2891 = vmatprep.mubr.f32.mxu0 0.0
      %2892 = vmatmul.mubr.f32.gmra.mrb[0].mxu0 %v2675
      %v2893 = vpop.f32.mrb[0].mxu0
      %v2894 = vadd.f32 0.0, %v2893
      %v2895 = vpop.f32.mrb[0].mxu0
      %2896 = vmatprep.mubr.f32.mxu0 0.0
      %2897 = vmatmul.mubr.f32.gmra.mrb[0].mxu0 %v2678
      %v2898 = vpop.f32.mrb[0].mxu0
      %v2899 = vadd.f32 0.0, %v2898
      %v2900 = vpop.f32.mrb[0].mxu0
      %2901 = vmatprep.mubr.f32.mxu0 0.0
      %2902 = vmatmul.mubr.f32.gmra.mrb[0].mxu0 %v2681
      %v2903 = vpop.f32.mrb[0].mxu0
      %v2904 = vadd.f32 0.0, %v2903
      %v2905 = vpop.f32.mrb[0].mxu0
      %2906 = vmatprep.mubr.f32.mxu0 0.0
      %2907 = vmatmul.mubr.f32.gmra.mrb[0].mxu0 %v2684
      %v2908 = vpop.f32.mrb[0].mxu0
      %v2909 = vadd.f32 0.0, %v2908
      %v2910 = vpop.f32.mrb[0].mxu0
      %2911 = vmatprep.mubr.f32.mxu0 0.0
      %2912 = vmatmul.mubr.f32.gmra.mrb[0].mxu0 %v2687
      %v2913 = vpop.f32.mrb[0].mxu0
      %v2914 = vadd.f32 0.0, %v2913
      %v2915 = vpop.f32.mrb[0].mxu0
      %2916 = vdwg.mxu0
      %v2917 = vadd.f32 %v2526, %v2759
      %v2918 = vadd.f32 %v2527, %v2764
      %v2919 = vadd.f32 %v2528, %v2769
      %v2920 = vadd.f32 %v2529, %v2774
      %v2921 = vadd.f32 %v2530, %v2779
      %v2922 = vadd.f32 %v2531, %v2784
      %v2923 = vadd.f32 %v2532, %v2789
      %v2924 = vadd.f32 %v2533, %v2794
      %v2925 = vadd.f32 %v2534, %v2799
      %v2926 = vadd.f32 %v2535, %v2804
      %v2927 = vadd.f32 %v2536, %v2809
      %v2928 = vadd.f32 %v2537, %v2814
      %v2929 = vadd.f32 %v2538, %v2819
      %v2930 = vadd.f32 %v2539, %v2824
      %v2931 = vadd.f32 %v2540, %v2829
      %v2932 = vadd.f32 %v2541, %v2834
      %v2933 = vadd.f32 %v2542, %v2839
      %v2934 = vadd.f32 %v2543, %v2844
      %v2935 = vadd.f32 %v2544, %v2849
      %v2936 = vadd.f32 %v2545, %v2854
      %v2937 = vadd.f32 %v2546, %v2859
      %v2938 = vadd.f32 %v2547, %v2864
      %v2939 = vadd.f32 %v2548, %v2869
      %v2940 = vadd.f32 %v2549, %v2874
      %v2941 = vadd.f32 %v2550, %v2879
      %v2942 = vadd.f32 %v2551, %v2884
      %v2943 = vadd.f32 %v2552, %v2889
      %v2944 = vadd.f32 %v2553, %v2894
      %v2945 = vadd.f32 %v2554, %v2899
      %v2946 = vadd.f32 %v2555, %v2904
      %v2947 = vadd.f32 %v2556, %v2909
      %v2948 = vadd.f32 %v2557, %v2914
      %v2949 = vld [vmem:[%s2558 + $0x1] sm:$0xff]
      %v2950 = vld [vmem:[%s2558 + $0x9] sm:$0xff]
      %v2951 = vld [vmem:[%s2558 + $0x19] sm:$0xff]
      %v2952 = vld [vmem:[%s2558 + $0x21] sm:$0xff]
      %v2953 = vld [vmem:[%s2558 + $0x31] sm:$0xff]
      %v2954 = vld [vmem:[%s2558 + $0x39] sm:$0xff]
      %v2955 = vld [vmem:[%s2558 + $0x49] sm:$0xff]
      %v2956 = vld [vmem:[%s2558 + $0x51] sm:$0xff]
      %v2957 = vld [vmem:[%s2558 + $0x61] sm:$0xff]
      %v2958 = vld [vmem:[%s2558 + $0x69] sm:$0xff]
      %v2959 = vld [vmem:[%s2558 + $0x79] sm:$0xff]
      %v2960 = vld [vmem:[%s2558 + $0x81] sm:$0xff]
      %v2961 = vld [vmem:[%s2558 + $0x91] sm:$0xff]
      %v2962 = vld [vmem:[%s2558 + $0x99] sm:$0xff]
      %v2963 = vld [vmem:[%s2558 + $0xa9] sm:$0xff]
      %v2964 = vld [vmem:[%s2558 + $0xb1] sm:$0xff]
      %v2965 = vld [vmem:[%s2558 + $0xc1] sm:$0xff]
      %v2966 = vld [vmem:[%s2558 + $0xc9] sm:$0xff]
      %v2967 = vld [vmem:[%s2558 + $0xd9] sm:$0xff]
      %v2968 = vld [vmem:[%s2558 + $0xe1] sm:$0xff]
      %v2969 = vld [vmem:[%s2558 + $0xf1] sm:$0xff]
      %v2970 = vld [vmem:[%s2558 + $0xf9] sm:$0xff]
      %v2971 = vld [vmem:[%s2558 + $0x109] sm:$0xff]
      %v2972 = vld [vmem:[%s2558 + $0x111] sm:$0xff]
      %v2973 = vld [vmem:[%s2558 + $0x121] sm:$0xff]
      %v2974 = vld [vmem:[%s2558 + $0x129] sm:$0xff]
      %v2975 = vld [vmem:[%s2558 + $0x139] sm:$0xff]
      %v2976 = vld [vmem:[%s2558 + $0x141] sm:$0xff]
      %v2977 = vld [vmem:[%s2558 + $0x151] sm:$0xff]
      %v2978 = vld [vmem:[%s2558 + $0x159] sm:$0xff]
      %v2979 = vld [vmem:[%s2558 + $0x169] sm:$0xff]
      %v2980 = vld [vmem:[%s2558 + $0x171] sm:$0xff]
      %s2981 = scalar_lea.vmem %s1, 28
      %v2982 = vld [vmem:[%s2981] sm:$0xf]
      %v2984 = vsel %vm171, %v2949, 0
      %v2987 = vsel %vm171, %v2950, 0
      %v2990 = vsel %vm171, %v2951, 0
      %v2993 = vsel %vm171, %v2952, 0
      %v2996 = vsel %vm171, %v2953, 0
      %v2999 = vsel %vm171, %v2954, 0
      %v3002 = vsel %vm171, %v2955, 0
      %v3005 = vsel %vm171, %v2956, 0
      %v3008 = vsel %vm171, %v2957, 0
      %v3011 = vsel %vm171, %v2958, 0
      %v3014 = vsel %vm171, %v2959, 0
      %v3017 = vsel %vm171, %v2960, 0
      %v3020 = vsel %vm171, %v2961, 0
      %v3023 = vsel %vm171, %v2962, 0
      %v3026 = vsel %vm171, %v2963, 0
      %v3029 = vsel %vm171, %v2964, 0
      %v3032 = vsel %vm171, %v2965, 0
      %v3035 = vsel %vm171, %v2966, 0
      %v3038 = vsel %vm171, %v2967, 0
      %v3041 = vsel %vm171, %v2968, 0
      %v3044 = vsel %vm171, %v2969, 0
      %v3047 = vsel %vm171, %v2970, 0
      %v3050 = vsel %vm171, %v2971, 0
      %v3053 = vsel %vm171, %v2972, 0
      %v3056 = vsel %vm171, %v2973, 0
      %v3059 = vsel %vm171, %v2974, 0
      %v3062 = vsel %vm171, %v2975, 0
      %v3065 = vsel %vm171, %v2976, 0
      %v3068 = vsel %vm171, %v2977, 0
      %v3071 = vsel %vm171, %v2978, 0
      %v3074 = vsel %vm171, %v2979, 0
      %v3077 = vsel %vm171, %v2980, 0
      %v3080 = vsel %vm445, %v2982, 0
      %3082 = vmatprep.subr.mxu0 0.0
      %3083 = vmatpush1.msra.mxu0 %v3080
      %3084 = vmatprep.subr.mxu0 0.0
      %3085 = vmatpush1.msra.mxu0 0.0
      %3086 = vmatprep.subr.mxu0 0.0
      %3087 = vmatpush1.msra.mxu0 0.0
      %3088 = vmatprep.subr.mxu0 0.0
      %3089 = vmatpush1.msra.mxu0 0.0
      %3090 = vmatprep.subr.mxu0 0.0
      %3091 = vmatpush1.msra.mxu0 0.0
      %3092 = vmatprep.subr.mxu0 0.0
      %3093 = vmatpush1.msra.mxu0 0.0
      %3094 = vmatprep.subr.mxu0 0.0
      %3095 = vmatpush1.msra.mxu0 0.0
      %3096 = vmatprep.subr.mxu0 0.0
      %3097 = vmatpush1.msra.mxu0 0.0
      %3098 = vmatprep.subr.mxu0 0.0
      %3099 = vmatpush1.msra.mxu0 0.0
      %3100 = vmatprep.subr.mxu0 0.0
      %3101 = vmatpush1.msra.mxu0 0.0
      %3102 = vmatprep.subr.mxu0 0.0
      %3103 = vmatpush1.msra.mxu0 0.0
      %3104 = vmatprep.subr.mxu0 0.0
      %3105 = vmatpush1.msra.mxu0 0.0
      %3106 = vmatprep.subr.mxu0 0.0
      %3107 = vmatpush1.msra.mxu0 0.0
      %3108 = vmatprep.subr.mxu0 0.0
      %3109 = vmatpush1.msra.mxu0 0.0
      %3110 = vmatprep.subr.mxu0 0.0
      %3111 = vmatpush1.msra.mxu0 0.0
      %3112 = vmatprep.subr.mxu0 0.0
      %3113 = vmatpush1.msra.mxu0 0.0
      %3114 = vmatprep.subr.mxu0 0.0
      %3115 = vmatpush1.msra.mxu0 0.0
      %3116 = vmatprep.subr.mxu0 0.0
      %3117 = vmatpush1.msra.mxu0 0.0
      %3118 = vmatprep.subr.mxu0 0.0
      %3119 = vmatpush1.msra.mxu0 0.0
      %3120 = vmatprep.subr.mxu0 0.0
      %3121 = vmatpush1.msra.mxu0 0.0
      %3122 = vmatprep.subr.mxu0 0.0
      %3123 = vmatpush1.msra.mxu0 0.0
      %3124 = vmatprep.subr.mxu0 0.0
      %3125 = vmatpush1.msra.mxu0 0.0
      %3126 = vmatprep.subr.mxu0 0.0
      %3127 = vmatpush1.msra.mxu0 0.0
      %3128 = vmatprep.subr.mxu0 0.0
      %3129 = vmatpush1.msra.mxu0 0.0
      %3130 = vmatprep.subr.mxu0 0.0
      %3131 = vmatpush1.msra.mxu0 0.0
      %3132 = vmatprep.subr.mxu0 0.0
      %3133 = vmatpush1.msra.mxu0 0.0
      %3134 = vmatprep.subr.mxu0 0.0
      %3135 = vmatpush1.msra.mxu0 0.0
      %3136 = vmatprep.subr.mxu0 0.0
      %3137 = vmatpush1.msra.mxu0 0.0
      %3138 = vmatprep.subr.mxu0 0.0
      %3139 = vmatpush1.msra.mxu0 0.0
      %3140 = vmatprep.subr.mxu0 0.0
      %3141 = vmatpush1.msra.mxu0 0.0
      %3142 = vmatprep.subr.mxu0 0.0
      %3143 = vmatpush1.msra.mxu0 0.0
      %3144 = vmatprep.subr.mxu0 0.0
      %3145 = vmatpush1.msra.mxu0 0.0
      %3146 = vmatprep.mubr.f32.mxu0 0.0
      %3147 = vmatmul.mubr.f32.gmra.mrb[0].mxu0 %v2984
      %v3148 = vpop.f32.mrb[0].mxu0
      %v3149 = vadd.f32 0.0, %v3148
      %v3150 = vpop.f32.mrb[0].mxu0
      %3151 = vmatprep.mubr.f32.mxu0 0.0
      %3152 = vmatmul.mubr.f32.gmra.mrb[0].mxu0 %v2987
      %v3153 = vpop.f32.mrb[0].mxu0
      %v3154 = vadd.f32 0.0, %v3153
      %v3155 = vpop.f32.mrb[0].mxu0
      %3156 = vmatprep.mubr.f32.mxu0 0.0
      %3157 = vmatmul.mubr.f32.gmra.mrb[0].mxu0 %v2990
      %v3158 = vpop.f32.mrb[0].mxu0
      %v3159 = vadd.f32 0.0, %v3158
      %v3160 = vpop.f32.mrb[0].mxu0
      %3161 = vmatprep.mubr.f32.mxu0 0.0
      %3162 = vmatmul.mubr.f32.gmra.mrb[0].mxu0 %v2993
      %v3163 = vpop.f32.mrb[0].mxu0
      %v3164 = vadd.f32 0.0, %v3163
      %v3165 = vpop.f32.mrb[0].mxu0
      %3166 = vmatprep.mubr.f32.mxu0 0.0
      %3167 = vmatmul.mubr.f32.gmra.mrb[0].mxu0 %v2996
      %v3168 = vpop.f32.mrb[0].mxu0
      %v3169 = vadd.f32 0.0, %v3168
      %v3170 = vpop.f32.mrb[0].mxu0
      %3171 = vmatprep.mubr.f32.mxu0 0.0
      %3172 = vmatmul.mubr.f32.gmra.mrb[0].mxu0 %v2999
      %v3173 = vpop.f32.mrb[0].mxu0
      %v3174 = vadd.f32 0.0, %v3173
      %v3175 = vpop.f32.mrb[0].mxu0
      %3176 = vmatprep.mubr.f32.mxu0 0.0
      %3177 = vmatmul.mubr.f32.gmra.mrb[0].mxu0 %v3002
      %v3178 = vpop.f32.mrb[0].mxu0
      %v3179 = vadd.f32 0.0, %v3178
      %v3180 = vpop.f32.mrb[0].mxu0
      %3181 = vmatprep.mubr.f32.mxu0 0.0
      %3182 = vmatmul.mubr.f32.gmra.mrb[0].mxu0 %v3005
      %v3183 = vpop.f32.mrb[0].mxu0
      %v3184 = vadd.f32 0.0, %v3183
      %v3185 = vpop.f32.mrb[0].mxu0
      %3186 = vmatprep.mubr.f32.mxu0 0.0
      %3187 = vmatmul.mubr.f32.gmra.mrb[0].mxu0 %v3008
      %v3188 = vpop.f32.mrb[0].mxu0
      %v3189 = vadd.f32 0.0, %v3188
      %v3190 = vpop.f32.mrb[0].mxu0
      %3191 = vmatprep.mubr.f32.mxu0 0.0
      %3192 = vmatmul.mubr.f32.gmra.mrb[0].mxu0 %v3011
      %v3193 = vpop.f32.mrb[0].mxu0
      %v3194 = vadd.f32 0.0, %v3193
      %v3195 = vpop.f32.mrb[0].mxu0
      %3196 = vmatprep.mubr.f32.mxu0 0.0
      %3197 = vmatmul.mubr.f32.gmra.mrb[0].mxu0 %v3014
      %v3198 = vpop.f32.mrb[0].mxu0
      %v3199 = vadd.f32 0.0, %v3198
      %v3200 = vpop.f32.mrb[0].mxu0
      %3201 = vmatprep.mubr.f32.mxu0 0.0
      %3202 = vmatmul.mubr.f32.gmra.mrb[0].mxu0 %v3017
      %v3203 = vpop.f32.mrb[0].mxu0
      %v3204 = vadd.f32 0.0, %v3203
      %v3205 = vpop.f32.mrb[0].mxu0
      %3206 = vmatprep.mubr.f32.mxu0 0.0
      %3207 = vmatmul.mubr.f32.gmra.mrb[0].mxu0 %v3020
      %v3208 = vpop.f32.mrb[0].mxu0
      %v3209 = vadd.f32 0.0, %v3208
      %v3210 = vpop.f32.mrb[0].mxu0
      %3211 = vmatprep.mubr.f32.mxu0 0.0
      %3212 = vmatmul.mubr.f32.gmra.mrb[0].mxu0 %v3023
      %v3213 = vpop.f32.mrb[0].mxu0
      %v3214 = vadd.f32 0.0, %v3213
      %v3215 = vpop.f32.mrb[0].mxu0
      %3216 = vmatprep.mubr.f32.mxu0 0.0
      %3217 = vmatmul.mubr.f32.gmra.mrb[0].mxu0 %v3026
      %v3218 = vpop.f32.mrb[0].mxu0
      %v3219 = vadd.f32 0.0, %v3218
      %v3220 = vpop.f32.mrb[0].mxu0
      %3221 = vmatprep.mubr.f32.mxu0 0.0
      %3222 = vmatmul.mubr.f32.gmra.mrb[0].mxu0 %v3029
      %v3223 = vpop.f32.mrb[0].mxu0
      %v3224 = vadd.f32 0.0, %v3223
      %v3225 = vpop.f32.mrb[0].mxu0
      %3226 = vmatprep.mubr.f32.mxu0 0.0
      %3227 = vmatmul.mubr.f32.gmra.mrb[0].mxu0 %v3032
      %v3228 = vpop.f32.mrb[0].mxu0
      %v3229 = vadd.f32 0.0, %v3228
      %v3230 = vpop.f32.mrb[0].mxu0
      %3231 = vmatprep.mubr.f32.mxu0 0.0
      %3232 = vmatmul.mubr.f32.gmra.mrb[0].mxu0 %v3035
      %v3233 = vpop.f32.mrb[0].mxu0
      %v3234 = vadd.f32 0.0, %v3233
      %v3235 = vpop.f32.mrb[0].mxu0
      %3236 = vmatprep.mubr.f32.mxu0 0.0
      %3237 = vmatmul.mubr.f32.gmra.mrb[0].mxu0 %v3038
      %v3238 = vpop.f32.mrb[0].mxu0
      %v3239 = vadd.f32 0.0, %v3238
      %v3240 = vpop.f32.mrb[0].mxu0
      %3241 = vmatprep.mubr.f32.mxu0 0.0
      %3242 = vmatmul.mubr.f32.gmra.mrb[0].mxu0 %v3041
      %v3243 = vpop.f32.mrb[0].mxu0
      %v3244 = vadd.f32 0.0, %v3243
      %v3245 = vpop.f32.mrb[0].mxu0
      %3246 = vmatprep.mubr.f32.mxu0 0.0
      %3247 = vmatmul.mubr.f32.gmra.mrb[0].mxu0 %v3044
      %v3248 = vpop.f32.mrb[0].mxu0
      %v3249 = vadd.f32 0.0, %v3248
      %v3250 = vpop.f32.mrb[0].mxu0
      %3251 = vmatprep.mubr.f32.mxu0 0.0
      %3252 = vmatmul.mubr.f32.gmra.mrb[0].mxu0 %v3047
      %v3253 = vpop.f32.mrb[0].mxu0
      %v3254 = vadd.f32 0.0, %v3253
      %v3255 = vpop.f32.mrb[0].mxu0
      %3256 = vmatprep.mubr.f32.mxu0 0.0
      %3257 = vmatmul.mubr.f32.gmra.mrb[0].mxu0 %v3050
      %v3258 = vpop.f32.mrb[0].mxu0
      %v3259 = vadd.f32 0.0, %v3258
      %v3260 = vpop.f32.mrb[0].mxu0
      %3261 = vmatprep.mubr.f32.mxu0 0.0
      %3262 = vmatmul.mubr.f32.gmra.mrb[0].mxu0 %v3053
      %v3263 = vpop.f32.mrb[0].mxu0
      %v3264 = vadd.f32 0.0, %v3263
      %v3265 = vpop.f32.mrb[0].mxu0
      %3266 = vmatprep.mubr.f32.mxu0 0.0
      %3267 = vmatmul.mubr.f32.gmra.mrb[0].mxu0 %v3056
      %v3268 = vpop.f32.mrb[0].mxu0
      %v3269 = vadd.f32 0.0, %v3268
      %v3270 = vpop.f32.mrb[0].mxu0
      %3271 = vmatprep.mubr.f32.mxu0 0.0
      %3272 = vmatmul.mubr.f32.gmra.mrb[0].mxu0 %v3059
      %v3273 = vpop.f32.mrb[0].mxu0
      %v3274 = vadd.f32 0.0, %v3273
      %v3275 = vpop.f32.mrb[0].mxu0
      %3276 = vmatprep.mubr.f32.mxu0 0.0
      %3277 = vmatmul.mubr.f32.gmra.mrb[0].mxu0 %v3062
      %v3278 = vpop.f32.mrb[0].mxu0
      %v3279 = vadd.f32 0.0, %v3278
      %v3280 = vpop.f32.mrb[0].mxu0
      %3281 = vmatprep.mubr.f32.mxu0 0.0
      %3282 = vmatmul.mubr.f32.gmra.mrb[0].mxu0 %v3065
      %v3283 = vpop.f32.mrb[0].mxu0
      %v3284 = vadd.f32 0.0, %v3283
      %v3285 = vpop.f32.mrb[0].mxu0
      %3286 = vmatprep.mubr.f32.mxu0 0.0
      %3287 = vmatmul.mubr.f32.gmra.mrb[0].mxu0 %v3068
      %v3288 = vpop.f32.mrb[0].mxu0
      %v3289 = vadd.f32 0.0, %v3288
      %v3290 = vpop.f32.mrb[0].mxu0
      %3291 = vmatprep.mubr.f32.mxu0 0.0
      %3292 = vmatmul.mubr.f32.gmra.mrb[0].mxu0 %v3071
      %v3293 = vpop.f32.mrb[0].mxu0
      %v3294 = vadd.f32 0.0, %v3293
      %v3295 = vpop.f32.mrb[0].mxu0
      %3296 = vmatprep.mubr.f32.mxu0 0.0
      %3297 = vmatmul.mubr.f32.gmra.mrb[0].mxu0 %v3074
      %v3298 = vpop.f32.mrb[0].mxu0
      %v3299 = vadd.f32 0.0, %v3298
      %v3300 = vpop.f32.mrb[0].mxu0
      %3301 = vmatprep.mubr.f32.mxu0 0.0
      %3302 = vmatmul.mubr.f32.gmra.mrb[0].mxu0 %v3077
      %v3303 = vpop.f32.mrb[0].mxu0
      %v3304 = vadd.f32 0.0, %v3303
      %v3305 = vpop.f32.mrb[0].mxu0
      %3306 = vdwg.mxu0
      %v3307 = vadd.f32 %v2917, %v3149
      %v3308 = vadd.f32 %v2918, %v3154
      %v3309 = vadd.f32 %v2919, %v3159
      %v3310 = vadd.f32 %v2920, %v3164
      %v3311 = vadd.f32 %v2921, %v3169
      %v3312 = vadd.f32 %v2922, %v3174
      %v3313 = vadd.f32 %v2923, %v3179
      %v3314 = vadd.f32 %v2924, %v3184
      %v3315 = vadd.f32 %v2925, %v3189
      %v3316 = vadd.f32 %v2926, %v3194
      %v3317 = vadd.f32 %v2927, %v3199
      %v3318 = vadd.f32 %v2928, %v3204
      %v3319 = vadd.f32 %v2929, %v3209
      %v3320 = vadd.f32 %v2930, %v3214
      %v3321 = vadd.f32 %v2931, %v3219
      %v3322 = vadd.f32 %v2932, %v3224
      %v3323 = vadd.f32 %v2933, %v3229
      %v3324 = vadd.f32 %v2934, %v3234
      %v3325 = vadd.f32 %v2935, %v3239
      %v3326 = vadd.f32 %v2936, %v3244
      %v3327 = vadd.f32 %v2937, %v3249
      %v3328 = vadd.f32 %v2938, %v3254
      %v3329 = vadd.f32 %v2939, %v3259
      %v3330 = vadd.f32 %v2940, %v3264
      %v3331 = vadd.f32 %v2941, %v3269
      %v3332 = vadd.f32 %v2942, %v3274
      %v3333 = vadd.f32 %v2943, %v3279
      %v3334 = vadd.f32 %v2944, %v3284
      %v3335 = vadd.f32 %v2945, %v3289
      %v3336 = vadd.f32 %v2946, %v3294
      %v3337 = vadd.f32 %v2947, %v3299
      %v3338 = vadd.f32 %v2948, %v3304
      %v3339 = vld [vmem:[%s2558 + $0x2] sm:$0xff]
      %v3340 = vld [vmem:[%s2558 + $0xa] sm:$0xff]
      %v3341 = vld [vmem:[%s2558 + $0x1a] sm:$0xff]
      %v3342 = vld [vmem:[%s2558 + $0x22] sm:$0xff]
      %v3343 = vld [vmem:[%s2558 + $0x32] sm:$0xff]
      %v3344 = vld [vmem:[%s2558 + $0x3a] sm:$0xff]
      %v3345 = vld [vmem:[%s2558 + $0x4a] sm:$0xff]
      %v3346 = vld [vmem:[%s2558 + $0x52] sm:$0xff]
      %v3347 = vld [vmem:[%s2558 + $0x62] sm:$0xff]
      %v3348 = vld [vmem:[%s2558 + $0x6a] sm:$0xff]
      %v3349 = vld [vmem:[%s2558 + $0x7a] sm:$0xff]
      %v3350 = vld [vmem:[%s2558 + $0x82] sm:$0xff]
      %v3351 = vld [vmem:[%s2558 + $0x92] sm:$0xff]
      %v3352 = vld [vmem:[%s2558 + $0x9a] sm:$0xff]
      %v3353 = vld [vmem:[%s2558 + $0xaa] sm:$0xff]
      %v3354 = vld [vmem:[%s2558 + $0xb2] sm:$0xff]
      %v3355 = vld [vmem:[%s2558 + $0xc2] sm:$0xff]
      %v3356 = vld [vmem:[%s2558 + $0xca] sm:$0xff]
      %v3357 = vld [vmem:[%s2558 + $0xda] sm:$0xff]
      %v3358 = vld [vmem:[%s2558 + $0xe2] sm:$0xff]
      %v3359 = vld [vmem:[%s2558 + $0xf2] sm:$0xff]
      %v3360 = vld [vmem:[%s2558 + $0xfa] sm:$0xff]
      %v3361 = vld [vmem:[%s2558 + $0x10a] sm:$0xff]
      %v3362 = vld [vmem:[%s2558 + $0x112] sm:$0xff]
      %v3363 = vld [vmem:[%s2558 + $0x122] sm:$0xff]
      %v3364 = vld [vmem:[%s2558 + $0x12a] sm:$0xff]
      %v3365 = vld [vmem:[%s2558 + $0x13a] sm:$0xff]
      %v3366 = vld [vmem:[%s2558 + $0x142] sm:$0xff]
      %v3367 = vld [vmem:[%s2558 + $0x152] sm:$0xff]
      %v3368 = vld [vmem:[%s2558 + $0x15a] sm:$0xff]
      %v3369 = vld [vmem:[%s2558 + $0x16a] sm:$0xff]
      %v3370 = vld [vmem:[%s2558 + $0x172] sm:$0xff]
      %s3371 = scalar_lea.vmem %s1, 32
      %v3372 = vld [vmem:[%s3371] sm:$0xf]
      %v3374 = vsel %vm171, %v3339, 0
      %v3377 = vsel %vm171, %v3340, 0
      %v3380 = vsel %vm171, %v3341, 0
      %v3383 = vsel %vm171, %v3342, 0
      %v3386 = vsel %vm171, %v3343, 0
      %v3389 = vsel %vm171, %v3344, 0
      %v3392 = vsel %vm171, %v3345, 0
      %v3395 = vsel %vm171, %v3346, 0
      %v3398 = vsel %vm171, %v3347, 0
      %v3401 = vsel %vm171, %v3348, 0
      %v3404 = vsel %vm171, %v3349, 0
      %v3407 = vsel %vm171, %v3350, 0
      %v3410 = vsel %vm171, %v3351, 0
      %v3413 = vsel %vm171, %v3352, 0
      %v3416 = vsel %vm171, %v3353, 0
      %v3419 = vsel %vm171, %v3354, 0
      %v3422 = vsel %vm171, %v3355, 0
      %v3425 = vsel %vm171, %v3356, 0
      %v3428 = vsel %vm171, %v3357, 0
      %v3431 = vsel %vm171, %v3358, 0
      %v3434 = vsel %vm171, %v3359, 0
      %v3437 = vsel %vm171, %v3360, 0
      %v3440 = vsel %vm171, %v3361, 0
      %v3443 = vsel %vm171, %v3362, 0
      %v3446 = vsel %vm171, %v3363, 0
      %v3449 = vsel %vm171, %v3364, 0
      %v3452 = vsel %vm171, %v3365, 0
      %v3455 = vsel %vm171, %v3366, 0
      %v3458 = vsel %vm171, %v3367, 0
      %v3461 = vsel %vm171, %v3368, 0
      %v3464 = vsel %vm171, %v3369, 0
      %v3467 = vsel %vm171, %v3370, 0
      %v3470 = vsel %vm445, %v3372, 0
      %3472 = vmatprep.subr.mxu0 0.0
      %3473 = vmatpush1.msra.mxu0 %v3470
      %3474 = vmatprep.subr.mxu0 0.0
      %3475 = vmatpush1.msra.mxu0 0.0
      %3476 = vmatprep.subr.mxu0 0.0
      %3477 = vmatpush1.msra.mxu0 0.0
      %3478 = vmatprep.subr.mxu0 0.0
      %3479 = vmatpush1.msra.mxu0 0.0
      %3480 = vmatprep.subr.mxu0 0.0
      %3481 = vmatpush1.msra.mxu0 0.0
      %3482 = vmatprep.subr.mxu0 0.0
      %3483 = vmatpush1.msra.mxu0 0.0
      %3484 = vmatprep.subr.mxu0 0.0
      %3485 = vmatpush1.msra.mxu0 0.0
      %3486 = vmatprep.subr.mxu0 0.0
      %3487 = vmatpush1.msra.mxu0 0.0
      %3488 = vmatprep.subr.mxu0 0.0
      %3489 = vmatpush1.msra.mxu0 0.0
      %3490 = vmatprep.subr.mxu0 0.0
      %3491 = vmatpush1.msra.mxu0 0.0
      %3492 = vmatprep.subr.mxu0 0.0
      %3493 = vmatpush1.msra.mxu0 0.0
      %3494 = vmatprep.subr.mxu0 0.0
      %3495 = vmatpush1.msra.mxu0 0.0
      %3496 = vmatprep.subr.mxu0 0.0
      %3497 = vmatpush1.msra.mxu0 0.0
      %3498 = vmatprep.subr.mxu0 0.0
      %3499 = vmatpush1.msra.mxu0 0.0
      %3500 = vmatprep.subr.mxu0 0.0
      %3501 = vmatpush1.msra.mxu0 0.0
      %3502 = vmatprep.subr.mxu0 0.0
      %3503 = vmatpush1.msra.mxu0 0.0
      %3504 = vmatprep.subr.mxu0 0.0
      %3505 = vmatpush1.msra.mxu0 0.0
      %3506 = vmatprep.subr.mxu0 0.0
      %3507 = vmatpush1.msra.mxu0 0.0
      %3508 = vmatprep.subr.mxu0 0.0
      %3509 = vmatpush1.msra.mxu0 0.0
      %3510 = vmatprep.subr.mxu0 0.0
      %3511 = vmatpush1.msra.mxu0 0.0
      %3512 = vmatprep.subr.mxu0 0.0
      %3513 = vmatpush1.msra.mxu0 0.0
      %3514 = vmatprep.subr.mxu0 0.0
      %3515 = vmatpush1.msra.mxu0 0.0
      %3516 = vmatprep.subr.mxu0 0.0
      %3517 = vmatpush1.msra.mxu0 0.0
      %3518 = vmatprep.subr.mxu0 0.0
      %3519 = vmatpush1.msra.mxu0 0.0
      %3520 = vmatprep.subr.mxu0 0.0
      %3521 = vmatpush1.msra.mxu0 0.0
      %3522 = vmatprep.subr.mxu0 0.0
      %3523 = vmatpush1.msra.mxu0 0.0
      %3524 = vmatprep.subr.mxu0 0.0
      %3525 = vmatpush1.msra.mxu0 0.0
      %3526 = vmatprep.subr.mxu0 0.0
      %3527 = vmatpush1.msra.mxu0 0.0
      %3528 = vmatprep.subr.mxu0 0.0
      %3529 = vmatpush1.msra.mxu0 0.0
      %3530 = vmatprep.subr.mxu0 0.0
      %3531 = vmatpush1.msra.mxu0 0.0
      %3532 = vmatprep.subr.mxu0 0.0
      %3533 = vmatpush1.msra.mxu0 0.0
      %3534 = vmatprep.subr.mxu0 0.0
      %3535 = vmatpush1.msra.mxu0 0.0
      %3536 = vmatprep.mubr.f32.mxu0 0.0
      %3537 = vmatmul.mubr.f32.gmra.mrb[0].mxu0 %v3374
      %v3538 = vpop.f32.mrb[0].mxu0
      %v3539 = vadd.f32 0.0, %v3538
      %v3540 = vpop.f32.mrb[0].mxu0
      %3541 = vmatprep.mubr.f32.mxu0 0.0
      %3542 = vmatmul.mubr.f32.gmra.mrb[0].mxu0 %v3377
      %v3543 = vpop.f32.mrb[0].mxu0
      %v3544 = vadd.f32 0.0, %v3543
      %v3545 = vpop.f32.mrb[0].mxu0
      %3546 = vmatprep.mubr.f32.mxu0 0.0
      %3547 = vmatmul.mubr.f32.gmra.mrb[0].mxu0 %v3380
      %v3548 = vpop.f32.mrb[0].mxu0
      %v3549 = vadd.f32 0.0, %v3548
      %v3550 = vpop.f32.mrb[0].mxu0
      %3551 = vmatprep.mubr.f32.mxu0 0.0
      %3552 = vmatmul.mubr.f32.gmra.mrb[0].mxu0 %v3383
      %v3553 = vpop.f32.mrb[0].mxu0
      %v3554 = vadd.f32 0.0, %v3553
      %v3555 = vpop.f32.mrb[0].mxu0
      %3556 = vmatprep.mubr.f32.mxu0 0.0
      %3557 = vmatmul.mubr.f32.gmra.mrb[0].mxu0 %v3386
      %v3558 = vpop.f32.mrb[0].mxu0
      %v3559 = vadd.f32 0.0, %v3558
      %v3560 = vpop.f32.mrb[0].mxu0
      %3561 = vmatprep.mubr.f32.mxu0 0.0
      %3562 = vmatmul.mubr.f32.gmra.mrb[0].mxu0 %v3389
      %v3563 = vpop.f32.mrb[0].mxu0
      %v3564 = vadd.f32 0.0, %v3563
      %v3565 = vpop.f32.mrb[0].mxu0
      %3566 = vmatprep.mubr.f32.mxu0 0.0
      %3567 = vmatmul.mubr.f32.gmra.mrb[0].mxu0 %v3392
      %v3568 = vpop.f32.mrb[0].mxu0
      %v3569 = vadd.f32 0.0, %v3568
      %v3570 = vpop.f32.mrb[0].mxu0
      %3571 = vmatprep.mubr.f32.mxu0 0.0
      %3572 = vmatmul.mubr.f32.gmra.mrb[0].mxu0 %v3395
      %v3573 = vpop.f32.mrb[0].mxu0
      %v3574 = vadd.f32 0.0, %v3573
      %v3575 = vpop.f32.mrb[0].mxu0
      %3576 = vmatprep.mubr.f32.mxu0 0.0
      %3577 = vmatmul.mubr.f32.gmra.mrb[0].mxu0 %v3398
      %v3578 = vpop.f32.mrb[0].mxu0
      %v3579 = vadd.f32 0.0, %v3578
      %v3580 = vpop.f32.mrb[0].mxu0
      %3581 = vmatprep.mubr.f32.mxu0 0.0
      %3582 = vmatmul.mubr.f32.gmra.mrb[0].mxu0 %v3401
      %v3583 = vpop.f32.mrb[0].mxu0
      %v3584 = vadd.f32 0.0, %v3583
      %v3585 = vpop.f32.mrb[0].mxu0
      %3586 = vmatprep.mubr.f32.mxu0 0.0
      %3587 = vmatmul.mubr.f32.gmra.mrb[0].mxu0 %v3404
      %v3588 = vpop.f32.mrb[0].mxu0
      %v3589 = vadd.f32 0.0, %v3588
      %v3590 = vpop.f32.mrb[0].mxu0
      %3591 = vmatprep.mubr.f32.mxu0 0.0
      %3592 = vmatmul.mubr.f32.gmra.mrb[0].mxu0 %v3407
      %v3593 = vpop.f32.mrb[0].mxu0
      %v3594 = vadd.f32 0.0, %v3593
      %v3595 = vpop.f32.mrb[0].mxu0
      %3596 = vmatprep.mubr.f32.mxu0 0.0
      %3597 = vmatmul.mubr.f32.gmra.mrb[0].mxu0 %v3410
      %v3598 = vpop.f32.mrb[0].mxu0
      %v3599 = vadd.f32 0.0, %v3598
      %v3600 = vpop.f32.mrb[0].mxu0
      %3601 = vmatprep.mubr.f32.mxu0 0.0
      %3602 = vmatmul.mubr.f32.gmra.mrb[0].mxu0 %v3413
      %v3603 = vpop.f32.mrb[0].mxu0
      %v3604 = vadd.f32 0.0, %v3603
      %v3605 = vpop.f32.mrb[0].mxu0
      %3606 = vmatprep.mubr.f32.mxu0 0.0
      %3607 = vmatmul.mubr.f32.gmra.mrb[0].mxu0 %v3416
      %v3608 = vpop.f32.mrb[0].mxu0
      %v3609 = vadd.f32 0.0, %v3608
      %v3610 = vpop.f32.mrb[0].mxu0
      %3611 = vmatprep.mubr.f32.mxu0 0.0
      %3612 = vmatmul.mubr.f32.gmra.mrb[0].mxu0 %v3419
      %v3613 = vpop.f32.mrb[0].mxu0
      %v3614 = vadd.f32 0.0, %v3613
      %v3615 = vpop.f32.mrb[0].mxu0
      %3616 = vmatprep.mubr.f32.mxu0 0.0
      %3617 = vmatmul.mubr.f32.gmra.mrb[0].mxu0 %v3422
      %v3618 = vpop.f32.mrb[0].mxu0
      %v3619 = vadd.f32 0.0, %v3618
      %v3620 = vpop.f32.mrb[0].mxu0
      %3621 = vmatprep.mubr.f32.mxu0 0.0
      %3622 = vmatmul.mubr.f32.gmra.mrb[0].mxu0 %v3425
      %v3623 = vpop.f32.mrb[0].mxu0
      %v3624 = vadd.f32 0.0, %v3623
      %v3625 = vpop.f32.mrb[0].mxu0
      %3626 = vmatprep.mubr.f32.mxu0 0.0
      %3627 = vmatmul.mubr.f32.gmra.mrb[0].mxu0 %v3428
      %v3628 = vpop.f32.mrb[0].mxu0
      %v3629 = vadd.f32 0.0, %v3628
      %v3630 = vpop.f32.mrb[0].mxu0
      %3631 = vmatprep.mubr.f32.mxu0 0.0
      %3632 = vmatmul.mubr.f32.gmra.mrb[0].mxu0 %v3431
      %v3633 = vpop.f32.mrb[0].mxu0
      %v3634 = vadd.f32 0.0, %v3633
      %v3635 = vpop.f32.mrb[0].mxu0
      %3636 = vmatprep.mubr.f32.mxu0 0.0
      %3637 = vmatmul.mubr.f32.gmra.mrb[0].mxu0 %v3434
      %v3638 = vpop.f32.mrb[0].mxu0
      %v3639 = vadd.f32 0.0, %v3638
      %v3640 = vpop.f32.mrb[0].mxu0
      %3641 = vmatprep.mubr.f32.mxu0 0.0
      %3642 = vmatmul.mubr.f32.gmra.mrb[0].mxu0 %v3437
      %v3643 = vpop.f32.mrb[0].mxu0
      %v3644 = vadd.f32 0.0, %v3643
      %v3645 = vpop.f32.mrb[0].mxu0
      %3646 = vmatprep.mubr.f32.mxu0 0.0
      %3647 = vmatmul.mubr.f32.gmra.mrb[0].mxu0 %v3440
      %v3648 = vpop.f32.mrb[0].mxu0
      %v3649 = vadd.f32 0.0, %v3648
      %v3650 = vpop.f32.mrb[0].mxu0
      %3651 = vmatprep.mubr.f32.mxu0 0.0
      %3652 = vmatmul.mubr.f32.gmra.mrb[0].mxu0 %v3443
      %v3653 = vpop.f32.mrb[0].mxu0
      %v3654 = vadd.f32 0.0, %v3653
      %v3655 = vpop.f32.mrb[0].mxu0
      %3656 = vmatprep.mubr.f32.mxu0 0.0
      %3657 = vmatmul.mubr.f32.gmra.mrb[0].mxu0 %v3446
      %v3658 = vpop.f32.mrb[0].mxu0
      %v3659 = vadd.f32 0.0, %v3658
      %v3660 = vpop.f32.mrb[0].mxu0
      %3661 = vmatprep.mubr.f32.mxu0 0.0
      %3662 = vmatmul.mubr.f32.gmra.mrb[0].mxu0 %v3449
      %v3663 = vpop.f32.mrb[0].mxu0
      %v3664 = vadd.f32 0.0, %v3663
      %v3665 = vpop.f32.mrb[0].mxu0
      %3666 = vmatprep.mubr.f32.mxu0 0.0
      %3667 = vmatmul.mubr.f32.gmra.mrb[0].mxu0 %v3452
      %v3668 = vpop.f32.mrb[0].mxu0
      %v3669 = vadd.f32 0.0, %v3668
      %v3670 = vpop.f32.mrb[0].mxu0
      %3671 = vmatprep.mubr.f32.mxu0 0.0
      %3672 = vmatmul.mubr.f32.gmra.mrb[0].mxu0 %v3455
      %v3673 = vpop.f32.mrb[0].mxu0
      %v3674 = vadd.f32 0.0, %v3673
      %v3675 = vpop.f32.mrb[0].mxu0
      %3676 = vmatprep.mubr.f32.mxu0 0.0
      %3677 = vmatmul.mubr.f32.gmra.mrb[0].mxu0 %v3458
      %v3678 = vpop.f32.mrb[0].mxu0
      %v3679 = vadd.f32 0.0, %v3678
      %v3680 = vpop.f32.mrb[0].mxu0
      %3681 = vmatprep.mubr.f32.mxu0 0.0
      %3682 = vmatmul.mubr.f32.gmra.mrb[0].mxu0 %v3461
      %v3683 = vpop.f32.mrb[0].mxu0
      %v3684 = vadd.f32 0.0, %v3683
      %v3685 = vpop.f32.mrb[0].mxu0
      %3686 = vmatprep.mubr.f32.mxu0 0.0
      %3687 = vmatmul.mubr.f32.gmra.mrb[0].mxu0 %v3464
      %v3688 = vpop.f32.mrb[0].mxu0
      %v3689 = vadd.f32 0.0, %v3688
      %v3690 = vpop.f32.mrb[0].mxu0
      %3691 = vmatprep.mubr.f32.mxu0 0.0
      %3692 = vmatmul.mubr.f32.gmra.mrb[0].mxu0 %v3467
      %v3693 = vpop.f32.mrb[0].mxu0
      %v3694 = vadd.f32 0.0, %v3693
      %v3695 = vpop.f32.mrb[0].mxu0
      %3696 = vdwg.mxu0
      %v3697 = vadd.f32 %v3307, %v3539
      %v3698 = vadd.f32 %v3308, %v3544
      %v3699 = vadd.f32 %v3309, %v3549
      %v3700 = vadd.f32 %v3310, %v3554
      %v3701 = vadd.f32 %v3311, %v3559
      %v3702 = vadd.f32 %v3312, %v3564
      %v3703 = vadd.f32 %v3313, %v3569
      %v3704 = vadd.f32 %v3314, %v3574
      %v3705 = vadd.f32 %v3315, %v3579
      %v3706 = vadd.f32 %v3316, %v3584
      %v3707 = vadd.f32 %v3317, %v3589
      %v3708 = vadd.f32 %v3318, %v3594
      %v3709 = vadd.f32 %v3319, %v3599
      %v3710 = vadd.f32 %v3320, %v3604
      %v3711 = vadd.f32 %v3321, %v3609
      %v3712 = vadd.f32 %v3322, %v3614
      %v3713 = vadd.f32 %v3323, %v3619
      %v3714 = vadd.f32 %v3324, %v3624
      %v3715 = vadd.f32 %v3325, %v3629
      %v3716 = vadd.f32 %v3326, %v3634
      %v3717 = vadd.f32 %v3327, %v3639
      %v3718 = vadd.f32 %v3328, %v3644
      %v3719 = vadd.f32 %v3329, %v3649
      %v3720 = vadd.f32 %v3330, %v3654
      %v3721 = vadd.f32 %v3331, %v3659
      %v3722 = vadd.f32 %v3332, %v3664
      %v3723 = vadd.f32 %v3333, %v3669
      %v3724 = vadd.f32 %v3334, %v3674
      %v3725 = vadd.f32 %v3335, %v3679
      %v3726 = vadd.f32 %v3336, %v3684
      %v3727 = vadd.f32 %v3337, %v3689
      %v3728 = vadd.f32 %v3338, %v3694
      %v3729 = vld [vmem:[%s2] sm:$0x1]
      %v3731 = vlaneseq
      %v3732 = vshrl.u32 %v3731, 7
      %v3733 = vsub.s32 0, %v3732
      %v3734 = vrot.slane %v3729, %v3733
      %v3736 = vadd.f32 %v3697, %v3734
      %v3737 = vadd.f32 %v3698, %v3734
      %v3738 = vadd.f32 %v3699, %v3734
      %v3739 = vadd.f32 %v3700, %v3734
      %v3740 = vadd.f32 %v3701, %v3734
      %v3741 = vadd.f32 %v3702, %v3734
      %v3742 = vadd.f32 %v3703, %v3734
      %v3743 = vadd.f32 %v3704, %v3734
      %v3744 = vadd.f32 %v3705, %v3734
      %v3745 = vadd.f32 %v3706, %v3734
      %v3746 = vadd.f32 %v3707, %v3734
      %v3747 = vadd.f32 %v3708, %v3734
      %v3748 = vadd.f32 %v3709, %v3734
      %v3749 = vadd.f32 %v3710, %v3734
      %v3750 = vadd.f32 %v3711, %v3734
      %v3751 = vadd.f32 %v3712, %v3734
      %v3752 = vadd.f32 %v3713, %v3734
      %v3753 = vadd.f32 %v3714, %v3734
      %v3754 = vadd.f32 %v3715, %v3734
      %v3755 = vadd.f32 %v3716, %v3734
      %v3756 = vadd.f32 %v3717, %v3734
      %v3757 = vadd.f32 %v3718, %v3734
      %v3758 = vadd.f32 %v3719, %v3734
      %v3759 = vadd.f32 %v3720, %v3734
      %v3760 = vadd.f32 %v3721, %v3734
      %v3761 = vadd.f32 %v3722, %v3734
      %v3762 = vadd.f32 %v3723, %v3734
      %v3763 = vadd.f32 %v3724, %v3734
      %v3764 = vadd.f32 %v3725, %v3734
      %v3765 = vadd.f32 %v3726, %v3734
      %v3766 = vadd.f32 %v3727, %v3734
      %v3767 = vadd.f32 %v3728, %v3734
      %vm3768 = vcmask 785408
      %3769 = vst.msk [vmem:[%s170] sm:$0xff] %vm3768, %v3736
      %3770 = vst.msk [vmem:[%s170 + $0x8] sm:$0xff] %vm3768, %v3737
      %3771 = vst.msk [vmem:[%s170 + $0x10] sm:$0xff] %vm3768, %v3738
      %3772 = vst.msk [vmem:[%s170 + $0x18] sm:$0xff] %vm3768, %v3739
      %3773 = vst.msk [vmem:[%s170 + $0x20] sm:$0xff] %vm3768, %v3740
      %3774 = vst.msk [vmem:[%s170 + $0x28] sm:$0xff] %vm3768, %v3741
      %3775 = vst.msk [vmem:[%s170 + $0x30] sm:$0xff] %vm3768, %v3742
      %3776 = vst.msk [vmem:[%s170 + $0x38] sm:$0xff] %vm3768, %v3743
      %3777 = vst.msk [vmem:[%s170 + $0x40] sm:$0xff] %vm3768, %v3744
      %3778 = vst.msk [vmem:[%s170 + $0x48] sm:$0xff] %vm3768, %v3745
      %3779 = vst.msk [vmem:[%s170 + $0x50] sm:$0xff] %vm3768, %v3746
      %3780 = vst.msk [vmem:[%s170 + $0x58] sm:$0xff] %vm3768, %v3747
      %3781 = vst.msk [vmem:[%s170 + $0x60] sm:$0xff] %vm3768, %v3748
      %3782 = vst.msk [vmem:[%s170 + $0x68] sm:$0xff] %vm3768, %v3749
      %3783 = vst.msk [vmem:[%s170 + $0x70] sm:$0xff] %vm3768, %v3750
      %3784 = vst.msk [vmem:[%s170 + $0x78] sm:$0xff] %vm3768, %v3751
      %3785 = vst.msk [vmem:[%s170 + $0x80] sm:$0xff] %vm3768, %v3752
      %3786 = vst.msk [vmem:[%s170 + $0x88] sm:$0xff] %vm3768, %v3753
      %3787 = vst.msk [vmem:[%s170 + $0x90] sm:$0xff] %vm3768, %v3754
      %3788 = vst.msk [vmem:[%s170 + $0x98] sm:$0xff] %vm3768, %v3755
      %3789 = vst.msk [vmem:[%s170 + $0xa0] sm:$0xff] %vm3768, %v3756
      %3790 = vst.msk [vmem:[%s170 + $0xa8] sm:$0xff] %vm3768, %v3757
      %3791 = vst.msk [vmem:[%s170 + $0xb0] sm:$0xff] %vm3768, %v3758
      %3792 = vst.msk [vmem:[%s170 + $0xb8] sm:$0xff] %vm3768, %v3759
      %3793 = vst.msk [vmem:[%s170 + $0xc0] sm:$0xff] %vm3768, %v3760
      %3794 = vst.msk [vmem:[%s170 + $0xc8] sm:$0xff] %vm3768, %v3761
      %3795 = vst.msk [vmem:[%s170 + $0xd0] sm:$0xff] %vm3768, %v3762
      %3796 = vst.msk [vmem:[%s170 + $0xd8] sm:$0xff] %vm3768, %v3763
      %3797 = vst.msk [vmem:[%s170 + $0xe0] sm:$0xff] %vm3768, %v3764
      %3798 = vst.msk [vmem:[%s170 + $0xe8] sm:$0xff] %vm3768, %v3765
      %3799 = vst.msk [vmem:[%s170 + $0xf0] sm:$0xff] %vm3768, %v3766
      %3800 = vst.msk [vmem:[%s170 + $0xf8] sm:$0xff] %vm3768, %v3767
      %p3801 = scmp.lt.s32.totalorder %s14, 15
      %s3802 = scalar_select %p3801, %s14, 15
      %s3803 = smul.addr %s3802, 32
      %s3804 = smul.addr %s3803, 8
      %s3805 = scalar_lea.vmem %s3, %s3804
      // Predicated region
      $region33: #{tpu_custom_call.1} parent=31 // pred_check
        %p3806 = pneg %p100
      $region34: #{tpu_custom_call.1} parent=31 // pred_check_branch
        %3808 = sbr.rel (%p3806) target = $region36
      $region35: #{tpu_custom_call.1} parent=31 // pred_region
        _
      $region36: #{tpu_custom_call.1} parent=31 // pred_fallthru
        _
    $region32: #{tpu_custom_call.1} parent=5 // pred_fallthru
      _
    %p3809 = scmp.le.s32.totalorder 2, %s9
    // Predicated region
    $region37: #{tpu_custom_call.1} parent=5 // pred_check
      %p3810 = pneg %p3809
    $region38: #{tpu_custom_call.1} parent=5 // pred_check_branch
      %3812 = sbr.rel (%p3810) target = $region40
    $region39: #{tpu_custom_call.1} parent=5 // pred_region
      %s3813 = ssub.s32 %s9, 2
      // Predicated region
      $region41: #{tpu_custom_call.1} parent=39 // pred_check
        %p3814 = pneg %p106
      $region42: #{tpu_custom_call.1} parent=39 // pred_check_branch
        %3816 = sbr.rel (%p3814) target = $region44
      $region43: #{tpu_custom_call.1} parent=39 // pred_region
        %p3817 = scmp.lt.s32.totalorder %s15, 15
        %s3818 = scalar_select %p3817, %s15, 15
        %s3819 = smul.addr %s3818, 32
        %s3820 = smul.addr %s3819, 8
        %s3821 = scalar_lea.vmem %s3, %s3820
      $region44: #{tpu_custom_call.1} parent=39 // pred_fallthru
        _
    $region40: #{tpu_custom_call.1} parent=5 // pred_fallthru
      _
  $region6: #{tpu_custom_call.1} parent=0 // loop_footer
    %s13 = sadd.s32 1, %s9
  $region7: #{tpu_custom_call.1} parent=0 // loop_footer_branch
    %8 = sbr.rel target = $region3
  $region8: #{tpu_custom_call.1} parent=0 // loop_exit
    _

</llo_original>
